<compile_context>
chip_gen: v7x
topology: tpu7x:2x2x1
jax: 0.10.0
libtpu: 0.0.40
codegen_flags: <defaults>
</compile_context>

<pallas_src>
from functools import lru_cache
from types import SimpleNamespace

import numpy as np
import jax
import jax.numpy as jnp
from jax.experimental import pallas as pl
from jax.experimental.pallas import tpu as pltpu


def _round_up(x, m):
    return (x + m - 1) // m * m


def _pick_block_batch(n):
    """Images per grid step: amortize the ~0.35us/step fixed cost, but keep at
    least 2 grid steps so both v7x TensorCores get work (harmless on
    single-TC v5e/v6e)."""
    target = max(1, min(8, n // 2))
    for cand in range(target, 0, -1):
        if n % cand == 0:
            return cand
    return 1


@lru_cache(maxsize=None)
def _feature_constants(H, W):
    """Constant 0/1 selection matrices, built ONCE on host.  They are passed to
    the kernel as inputs with constant index_maps so they are DMA'd once and
    stay VMEM-resident (never rebuilt per grid step)."""
    WP, HP = W + 2, H + 2
    P, PF = H * W, HP * WP
    SLAB = _round_up(PF, 128)
    PH, PW = H // 2, W // 2
    NPOOL = PH * PW

    p = np.arange(P)
    q = np.arange(SLAB)
    pad_pos = (1 + p // W) * WP + (1 + p % W)                 # dense -> padded-flat
    embed = (q[None, :] == pad_pos[:, None]).astype(np.float32)        # (P, SLAB)
    gather = np.ascontiguousarray(embed.T)                             # (SLAB, P)
    interior = (embed.sum(axis=0) > 0.5).astype(np.float32)[None, :]   # (1, SLAB)

    o = np.arange(NPOOL)
    sel_pos = (1 + 2 * (o // PW)) * WP + (1 + 2 * (o % PW))
    pool_sel = (q[:, None] == sel_pos[None, :]).astype(np.float32)     # (SLAB, NPOOL)

    return (jnp.asarray(embed), jnp.asarray(gather),
            jnp.asarray(interior), jnp.asarray(pool_sel))


# ----------------------------------------------------------------------------
# Fully fused forward: conv/relu/conv/relu/maxpool/flatten/linear in one call.
# ----------------------------------------------------------------------------
def features_fused(x_pad, w1, b1, w2, b2, w_fc, b_fc, *, H, W, block_batch=None):
    """Returns (conv1 pre-ReLU activation, conv2 pre-ReLU activation,
    padded logits (N, 1, KP)) — all in NCHW-flat layout."""
    N, Cmid, P = x_pad.shape
    assert P == H * W
    assert Cmid == 8, "toy kernel assumes channel count == 8-sublane tile"
    assert w1.shape == (Cmid, 9 * Cmid) and w2.shape == (Cmid, 9 * Cmid)

    WP = W + 2
    PF = (H + 2) * WP                                # padded flattened size (324)
    SLAB = _round_up(PF, 128)                        # 384: lane-dense slab width
    MARGIN = 128                                     # aligned left margin >= WP+1
    XBW = _round_up(MARGIN + SLAB + WP + 1, 128)     # 640
    PH, PW = H // 2, W // 2
    NPOOL = PH * PW                                  # 64
    KP = w_fc.shape[2]
    assert w_fc.shape == (Cmid, NPOOL, KP) and b_fc.shape == (1, KP)

    B = block_batch if block_batch is not None else _pick_block_batch(N)
    assert N % B == 0

    embed, gather, interior, pool_sel = _feature_constants(H, W)

    def kernel(x_ref, w1_ref, b1_ref, w2_ref, b2_ref,
               embed_ref, gather_ref, interior_ref, psel_ref, wfc_ref, bfc_ref,
               a1_ref, a2_ref, logit_ref, xbig_ref, patch_ref):
        f32 = jnp.float32
        bf16 = jnp.bfloat16

        # Only the 128-wide margins outside [MARGIN, MARGIN+SLAB) need zeroing:
        # the embed matmul rewrites the full slab (pad ring + tail included)
        # for every image.  Per-step and unconditional on purpose — gating on
        # program_id would be unsafe under v7x megacore scratch sharding.
        xbig_ref[:, :MARGIN] = jnp.zeros((Cmid, MARGIN), f32)
        xbig_ref[:, MARGIN + SLAB:] = jnp.zeros((Cmid, XBW - MARGIN - SLAB), f32)

        interior_mask = interior_ref[...]                # (1, SLAB) 0/1 f32 mask

        def conv_block(w_ref, b_ref):
            # im2col: 9 shifted slab loads -> (72, SLAB) patch; one K=72 MXU dot.
            for kh in range(3):
                for kw in range(3):
                    t = kh * 3 + kw
                    d = (kh - 1) * WP + (kw - 1)
                    patch_ref[t * Cmid:(t + 1) * Cmid, :] = (
                        xbig_ref[:, MARGIN + d:MARGIN + d + SLAB])
            pre = jnp.dot(w_ref[...], patch_ref[...].astype(bf16),
                          preferred_element_type=f32) + b_ref[...]      # (8, SLAB)
            # fused ReLU + pad-ring/tail re-zero so the slab can feed the next
            # conv's shifted taps directly.
            post = jnp.maximum(pre, 0.0) * interior_mask
            xbig_ref[:, MARGIN:MARGIN + SLAB] = post
            return pre, post

        for b in range(B):                 # unrolled per-image loop per grid step
            # Stage image b as a zero-padded, lane-dense slab (one MXU gather).
            xbig_ref[:, MARGIN:MARGIN + SLAB] = jnp.dot(
                x_ref[b], embed_ref[...], preferred_element_type=f32)

            pre1, _ = conv_block(w1_ref, b1_ref)
            # Recorded activation = conv output BEFORE the ReLU module (as in
            # PyTorch), gathered back to the dense NCHW-flat layout in exact f32.
            a1_ref[b] = jnp.dot(pre1, gather_ref[...], preferred_element_type=f32)

            pre2, post2 = conv_block(w2_ref, b2_ref)
            a2_ref[b] = jnp.dot(pre2, gather_ref[...], preferred_element_type=f32)

            # Fused 2x2/2 maxpool: elementwise max of 4 shifted slab loads, then
            # one exact 0/1 gather matmul down to the pooled grid (8, NPOOL).
            m = jnp.maximum(post2, xbig_ref[:, MARGIN + 1:MARGIN + 1 + SLAB])
            m = jnp.maximum(m, xbig_ref[:, MARGIN + WP:MARGIN + WP + SLAB])
            m = jnp.maximum(m, xbig_ref[:, MARGIN + WP + 1:MARGIN + WP + 1 + SLAB])
            pooled = jnp.dot(m, psel_ref[...], preferred_element_type=f32)

            # Fused classifier (torch.flatten(x, 1) order == channel-major):
            # logits = sum_c pooled[c] @ W_fc[c] + b_fc, padded to 128 lanes so
            # the store is lane-dense.
            logit = bfc_ref[...]                                   # (1, KP) f32
            for c in range(Cmid):
                logit = logit + jnp.dot(pooled[c:c + 1, :].astype(bf16),
                                        wfc_ref[c], preferred_element_type=f32)
            logit_ref[b] = logit

    out_shape = (jax.ShapeDtypeStruct((N, Cmid, P), jnp.float32),   # conv1 pre-ReLU
                 jax.ShapeDtypeStruct((N, Cmid, P), jnp.float32),   # conv2 pre-ReLU
                 jax.ShapeDtypeStruct((N, 1, KP), jnp.float32))     # padded logits

    const2 = lambda n: (0, 0)
    return pl.pallas_call(
        kernel,
        grid=(N // B,),
        in_specs=[pl.BlockSpec((B, Cmid, P), lambda n: (n, 0, 0)),
                  pl.BlockSpec((Cmid, 9 * Cmid), const2),       # w1 (bf16, resident)
                  pl.BlockSpec((Cmid, 1), const2),              # b1
                  pl.BlockSpec((Cmid, 9 * Cmid), const2),       # w2 (bf16, resident)
                  pl.BlockSpec((Cmid, 1), const2),              # b2
                  pl.BlockSpec((P, SLAB), const2),              # embed
                  pl.BlockSpec((SLAB, P), const2),              # gather
                  pl.BlockSpec((1, SLAB), const2),              # interior mask
                  pl.BlockSpec((SLAB, NPOOL), const2),          # pool selection
                  pl.BlockSpec((Cmid, NPOOL, KP), lambda n: (0, 0, 0)),  # W_fc
                  pl.BlockSpec((1, KP), const2)],               # b_fc
        out_specs=(pl.BlockSpec((B, Cmid, P), lambda n: (n, 0, 0)),
                   pl.BlockSpec((B, Cmid, P), lambda n: (n, 0, 0)),
                   pl.BlockSpec((B, 1, KP), lambda n: (n, 0, 0))),
        out_shape=out_shape,
        scratch_shapes=[pltpu.VMEM((Cmid, XBW), jnp.float32),       # padded image slab
                        pltpu.VMEM((9 * Cmid, SLAB), jnp.float32)],  # im2col patch
        compiler_params=pltpu.CompilerParams(dimension_semantics=("parallel",)),
    )(x_pad, w1, b1, w2, b2, embed, gather, interior, pool_sel, w_fc, b_fc)


# ----------------------------------------------------------------------------
# One-time host-side weight preparation (at FilterPrunner construction).
# ----------------------------------------------------------------------------
def _prep_conv(w_oihw, bias, cpad=8):
    """OIHW conv weight -> (Cout, 9*cpad) bf16 im2col matrix; col = tap*8 + ci."""
    co, ci, kh, kw = w_oihw.shape
    w = jnp.transpose(w_oihw, (0, 2, 3, 1))                     # (co, kh, kw, ci)
    w = jnp.pad(w, ((0, 0), (0, 0), (0, 0), (0, cpad - ci)))
    return (w.reshape(co, kh * kw * cpad).astype(jnp.bfloat16),
            bias.reshape(co, 1).astype(jnp.float32))


# ----------------------------------------------------------------------------
# FilterPrunner — mirrors the PyTorch module's forward(): run model.features,
# record the Conv2d activations, flatten (NCHW order) and apply classifier.
# ----------------------------------------------------------------------------
class FilterPrunner:
    def __init__(self, model):
        self.model = model
        self.reset()

        # Conv weights -> bf16 im2col matrices (pre-cast: no per-step casts).
        self._conv_params = [_prep_conv(mod[1], mod[2])
                             for _, mod in model.features if mod[0] == "conv"]
        self._cmid = self._conv_params[-1][0].shape[0]

        # Classifier -> channel-major (Cmid, NPOOL, 128) bf16 + padded f32 bias,
        # so torch.flatten(x, 1) ordering is baked into the weight layout.
        w_fc, b_fc = model.classifier                 # torch.nn.Linear: (out, in)
        self._num_classes, feat_dim = w_fc.shape
        npool = feat_dim // self._cmid
        kp = _round_up(self._num_classes, 128)
        wr = jnp.transpose(
            jnp.reshape(w_fc, (self._num_classes, self._cmid, npool)), (1, 2, 0))
        self._w_fc = jnp.pad(
            wr, ((0, 0), (0, 0), (0, kp - self._num_classes))).astype(jnp.bfloat16)
        self._b_fc = jnp.pad(
            b_fc, (0, kp - self._num_classes)).reshape(1, kp).astype(jnp.float32)

    def reset(self):
        self.filter_ranks = {}

    def forward(self, x):
        self.activations = []
        self.gradients = []
        self.grad_index = 0
        self.activation_to_layer = {}

        kinds = tuple(mod[0] for _, mod in self.model.features)
        # The fused kernel implements exactly this feature pattern; a general
        # feature stack would need a kernel generator instead.
        assert kinds == ("conv", "relu", "conv", "relu", "maxpool"), kinds

        N, Cin, H, W = x.shape
        (w1, b1), (w2, b2) = self._conv_params
        cmid = self._cmid

        # NCHW -> (N, C, H*W) is metadata-only; channel pad 4->8 happens once
        # here on host so the kernel sees a clean 8-sublane input block.
        x_flat = x.reshape(N, Cin, H * W)
        if Cin < cmid:
            x_flat = jnp.pad(x_flat, ((0, 0), (0, cmid - Cin), (0, 0)))

        act1, act2, logits_pad = features_fused(
            x_flat, w1, b1, w2, b2, self._w_fc, self._b_fc, H=H, W=W)

        acts_nchw = [act1.reshape(N, cmid, H, W), act2.reshape(N, cmid, H, W)]
        ai = 0
        for layer, (name, mod) in enumerate(self.model.features):
            if mod[0] == "conv":
                # TODO(synk): x.register_hook(self.compute_rank) — the Taylor
                # ranking backward hook needs autograd and has no Pallas
                # equivalent in this forward-only implementation.
                self.activations.append(acts_nchw[ai])
                self.activation_to_layer[ai] = layer
                ai += 1

        return logits_pad[:, 0, :self._num_classes]

    __call__ = forward


# ----------------------------------------------------------------------------
# Deterministic synthetic model (PyTorch-faithful layouts: OIHW conv weights,
# (out, in) Linear weight).
# ----------------------------------------------------------------------------
def build_model(key, in_ch=4, mid_ch=8, num_classes=10, spatial=16):
    k1, k2, k3, k4, k5, k6 = jax.random.split(key, 6)
    w1 = jax.random.normal(k1, (mid_ch, in_ch, 3, 3), jnp.float32) * 0.1
    b1 = jax.random.normal(k2, (mid_ch,), jnp.float32) * 0.1
    w2 = jax.random.normal(k3, (mid_ch, mid_ch, 3, 3), jnp.float32) * 0.1
    b2 = jax.random.normal(k4, (mid_ch,), jnp.float32) * 0.1
    feat_dim = mid_ch * (spatial // 2) * (spatial // 2)
    w_fc = jax.random.normal(k5, (num_classes, feat_dim), jnp.float32) * 0.05
    b_fc = jax.random.normal(k6, (num_classes,), jnp.float32) * 0.05
    features = [
        ("conv1", ("conv", w1, b1)),
        ("relu1", ("relu",)),
        ("conv2", ("conv", w2, b2)),
        ("relu2", ("relu",)),
        ("pool1", ("maxpool",)),
    ]
    return SimpleNamespace(features=features, classifier=(w_fc, b_fc))


# ----------------------------------------------------------------------------
# Pure-JAX reference with the same precision policy (bf16 operands, f32 accum).
# ----------------------------------------------------------------------------
def ref_forward(model, x):
    acts = []
    h = x
    for _, mod in model.features:
        kind = mod[0]
        if kind == "conv":
            w, b = mod[1], mod[2]
            h = jax.lax.conv_general_dilated(
                h.astype(jnp.bfloat16), w.astype(jnp.bfloat16),
                window_strides=(1, 1), padding=((1, 1), (1, 1)),
                dimension_numbers=("NCHW", "OIHW", "NCHW"),
                preferred_element_type=jnp.float32)
            h = h + b.reshape(1, -1, 1, 1)
            acts.append(h)
        elif kind == "relu":
            h = jnp.maximum(h, 0.0)
        elif kind == "maxpool":
            n, c, hh, ww = h.shape
            h = h.reshape(n, c, hh // 2, 2, ww // 2, 2).max(axis=(3, 5))
    flat = h.reshape(h.shape[0], -1)
    w_fc, b_fc = model.classifier
    logits = jnp.dot(flat.astype(jnp.bfloat16), w_fc.T.astype(jnp.bfloat16),
                     preferred_element_type=jnp.float32) + b_fc
    return logits, acts


if __name__ == "__main__":
    key = jax.random.PRNGKey(0)
    k_model, k_x = jax.random.split(key)

    model = build_model(k_model, in_ch=4, mid_ch=8, num_classes=10, spatial=16)
    prunner = FilterPrunner(model)

    x = jax.random.normal(k_x, (2, 4, 16, 16), jnp.float32)   # NCHW, like PyTorch

    out = jax.block_until_ready(prunner(x))

    # Shape / bookkeeping checks (mirror the PyTorch module's behaviour).
    assert out.shape == (2, 10), out.shape
    assert len(prunner.activations) == 2
    assert prunner.activations[0].shape == (2, 8, 16, 16)     # NCHW conv activation
    assert prunner.activation_to_layer == {0: 0, 1: 2}

    # Numerical check against the pure-JAX reference (same bf16/f32 policy).
    ref_logits, ref_acts = ref_forward(model, x)
    for a, ra in zip(prunner.activations, ref_acts):
        assert jnp.allclose(a, ra, rtol=2e-2, atol=2e-2), \
            float(jnp.max(jnp.abs(a - ra)))
    assert jnp.allclose(out, ref_logits, rtol=2e-2, atol=2e-2), \
        float(jnp.max(jnp.abs(out - ref_logits)))

    print("KERNEL_OK")
</pallas_src>

<mosaic_0001>
module attributes {stable_mosaic.version = 11 : i64} {
  func.func @kernel(%arg0: i32, %arg1: memref<1x8x256xf32, #tpu.memory_space<vmem>>, %arg2: memref<8x72xbf16, #tpu.memory_space<vmem>>, %arg3: memref<8x1xf32, #tpu.memory_space<vmem>>, %arg4: memref<8x72xbf16, #tpu.memory_space<vmem>>, %arg5: memref<8x1xf32, #tpu.memory_space<vmem>>, %arg6: memref<256x384xf32, #tpu.memory_space<vmem>>, %arg7: memref<384x256xf32, #tpu.memory_space<vmem>>, %arg8: memref<1x384xf32, #tpu.memory_space<vmem>>, %arg9: memref<384x64xf32, #tpu.memory_space<vmem>>, %arg10: memref<8x64x128xbf16, #tpu.memory_space<vmem>>, %arg11: memref<1x128xf32, #tpu.memory_space<vmem>>, %arg12: memref<1x8x256xf32, #tpu.memory_space<vmem>>, %arg13: memref<1x8x256xf32, #tpu.memory_space<vmem>>, %arg14: memref<1x1x128xf32, #tpu.memory_space<vmem>>, %arg15: memref<8x640xf32, #tpu.memory_space<vmem>>, %arg16: memref<72x384xf32, #tpu.memory_space<vmem>>) attributes {dimension_semantics = [#tpu.dimension_semantics<parallel>], iteration_bounds = array<i64: 2>, scalar_prefetch = 0 : i64, scratch_operands = 2 : i64, tpu.core_type = #tpu.core_type<tc>, window_params = [{transform_indices = @transform_0, window_bounds = array<i64: 1, 8, 256>}, {pipeline_mode = #tpu.pipeline_mode<synchronous>, transform_indices = @transform_1, window_bounds = array<i64: 8, 72>}, {pipeline_mode = #tpu.pipeline_mode<synchronous>, transform_indices = @transform_2, window_bounds = array<i64: 8, 1>}, {pipeline_mode = #tpu.pipeline_mode<synchronous>, transform_indices = @transform_3, window_bounds = array<i64: 8, 72>}, {pipeline_mode = #tpu.pipeline_mode<synchronous>, transform_indices = @transform_4, window_bounds = array<i64: 8, 1>}, {pipeline_mode = #tpu.pipeline_mode<synchronous>, transform_indices = @transform_5, window_bounds = array<i64: 256, 384>}, {pipeline_mode = #tpu.pipeline_mode<synchronous>, transform_indices = @transform_6, window_bounds = array<i64: 384, 256>}, {pipeline_mode = #tpu.pipeline_mode<synchronous>, transform_indices = @transform_7, window_bounds = array<i64: 1, 384>}, {pipeline_mode = #tpu.pipeline_mode<synchronous>, transform_indices = @transform_8, window_bounds = array<i64: 384, 64>}, {pipeline_mode = #tpu.pipeline_mode<synchronous>, transform_indices = @transform_9, window_bounds = array<i64: 8, 64, 128>}, {pipeline_mode = #tpu.pipeline_mode<synchronous>, transform_indices = @transform_10, window_bounds = array<i64: 1, 128>}, {transform_indices = @transform_11, window_bounds = array<i64: 1, 8, 256>}, {transform_indices = @transform_12, window_bounds = array<i64: 1, 8, 256>}, {transform_indices = @transform_13, window_bounds = array<i64: 1, 1, 128>}]} {
    %cst = arith.constant 0.000000e+00 : f32
    %0 = vector.broadcast %cst : f32 to vector<8x128xf32>
    %c0 = arith.constant 0 : index
    %c0_0 = arith.constant 0 : index
    %1 = vector.load %arg15[%c0, %c0_0] : memref<8x640xf32, #tpu.memory_space<vmem>>, vector<8x128xf32>
    tpu.vector_store %arg15[%c0, %c0_0], %0 {strides = array<i32>} : memref<8x640xf32, #tpu.memory_space<vmem>>, vector<8x128xf32>,
    %cst_1 = arith.constant 0.000000e+00 : f32
    %2 = vector.broadcast %cst_1 : f32 to vector<8x128xf32>
    %c0_2 = arith.constant 0 : index
    %c512 = arith.constant 512 : index
    %3 = vector.load %arg15[%c0_2, %c512] : memref<8x640xf32, #tpu.memory_space<vmem>>, vector<8x128xf32>
    tpu.vector_store %arg15[%c0_2, %c512], %2 {strides = array<i32>} : memref<8x640xf32, #tpu.memory_space<vmem>>, vector<8x128xf32>,
    %c0_3 = arith.constant 0 : index
    %c0_4 = arith.constant 0 : index
    %4 = vector.load %arg8[%c0_3, %c0_4] : memref<1x384xf32, #tpu.memory_space<vmem>>, vector<1x384xf32>
    %c0_5 = arith.constant 0 : index
    %c0_6 = arith.constant 0 : index
    %c0_7 = arith.constant 0 : index
    %5 = vector.load %arg1[%c0_5, %c0_6, %c0_7] : memref<1x8x256xf32, #tpu.memory_space<vmem>>, vector<1x8x256xf32>
    %6 = vector.shape_cast %5 : vector<1x8x256xf32> to vector<8x256xf32>
    %c0_8 = arith.constant 0 : index
    %c0_9 = arith.constant 0 : index
    %7 = vector.load %arg6[%c0_8, %c0_9] : memref<256x384xf32, #tpu.memory_space<vmem>>, vector<256x384xf32>
    %cst_10 = arith.constant dense<0.000000e+00> : vector<8x384xf32>
    %8 = tpu.matmul %6, %7, %cst_10 {dimension_numbers = #tpu.dot_dimension_numbers<[1], [0], [0], [1], [0, 0, 1, 1], [], []>} : vector<8x256xf32>, vector<256x384xf32>, vector<8x384xf32> -> vector<8x384xf32>
    %c0_11 = arith.constant 0 : index
    %c128 = arith.constant 128 : index
    %9 = vector.load %arg15[%c0_11, %c128] : memref<8x640xf32, #tpu.memory_space<vmem>>, vector<8x384xf32>
    tpu.vector_store %arg15[%c0_11, %c128], %8 {strides = array<i32>} : memref<8x640xf32, #tpu.memory_space<vmem>>, vector<8x384xf32>,
    %c0_12 = arith.constant 0 : index
    %c109 = arith.constant 109 : index
    %10 = vector.load %arg15[%c0_12, %c109] : memref<8x640xf32, #tpu.memory_space<vmem>>, vector<8x384xf32>
    %c0_13 = arith.constant 0 : index
    %c0_14 = arith.constant 0 : index
    %11 = vector.load %arg16[%c0_13, %c0_14] : memref<72x384xf32, #tpu.memory_space<vmem>>, vector<8x384xf32>
    tpu.vector_store %arg16[%c0_13, %c0_14], %10 {strides = array<i32>} : memref<72x384xf32, #tpu.memory_space<vmem>>, vector<8x384xf32>,
    %c0_15 = arith.constant 0 : index
    %c110 = arith.constant 110 : index
    %12 = vector.load %arg15[%c0_15, %c110] : memref<8x640xf32, #tpu.memory_space<vmem>>, vector<8x384xf32>
    %c8 = arith.constant 8 : index
    %c0_16 = arith.constant 0 : index
    %13 = vector.load %arg16[%c8, %c0_16] : memref<72x384xf32, #tpu.memory_space<vmem>>, vector<8x384xf32>
    tpu.vector_store %arg16[%c8, %c0_16], %12 {strides = array<i32>} : memref<72x384xf32, #tpu.memory_space<vmem>>, vector<8x384xf32>,
    %c0_17 = arith.constant 0 : index
    %c111 = arith.constant 111 : index
    %14 = vector.load %arg15[%c0_17, %c111] : memref<8x640xf32, #tpu.memory_space<vmem>>, vector<8x384xf32>
    %c16 = arith.constant 16 : index
    %c0_18 = arith.constant 0 : index
    %15 = vector.load %arg16[%c16, %c0_18] : memref<72x384xf32, #tpu.memory_space<vmem>>, vector<8x384xf32>
    tpu.vector_store %arg16[%c16, %c0_18], %14 {strides = array<i32>} : memref<72x384xf32, #tpu.memory_space<vmem>>, vector<8x384xf32>,
    %c0_19 = arith.constant 0 : index
    %c127 = arith.constant 127 : index
    %16 = vector.load %arg15[%c0_19, %c127] : memref<8x640xf32, #tpu.memory_space<vmem>>, vector<8x384xf32>
    %c24 = arith.constant 24 : index
    %c0_20 = arith.constant 0 : index
    %17 = vector.load %arg16[%c24, %c0_20] : memref<72x384xf32, #tpu.memory_space<vmem>>, vector<8x384xf32>
    tpu.vector_store %arg16[%c24, %c0_20], %16 {strides = array<i32>} : memref<72x384xf32, #tpu.memory_space<vmem>>, vector<8x384xf32>,
    %c0_21 = arith.constant 0 : index
    %c128_22 = arith.constant 128 : index
    %18 = vector.load %arg15[%c0_21, %c128_22] : memref<8x640xf32, #tpu.memory_space<vmem>>, vector<8x384xf32>
    %c32 = arith.constant 32 : index
    %c0_23 = arith.constant 0 : index
    %19 = vector.load %arg16[%c32, %c0_23] : memref<72x384xf32, #tpu.memory_space<vmem>>, vector<8x384xf32>
    tpu.vector_store %arg16[%c32, %c0_23], %18 {strides = array<i32>} : memref<72x384xf32, #tpu.memory_space<vmem>>, vector<8x384xf32>,
    %c0_24 = arith.constant 0 : index
    %c129 = arith.constant 129 : index
    %20 = vector.load %arg15[%c0_24, %c129] : memref<8x640xf32, #tpu.memory_space<vmem>>, vector<8x384xf32>
    %c40 = arith.constant 40 : index
    %c0_25 = arith.constant 0 : index
    %21 = vector.load %arg16[%c40, %c0_25] : memref<72x384xf32, #tpu.memory_space<vmem>>, vector<8x384xf32>
    tpu.vector_store %arg16[%c40, %c0_25], %20 {strides = array<i32>} : memref<72x384xf32, #tpu.memory_space<vmem>>, vector<8x384xf32>,
    %c0_26 = arith.constant 0 : index
    %c145 = arith.constant 145 : index
    %22 = vector.load %arg15[%c0_26, %c145] : memref<8x640xf32, #tpu.memory_space<vmem>>, vector<8x384xf32>
    %c48 = arith.constant 48 : index
    %c0_27 = arith.constant 0 : index
    %23 = vector.load %arg16[%c48, %c0_27] : memref<72x384xf32, #tpu.memory_space<vmem>>, vector<8x384xf32>
    tpu.vector_store %arg16[%c48, %c0_27], %22 {strides = array<i32>} : memref<72x384xf32, #tpu.memory_space<vmem>>, vector<8x384xf32>,
    %c0_28 = arith.constant 0 : index
    %c146 = arith.constant 146 : index
    %24 = vector.load %arg15[%c0_28, %c146] : memref<8x640xf32, #tpu.memory_space<vmem>>, vector<8x384xf32>
    %c56 = arith.constant 56 : index
    %c0_29 = arith.constant 0 : index
    %25 = vector.load %arg16[%c56, %c0_29] : memref<72x384xf32, #tpu.memory_space<vmem>>, vector<8x384xf32>
    tpu.vector_store %arg16[%c56, %c0_29], %24 {strides = array<i32>} : memref<72x384xf32, #tpu.memory_space<vmem>>, vector<8x384xf32>,
    %c0_30 = arith.constant 0 : index
    %c147 = arith.constant 147 : index
    %26 = vector.load %arg15[%c0_30, %c147] : memref<8x640xf32, #tpu.memory_space<vmem>>, vector<8x384xf32>
    %c64 = arith.constant 64 : index
    %c0_31 = arith.constant 0 : index
    %27 = vector.load %arg16[%c64, %c0_31] : memref<72x384xf32, #tpu.memory_space<vmem>>, vector<8x384xf32>
    tpu.vector_store %arg16[%c64, %c0_31], %26 {strides = array<i32>} : memref<72x384xf32, #tpu.memory_space<vmem>>, vector<8x384xf32>,
    %c0_32 = arith.constant 0 : index
    %c0_33 = arith.constant 0 : index
    %28 = vector.load %arg2[%c0_32, %c0_33] : memref<8x72xbf16, #tpu.memory_space<vmem>>, vector<8x72xbf16>
    %c0_34 = arith.constant 0 : index
    %c0_35 = arith.constant 0 : index
    %29 = vector.load %arg16[%c0_34, %c0_35] : memref<72x384xf32, #tpu.memory_space<vmem>>, vector<72x384xf32>
    %30 = arith.truncf %29 : vector<72x384xf32> to vector<72x384xbf16>
    %cst_36 = arith.constant dense<0.000000e+00> : vector<8x384xf32>
    %31 = tpu.matmul %28, %30, %cst_36 {dimension_numbers = #tpu.dot_dimension_numbers<[1], [0], [0], [1], [0, 0, 1, 1], [], []>} : vector<8x72xbf16>, vector<72x384xbf16>, vector<8x384xf32> -> vector<8x384xf32>
    %c0_37 = arith.constant 0 : index
    %c0_38 = arith.constant 0 : index
    %32 = vector.load %arg3[%c0_37, %c0_38] : memref<8x1xf32, #tpu.memory_space<vmem>>, vector<8x1xf32>
    %33 = vector.broadcast %32 : vector<8x1xf32> to vector<8x384xf32>
    %34 = arith.addf %31, %33 : vector<8x384xf32>
    %cst_39 = arith.constant 0.000000e+00 : f32
    %35 = vector.broadcast %cst_39 : f32 to vector<8x384xf32>
    %36 = arith.maximumf %34, %35 : vector<8x384xf32>
    %37 = vector.broadcast %4 : vector<1x384xf32> to vector<8x384xf32>
    %38 = arith.mulf %36, %37 : vector<8x384xf32>
    %c0_40 = arith.constant 0 : index
    %c128_41 = arith.constant 128 : index
    %39 = vector.load %arg15[%c0_40, %c128_41] : memref<8x640xf32, #tpu.memory_space<vmem>>, vector<8x384xf32>
    tpu.vector_store %arg15[%c0_40, %c128_41], %38 {strides = array<i32>} : memref<8x640xf32, #tpu.memory_space<vmem>>, vector<8x384xf32>,
    %c0_42 = arith.constant 0 : index
    %c0_43 = arith.constant 0 : index
    %40 = vector.load %arg7[%c0_42, %c0_43] : memref<384x256xf32, #tpu.memory_space<vmem>>, vector<384x256xf32>
    %cst_44 = arith.constant dense<0.000000e+00> : vector<8x256xf32>
    %41 = tpu.matmul %34, %40, %cst_44 {dimension_numbers = #tpu.dot_dimension_numbers<[1], [0], [0], [1], [0, 0, 1, 1], [], []>} : vector<8x384xf32>, vector<384x256xf32>, vector<8x256xf32> -> vector<8x256xf32>
    %c0_45 = arith.constant 0 : index
    %c0_46 = arith.constant 0 : index
    %c0_47 = arith.constant 0 : index
    %42 = vector.load %arg12[%c0_45, %c0_46, %c0_47] : memref<1x8x256xf32, #tpu.memory_space<vmem>>, vector<1x8x256xf32>
    %43 = vector.shape_cast %42 : vector<1x8x256xf32> to vector<8x256xf32>
    %44 = vector.shape_cast %41 : vector<8x256xf32> to vector<1x8x256xf32>
    tpu.vector_store %arg12[%c0_45, %c0_46, %c0_47], %44 {strides = array<i32>} : memref<1x8x256xf32, #tpu.memory_space<vmem>>, vector<1x8x256xf32>,
    %c0_48 = arith.constant 0 : index
    %c109_49 = arith.constant 109 : index
    %45 = vector.load %arg15[%c0_48, %c109_49] : memref<8x640xf32, #tpu.memory_space<vmem>>, vector<8x384xf32>
    %c0_50 = arith.constant 0 : index
    %c0_51 = arith.constant 0 : index
    %46 = vector.load %arg16[%c0_50, %c0_51] : memref<72x384xf32, #tpu.memory_space<vmem>>, vector<8x384xf32>
    tpu.vector_store %arg16[%c0_50, %c0_51], %45 {strides = array<i32>} : memref<72x384xf32, #tpu.memory_space<vmem>>, vector<8x384xf32>,
    %c0_52 = arith.constant 0 : index
    %c110_53 = arith.constant 110 : index
    %47 = vector.load %arg15[%c0_52, %c110_53] : memref<8x640xf32, #tpu.memory_space<vmem>>, vector<8x384xf32>
    %c8_54 = arith.constant 8 : index
    %c0_55 = arith.constant 0 : index
    %48 = vector.load %arg16[%c8_54, %c0_55] : memref<72x384xf32, #tpu.memory_space<vmem>>, vector<8x384xf32>
    tpu.vector_store %arg16[%c8_54, %c0_55], %47 {strides = array<i32>} : memref<72x384xf32, #tpu.memory_space<vmem>>, vector<8x384xf32>,
    %c0_56 = arith.constant 0 : index
    %c111_57 = arith.constant 111 : index
    %49 = vector.load %arg15[%c0_56, %c111_57] : memref<8x640xf32, #tpu.memory_space<vmem>>, vector<8x384xf32>
    %c16_58 = arith.constant 16 : index
    %c0_59 = arith.constant 0 : index
    %50 = vector.load %arg16[%c16_58, %c0_59] : memref<72x384xf32, #tpu.memory_space<vmem>>, vector<8x384xf32>
    tpu.vector_store %arg16[%c16_58, %c0_59], %49 {strides = array<i32>} : memref<72x384xf32, #tpu.memory_space<vmem>>, vector<8x384xf32>,
    %c0_60 = arith.constant 0 : index
    %c127_61 = arith.constant 127 : index
    %51 = vector.load %arg15[%c0_60, %c127_61] : memref<8x640xf32, #tpu.memory_space<vmem>>, vector<8x384xf32>
    %c24_62 = arith.constant 24 : index
    %c0_63 = arith.constant 0 : index
    %52 = vector.load %arg16[%c24_62, %c0_63] : memref<72x384xf32, #tpu.memory_space<vmem>>, vector<8x384xf32>
    tpu.vector_store %arg16[%c24_62, %c0_63], %51 {strides = array<i32>} : memref<72x384xf32, #tpu.memory_space<vmem>>, vector<8x384xf32>,
    %c0_64 = arith.constant 0 : index
    %c128_65 = arith.constant 128 : index
    %53 = vector.load %arg15[%c0_64, %c128_65] : memref<8x640xf32, #tpu.memory_space<vmem>>, vector<8x384xf32>
    %c32_66 = arith.constant 32 : index
    %c0_67 = arith.constant 0 : index
    %54 = vector.load %arg16[%c32_66, %c0_67] : memref<72x384xf32, #tpu.memory_space<vmem>>, vector<8x384xf32>
    tpu.vector_store %arg16[%c32_66, %c0_67], %53 {strides = array<i32>} : memref<72x384xf32, #tpu.memory_space<vmem>>, vector<8x384xf32>,
    %c0_68 = arith.constant 0 : index
    %c129_69 = arith.constant 129 : index
    %55 = vector.load %arg15[%c0_68, %c129_69] : memref<8x640xf32, #tpu.memory_space<vmem>>, vector<8x384xf32>
    %c40_70 = arith.constant 40 : index
    %c0_71 = arith.constant 0 : index
    %56 = vector.load %arg16[%c40_70, %c0_71] : memref<72x384xf32, #tpu.memory_space<vmem>>, vector<8x384xf32>
    tpu.vector_store %arg16[%c40_70, %c0_71], %55 {strides = array<i32>} : memref<72x384xf32, #tpu.memory_space<vmem>>, vector<8x384xf32>,
    %c0_72 = arith.constant 0 : index
    %c145_73 = arith.constant 145 : index
    %57 = vector.load %arg15[%c0_72, %c145_73] : memref<8x640xf32, #tpu.memory_space<vmem>>, vector<8x384xf32>
    %c48_74 = arith.constant 48 : index
    %c0_75 = arith.constant 0 : index
    %58 = vector.load %arg16[%c48_74, %c0_75] : memref<72x384xf32, #tpu.memory_space<vmem>>, vector<8x384xf32>
    tpu.vector_store %arg16[%c48_74, %c0_75], %57 {strides = array<i32>} : memref<72x384xf32, #tpu.memory_space<vmem>>, vector<8x384xf32>,
    %c0_76 = arith.constant 0 : index
    %c146_77 = arith.constant 146 : index
    %59 = vector.load %arg15[%c0_76, %c146_77] : memref<8x640xf32, #tpu.memory_space<vmem>>, vector<8x384xf32>
    %c56_78 = arith.constant 56 : index
    %c0_79 = arith.constant 0 : index
    %60 = vector.load %arg16[%c56_78, %c0_79] : memref<72x384xf32, #tpu.memory_space<vmem>>, vector<8x384xf32>
    tpu.vector_store %arg16[%c56_78, %c0_79], %59 {strides = array<i32>} : memref<72x384xf32, #tpu.memory_space<vmem>>, vector<8x384xf32>,
    %c0_80 = arith.constant 0 : index
    %c147_81 = arith.constant 147 : index
    %61 = vector.load %arg15[%c0_80, %c147_81] : memref<8x640xf32, #tpu.memory_space<vmem>>, vector<8x384xf32>
    %c64_82 = arith.constant 64 : index
    %c0_83 = arith.constant 0 : index
    %62 = vector.load %arg16[%c64_82, %c0_83] : memref<72x384xf32, #tpu.memory_space<vmem>>, vector<8x384xf32>
    tpu.vector_store %arg16[%c64_82, %c0_83], %61 {strides = array<i32>} : memref<72x384xf32, #tpu.memory_space<vmem>>, vector<8x384xf32>,
    %c0_84 = arith.constant 0 : index
    %c0_85 = arith.constant 0 : index
    %63 = vector.load %arg4[%c0_84, %c0_85] : memref<8x72xbf16, #tpu.memory_space<vmem>>, vector<8x72xbf16>
    %c0_86 = arith.constant 0 : index
    %c0_87 = arith.constant 0 : index
    %64 = vector.load %arg16[%c0_86, %c0_87] : memref<72x384xf32, #tpu.memory_space<vmem>>, vector<72x384xf32>
    %65 = arith.truncf %64 : vector<72x384xf32> to vector<72x384xbf16>
    %cst_88 = arith.constant dense<0.000000e+00> : vector<8x384xf32>
    %66 = tpu.matmul %63, %65, %cst_88 {dimension_numbers = #tpu.dot_dimension_numbers<[1], [0], [0], [1], [0, 0, 1, 1], [], []>} : vector<8x72xbf16>, vector<72x384xbf16>, vector<8x384xf32> -> vector<8x384xf32>
    %c0_89 = arith.constant 0 : index
    %c0_90 = arith.constant 0 : index
    %67 = vector.load %arg5[%c0_89, %c0_90] : memref<8x1xf32, #tpu.memory_space<vmem>>, vector<8x1xf32>
    %68 = vector.broadcast %67 : vector<8x1xf32> to vector<8x384xf32>
    %69 = arith.addf %66, %68 : vector<8x384xf32>
    %cst_91 = arith.constant 0.000000e+00 : f32
    %70 = vector.broadcast %cst_91 : f32 to vector<8x384xf32>
    %71 = arith.maximumf %69, %70 : vector<8x384xf32>
    %72 = vector.broadcast %4 : vector<1x384xf32> to vector<8x384xf32>
    %73 = arith.mulf %71, %72 : vector<8x384xf32>
    %c0_92 = arith.constant 0 : index
    %c128_93 = arith.constant 128 : index
    %74 = vector.load %arg15[%c0_92, %c128_93] : memref<8x640xf32, #tpu.memory_space<vmem>>, vector<8x384xf32>
    tpu.vector_store %arg15[%c0_92, %c128_93], %73 {strides = array<i32>} : memref<8x640xf32, #tpu.memory_space<vmem>>, vector<8x384xf32>,
    %c0_94 = arith.constant 0 : index
    %c0_95 = arith.constant 0 : index
    %75 = vector.load %arg7[%c0_94, %c0_95] : memref<384x256xf32, #tpu.memory_space<vmem>>, vector<384x256xf32>
    %cst_96 = arith.constant dense<0.000000e+00> : vector<8x256xf32>
    %76 = tpu.matmul %69, %75, %cst_96 {dimension_numbers = #tpu.dot_dimension_numbers<[1], [0], [0], [1], [0, 0, 1, 1], [], []>} : vector<8x384xf32>, vector<384x256xf32>, vector<8x256xf32> -> vector<8x256xf32>
    %c0_97 = arith.constant 0 : index
    %c0_98 = arith.constant 0 : index
    %c0_99 = arith.constant 0 : index
    %77 = vector.load %arg13[%c0_97, %c0_98, %c0_99] : memref<1x8x256xf32, #tpu.memory_space<vmem>>, vector<1x8x256xf32>
    %78 = vector.shape_cast %77 : vector<1x8x256xf32> to vector<8x256xf32>
    %79 = vector.shape_cast %76 : vector<8x256xf32> to vector<1x8x256xf32>
    tpu.vector_store %arg13[%c0_97, %c0_98, %c0_99], %79 {strides = array<i32>} : memref<1x8x256xf32, #tpu.memory_space<vmem>>, vector<1x8x256xf32>,
    %c0_100 = arith.constant 0 : index
    %c129_101 = arith.constant 129 : index
    %80 = vector.load %arg15[%c0_100, %c129_101] : memref<8x640xf32, #tpu.memory_space<vmem>>, vector<8x384xf32>
    %81 = arith.maximumf %73, %80 : vector<8x384xf32>
    %c0_102 = arith.constant 0 : index
    %c146_103 = arith.constant 146 : index
    %82 = vector.load %arg15[%c0_102, %c146_103] : memref<8x640xf32, #tpu.memory_space<vmem>>, vector<8x384xf32>
    %83 = arith.maximumf %81, %82 : vector<8x384xf32>
    %c0_104 = arith.constant 0 : index
    %c147_105 = arith.constant 147 : index
    %84 = vector.load %arg15[%c0_104, %c147_105] : memref<8x640xf32, #tpu.memory_space<vmem>>, vector<8x384xf32>
    %85 = arith.maximumf %83, %84 : vector<8x384xf32>
    %c0_106 = arith.constant 0 : index
    %c0_107 = arith.constant 0 : index
    %86 = vector.load %arg9[%c0_106, %c0_107] : memref<384x64xf32, #tpu.memory_space<vmem>>, vector<384x64xf32>
    %cst_108 = arith.constant dense<0.000000e+00> : vector<8x64xf32>
    %87 = tpu.matmul %85, %86, %cst_108 {dimension_numbers = #tpu.dot_dimension_numbers<[1], [0], [0], [1], [0, 0, 1, 1], [], []>} : vector<8x384xf32>, vector<384x64xf32>, vector<8x64xf32> -> vector<8x64xf32>
    %c0_109 = arith.constant 0 : index
    %c0_110 = arith.constant 0 : index
    %88 = vector.load %arg11[%c0_109, %c0_110] : memref<1x128xf32, #tpu.memory_space<vmem>>, vector<1x128xf32>
    %89 = vector.extract_strided_slice %87 {offsets = [0, 0], sizes = [1, 64], strides = [1, 1]} : vector<8x64xf32> to vector<1x64xf32>
    %90 = arith.truncf %89 : vector<1x64xf32> to vector<1x64xbf16>
    %c0_111 = arith.constant 0 : index
    %c0_112 = arith.constant 0 : index
    %c0_113 = arith.constant 0 : index
    %91 = vector.load %arg10[%c0_111, %c0_112, %c0_113] : memref<8x64x128xbf16, #tpu.memory_space<vmem>>, vector<1x64x128xbf16>
    %92 = vector.shape_cast %91 : vector<1x64x128xbf16> to vector<64x128xbf16>
    %cst_114 = arith.constant dense<0.000000e+00> : vector<1x128xf32>
    %93 = tpu.matmul %90, %92, %cst_114 {dimension_numbers = #tpu.dot_dimension_numbers<[1], [0], [0], [1], [0, 0, 1, 1], [], []>} : vector<1x64xbf16>, vector<64x128xbf16>, vector<1x128xf32> -> vector<1x128xf32>
    %94 = arith.addf %88, %93 : vector<1x128xf32>
    %95 = vector.extract_strided_slice %87 {offsets = [1, 0], sizes = [1, 64], strides = [1, 1]} : vector<8x64xf32> to vector<1x64xf32>
    %96 = arith.truncf %95 : vector<1x64xf32> to vector<1x64xbf16>
    %c1 = arith.constant 1 : index
    %c0_115 = arith.constant 0 : index
    %c0_116 = arith.constant 0 : index
    %97 = vector.load %arg10[%c1, %c0_115, %c0_116] : memref<8x64x128xbf16, #tpu.memory_space<vmem>>, vector<1x64x128xbf16>
    %98 = vector.shape_cast %97 : vector<1x64x128xbf16> to vector<64x128xbf16>
    %cst_117 = arith.constant dense<0.000000e+00> : vector<1x128xf32>
    %99 = tpu.matmul %96, %98, %cst_117 {dimension_numbers = #tpu.dot_dimension_numbers<[1], [0], [0], [1], [0, 0, 1, 1], [], []>} : vector<1x64xbf16>, vector<64x128xbf16>, vector<1x128xf32> -> vector<1x128xf32>
    %100 = arith.addf %94, %99 : vector<1x128xf32>
    %101 = vector.extract_strided_slice %87 {offsets = [2, 0], sizes = [1, 64], strides = [1, 1]} : vector<8x64xf32> to vector<1x64xf32>
    %102 = arith.truncf %101 : vector<1x64xf32> to vector<1x64xbf16>
    %c2 = arith.constant 2 : index
    %c0_118 = arith.constant 0 : index
    %c0_119 = arith.constant 0 : index
    %103 = vector.load %arg10[%c2, %c0_118, %c0_119] : memref<8x64x128xbf16, #tpu.memory_space<vmem>>, vector<1x64x128xbf16>
    %104 = vector.shape_cast %103 : vector<1x64x128xbf16> to vector<64x128xbf16>
    %cst_120 = arith.constant dense<0.000000e+00> : vector<1x128xf32>
    %105 = tpu.matmul %102, %104, %cst_120 {dimension_numbers = #tpu.dot_dimension_numbers<[1], [0], [0], [1], [0, 0, 1, 1], [], []>} : vector<1x64xbf16>, vector<64x128xbf16>, vector<1x128xf32> -> vector<1x128xf32>
    %106 = arith.addf %100, %105 : vector<1x128xf32>
    %107 = vector.extract_strided_slice %87 {offsets = [3, 0], sizes = [1, 64], strides = [1, 1]} : vector<8x64xf32> to vector<1x64xf32>
    %108 = arith.truncf %107 : vector<1x64xf32> to vector<1x64xbf16>
    %c3 = arith.constant 3 : index
    %c0_121 = arith.constant 0 : index
    %c0_122 = arith.constant 0 : index
    %109 = vector.load %arg10[%c3, %c0_121, %c0_122] : memref<8x64x128xbf16, #tpu.memory_space<vmem>>, vector<1x64x128xbf16>
    %110 = vector.shape_cast %109 : vector<1x64x128xbf16> to vector<64x128xbf16>
    %cst_123 = arith.constant dense<0.000000e+00> : vector<1x128xf32>
    %111 = tpu.matmul %108, %110, %cst_123 {dimension_numbers = #tpu.dot_dimension_numbers<[1], [0], [0], [1], [0, 0, 1, 1], [], []>} : vector<1x64xbf16>, vector<64x128xbf16>, vector<1x128xf32> -> vector<1x128xf32>
    %112 = arith.addf %106, %111 : vector<1x128xf32>
    %113 = vector.extract_strided_slice %87 {offsets = [4, 0], sizes = [1, 64], strides = [1, 1]} : vector<8x64xf32> to vector<1x64xf32>
    %114 = arith.truncf %113 : vector<1x64xf32> to vector<1x64xbf16>
    %c4 = arith.constant 4 : index
    %c0_124 = arith.constant 0 : index
    %c0_125 = arith.constant 0 : index
    %115 = vector.load %arg10[%c4, %c0_124, %c0_125] : memref<8x64x128xbf16, #tpu.memory_space<vmem>>, vector<1x64x128xbf16>
    %116 = vector.shape_cast %115 : vector<1x64x128xbf16> to vector<64x128xbf16>
    %cst_126 = arith.constant dense<0.000000e+00> : vector<1x128xf32>
    %117 = tpu.matmul %114, %116, %cst_126 {dimension_numbers = #tpu.dot_dimension_numbers<[1], [0], [0], [1], [0, 0, 1, 1], [], []>} : vector<1x64xbf16>, vector<64x128xbf16>, vector<1x128xf32> -> vector<1x128xf32>
    %118 = arith.addf %112, %117 : vector<1x128xf32>
    %119 = vector.extract_strided_slice %87 {offsets = [5, 0], sizes = [1, 64], strides = [1, 1]} : vector<8x64xf32> to vector<1x64xf32>
    %120 = arith.truncf %119 : vector<1x64xf32> to vector<1x64xbf16>
    %c5 = arith.constant 5 : index
    %c0_127 = arith.constant 0 : index
    %c0_128 = arith.constant 0 : index
    %121 = vector.load %arg10[%c5, %c0_127, %c0_128] : memref<8x64x128xbf16, #tpu.memory_space<vmem>>, vector<1x64x128xbf16>
    %122 = vector.shape_cast %121 : vector<1x64x128xbf16> to vector<64x128xbf16>
    %cst_129 = arith.constant dense<0.000000e+00> : vector<1x128xf32>
    %123 = tpu.matmul %120, %122, %cst_129 {dimension_numbers = #tpu.dot_dimension_numbers<[1], [0], [0], [1], [0, 0, 1, 1], [], []>} : vector<1x64xbf16>, vector<64x128xbf16>, vector<1x128xf32> -> vector<1x128xf32>
    %124 = arith.addf %118, %123 : vector<1x128xf32>
    %125 = vector.extract_strided_slice %87 {offsets = [6, 0], sizes = [1, 64], strides = [1, 1]} : vector<8x64xf32> to vector<1x64xf32>
    %126 = arith.truncf %125 : vector<1x64xf32> to vector<1x64xbf16>
    %c6 = arith.constant 6 : index
    %c0_130 = arith.constant 0 : index
    %c0_131 = arith.constant 0 : index
    %127 = vector.load %arg10[%c6, %c0_130, %c0_131] : memref<8x64x128xbf16, #tpu.memory_space<vmem>>, vector<1x64x128xbf16>
    %128 = vector.shape_cast %127 : vector<1x64x128xbf16> to vector<64x128xbf16>
    %cst_132 = arith.constant dense<0.000000e+00> : vector<1x128xf32>
    %129 = tpu.matmul %126, %128, %cst_132 {dimension_numbers = #tpu.dot_dimension_numbers<[1], [0], [0], [1], [0, 0, 1, 1], [], []>} : vector<1x64xbf16>, vector<64x128xbf16>, vector<1x128xf32> -> vector<1x128xf32>
    %130 = arith.addf %124, %129 : vector<1x128xf32>
    %131 = vector.extract_strided_slice %87 {offsets = [7, 0], sizes = [1, 64], strides = [1, 1]} : vector<8x64xf32> to vector<1x64xf32>
    %132 = arith.truncf %131 : vector<1x64xf32> to vector<1x64xbf16>
    %c7 = arith.constant 7 : index
    %c0_133 = arith.constant 0 : index
    %c0_134 = arith.constant 0 : index
    %133 = vector.load %arg10[%c7, %c0_133, %c0_134] : memref<8x64x128xbf16, #tpu.memory_space<vmem>>, vector<1x64x128xbf16>
    %134 = vector.shape_cast %133 : vector<1x64x128xbf16> to vector<64x128xbf16>
    %cst_135 = arith.constant dense<0.000000e+00> : vector<1x128xf32>
    %135 = tpu.matmul %132, %134, %cst_135 {dimension_numbers = #tpu.dot_dimension_numbers<[1], [0], [0], [1], [0, 0, 1, 1], [], []>} : vector<1x64xbf16>, vector<64x128xbf16>, vector<1x128xf32> -> vector<1x128xf32>
    %136 = arith.addf %130, %135 : vector<1x128xf32>
    %c0_136 = arith.constant 0 : index
    %c0_137 = arith.constant 0 : index
    %c0_138 = arith.constant 0 : index
    %137 = vector.load %arg14[%c0_136, %c0_137, %c0_138] : memref<1x1x128xf32, #tpu.memory_space<vmem>>, vector<1x1x128xf32>
    %138 = vector.shape_cast %137 : vector<1x1x128xf32> to vector<1x128xf32>
    %139 = vector.shape_cast %136 : vector<1x128xf32> to vector<1x1x128xf32>
    tpu.vector_store %arg14[%c0_136, %c0_137, %c0_138], %139 {strides = array<i32>} : memref<1x1x128xf32, #tpu.memory_space<vmem>>, vector<1x1x128xf32>,
    return
  }
  func.func @transform_0(%arg0: i32) -> (i32, i32, i32) {
    %c0_i32 = arith.constant 0 : i32
    %c0_i32_0 = arith.constant 0 : i32
    %c0_i32_1 = arith.constant 0 : i32
    return %arg0, %c0_i32, %c0_i32_0 : i32, i32, i32
  }
  func.func @transform_1(%arg0: i32) -> (i32, i32) {
    %c0_i32 = arith.constant 0 : i32
    %c0_i32_0 = arith.constant 0 : i32
    %c0_i32_1 = arith.constant 0 : i32
    return %c0_i32, %c0_i32_0 : i32, i32
  }
  func.func @transform_2(%arg0: i32) -> (i32, i32) {
    %c0_i32 = arith.constant 0 : i32
    %c0_i32_0 = arith.constant 0 : i32
    %c0_i32_1 = arith.constant 0 : i32
    return %c0_i32, %c0_i32_0 : i32, i32
  }
  func.func @transform_3(%arg0: i32) -> (i32, i32) {
    %c0_i32 = arith.constant 0 : i32
    %c0_i32_0 = arith.constant 0 : i32
    %c0_i32_1 = arith.constant 0 : i32
    return %c0_i32, %c0_i32_0 : i32, i32
  }
  func.func @transform_4(%arg0: i32) -> (i32, i32) {
    %c0_i32 = arith.constant 0 : i32
    %c0_i32_0 = arith.constant 0 : i32
    %c0_i32_1 = arith.constant 0 : i32
    return %c0_i32, %c0_i32_0 : i32, i32
  }
  func.func @transform_5(%arg0: i32) -> (i32, i32) {
    %c0_i32 = arith.constant 0 : i32
    %c0_i32_0 = arith.constant 0 : i32
    %c0_i32_1 = arith.constant 0 : i32
    return %c0_i32, %c0_i32_0 : i32, i32
  }
  func.func @transform_6(%arg0: i32) -> (i32, i32) {
    %c0_i32 = arith.constant 0 : i32
    %c0_i32_0 = arith.constant 0 : i32
    %c0_i32_1 = arith.constant 0 : i32
    return %c0_i32, %c0_i32_0 : i32, i32
  }
  func.func @transform_7(%arg0: i32) -> (i32, i32) {
    %c0_i32 = arith.constant 0 : i32
    %c0_i32_0 = arith.constant 0 : i32
    %c0_i32_1 = arith.constant 0 : i32
    return %c0_i32, %c0_i32_0 : i32, i32
  }
  func.func @transform_8(%arg0: i32) -> (i32, i32) {
    %c0_i32 = arith.constant 0 : i32
    %c0_i32_0 = arith.constant 0 : i32
    %c0_i32_1 = arith.constant 0 : i32
    return %c0_i32, %c0_i32_0 : i32, i32
  }
  func.func @transform_9(%arg0: i32) -> (i32, i32, i32) {
    %c0_i32 = arith.constant 0 : i32
    %c0_i32_0 = arith.constant 0 : i32
    %c0_i32_1 = arith.constant 0 : i32
    %c0_i32_2 = arith.constant 0 : i32
    return %c0_i32, %c0_i32_0, %c0_i32_1 : i32, i32, i32
  }
  func.func @transform_10(%arg0: i32) -> (i32, i32) {
    %c0_i32 = arith.constant 0 : i32
    %c0_i32_0 = arith.constant 0 : i32
    %c0_i32_1 = arith.constant 0 : i32
    return %c0_i32, %c0_i32_0 : i32, i32
  }
  func.func @transform_11(%arg0: i32) -> (i32, i32, i32) {
    %c0_i32 = arith.constant 0 : i32
    %c0_i32_0 = arith.constant 0 : i32
    %c0_i32_1 = arith.constant 0 : i32
    return %arg0, %c0_i32, %c0_i32_0 : i32, i32, i32
  }
  func.func @transform_12(%arg0: i32) -> (i32, i32, i32) {
    %c0_i32 = arith.constant 0 : i32
    %c0_i32_0 = arith.constant 0 : i32
    %c0_i32_1 = arith.constant 0 : i32
    return %arg0, %c0_i32, %c0_i32_0 : i32, i32, i32
  }
  func.func @transform_13(%arg0: i32) -> (i32, i32, i32) {
    %c0_i32 = arith.constant 0 : i32
    %c0_i32_0 = arith.constant 0 : i32
    %c0_i32_1 = arith.constant 0 : i32
    return %arg0, %c0_i32, %c0_i32_0 : i32, i32, i32
  }
}

</mosaic_0001>

<llo_original>
// kernel: tpu_custom_call.1
$region0: #{tpu_custom_call.1}
  #allocation0 [shape = 'u32[]', space=smem, size = 0x4, offset = 0x4, fixed_abs, tag = 'smem constant byte address 0x4 - core index']
  #allocation1 [shape = 'u32[144,128]{1,0:T(1,128)}', space=vmem, size = 0x12000, scoped, tag = 'internal scratch']
  #allocation2 [shape = 'f32[8,640]{1,0:T(8,128)}', space=vmem, size = 0x5000, scoped, tag = 'scratch operand']
  #allocation3 [shape = 'f32[72,384]{1,0:T(8,128)}', space=vmem, size = 0x1b000, scoped, tag = 'scratch operand']
  %s0 = inlined_call_operand.vmem [shape: f32[2,8,256], index: 0, kind: input, shape index: {}]
  %s1 = inlined_call_operand.vmem [shape: bf16[8,72], index: 1, kind: input, shape index: {}]
  %s2 = inlined_call_operand.vmem [shape: f32[8,1], index: 2, kind: input, shape index: {}]
  %s3 = inlined_call_operand.vmem [shape: bf16[8,72], index: 3, kind: input, shape index: {}]
  %s4 = inlined_call_operand.vmem [shape: f32[8,1], index: 4, kind: input, shape index: {}]
  %s5 = inlined_call_operand.hbm [shape: f32[256,384], index: 5, kind: input, shape index: {}]
  %s6 = inlined_call_operand.hbm [shape: f32[384,256], index: 6, kind: input, shape index: {}]
  %s7 = inlined_call_operand.vmem [shape: f32[1,384], index: 7, kind: input, shape index: {}]
  %s8 = inlined_call_operand.vmem [shape: f32[384,64], index: 8, kind: input, shape index: {}]
  %s9 = inlined_call_operand.vmem [shape: bf16[8,64,128], index: 9, kind: input, shape index: {}]
  %s10 = inlined_call_operand.vmem [shape: f32[1,128], index: 10, kind: input, shape index: {}]
  %s11 = inlined_call_operand.hbm [shape: f32[2,8,256], index: 11, kind: output, shape index: {0}]
  %s12 = inlined_call_operand.hbm [shape: f32[2,8,256], index: 12, kind: output, shape index: {1}]
  %s13 = inlined_call_operand.hbm [shape: f32[2,1,128], index: 13, kind: output, shape index: {2}]
  %14 = xla_tuple %s11, %s12, %s13
  %s15 = sld [smem:[#allocation0]]
  $region101: #{tpu_custom_call.1} parent=0
    _
  %s17 = ssub.s32 1, %s15
  %s18 = scalar_select 0, %s17, %s15
  $region1: #{tpu_custom_call.1} parent=0
    #allocation4 [shape = 'u8[393216]{0}', space=vmem, size = 0x60000, scoped, tag = 'input window, operand 5, single buffered']
    #allocation5 [shape = 's32[2]{0}', space=sflag, size = 0x8, scoped, tag = 'scoped memory for tpu_custom_call.1']
    #allocation6 [shape = 's32[2]{0}', space=sflag, size = 0x8, scoped, tag = 'scoped memory for tpu_custom_call.1']
    #allocation7 [shape = 'u8[393216]{0}', space=vmem, size = 0x60000, scoped, tag = 'input window, operand 6, single buffered']
    #allocation8 [shape = 's32[1]{0}', space=sflag, size = 0x4, scoped, tag = 'scoped memory for tpu_custom_call.1']
    #allocation9 [shape = 'u8[16384]{0}', space=vmem, size = 0x4000, scoped, tag = 'output window, operand 0']
    #allocation10 [shape = 'u8[16384]{0}', space=vmem, size = 0x4000, scoped, tag = 'output window, operand 1']
    #allocation11 [shape = 's32[2]{0}', space=sflag, size = 0x8, scoped, tag = 'scoped memory for tpu_custom_call.1']
    #allocation12 [shape = 'u8[1024]{0}', space=vmem, size = 0x400, scoped, tag = 'output window, operand 2']
    %19 = vsyncpa [#allocation5], 0
    %20 = vsyncpa [#allocation8], 0
    %21 = vsyncpa [#allocation6], 0
    %s22 = scalar_lea.sflag [#allocation6], 1
    %23 = vsyncpa %s22, 0
    %24 = vsyncpa [#allocation11], 0
    %s25 = scalar_lea.sflag [#allocation11], 1
    %26 = vsyncpa %s25, 0
    loop: start=0, step=1, limit=4
    $region2: #{tpu_custom_call.1} parent=1 // loop_pre_header
      _
    $region3: #{tpu_custom_call.1} parent=1 // loop_header
      %s28 = sphi 0, %s32
      %p29 = scmp.ge.s32.totalorder %s28, 4
      %s38 = sphi 0, %s40
      %s41 = sphi 0, %s38
      %s42 = sphi 0, %s41
      %s58 = sphi 0, %s42
      %s62 = sphi 0, %s62
      %s64 = sphi 0, %s62
      %s65 = sphi 0, %s64
      %s79 = sphi 0, %s65
      %s83 = sphi 0, %s83
      %s85 = sphi 0, %s83
      %s86 = sphi 0, %s85
      %s100 = sphi 0, %s86
      %s104 = sphi 0, %s104
      %s106 = sphi 0, %s104
      %s107 = sphi 0, %s106
      %s121 = sphi 0, %s107
      %s125 = sphi 0, %s125
      %s127 = sphi 0, %s125
      %s128 = sphi 0, %s127
      %s142 = sphi 0, %s128
      %s146 = sphi 0, %s146
      %s148 = sphi 0, %s146
      %s149 = sphi 0, %s148
      %s163 = sphi 0, %s149
      %s167 = sphi 0, %s167
      %s169 = sphi 0, %s167
      %s170 = sphi 0, %s169
      %s184 = sphi 0, %s170
      %s188 = sphi 0, %s188
      %s190 = sphi 0, %s188
      %s191 = sphi 0, %s190
      %s205 = sphi 0, %s191
      %s209 = sphi 0, %s209
      %s211 = sphi 0, %s209
      %s212 = sphi 0, %s211
      %s226 = sphi 0, %s212
      %s230 = sphi 0, %s230
      %s232 = sphi 0, %s230
      %s233 = sphi 0, %s232
      %s247 = sphi 0, %s233
      %s251 = sphi 0, %s251
      %s253 = sphi 0, %s251
      %s254 = sphi 0, %s253
      %s268 = sphi 0, %s254
      %s274 = sphi 0, %s276
      %s277 = sphi 0, %s274
      %s278 = sphi 0, %s277
      %s294 = sphi 0, %s278
      %s300 = sphi 0, %s302
      %s303 = sphi 0, %s300
      %s304 = sphi 0, %s303
      %s320 = sphi 0, %s304
      %s326 = sphi 0, %s328
      %s329 = sphi 0, %s326
      %s330 = sphi 0, %s329
      %s346 = sphi 0, %s330
    $region4: #{tpu_custom_call.1} parent=1 // loop_header_branch
      %31 = sbr.rel (%p29) target = $region8
    $region5: #{tpu_custom_call.1} parent=1 // loop_body
      %s33 = ssub.s32 %s28, 1
      %s34 = ssub.s32 %s28, 2
      %s35 = sadd.s32 %s28, 1
      %s36 = ssub.s32 %s28, %s35
      %p37 = scmp.eq.s32.totalorder %s36, 0
      %s39 = sadd.s32 %s38, 1
      %s40 = scalar_select %p37, %s38, %s39
      %p43 = pneg %p37
      %p44 = scmp.eq.s32.totalorder %s28, 1
      %p45 = por %p43, %p44
      %p46 = scmp.ne.s32.totalorder %s38, %s41
      %p47 = scmp.eq.s32.totalorder %s28, 0
      %p48 = por %p46, %p47
      %p49 = scmp.ne.s32.totalorder %s38, %s41
      %p50 = scmp.eq.s32.totalorder %s33, 1
      %p51 = por %p49, %p50
      %p52 = scmp.ne.s32.totalorder %s41, %s42
      %p53 = scmp.eq.s32.totalorder %s33, 0
      %p54 = por %p52, %p53
      %p55 = scmp.ne.s32.totalorder %s41, %s42
      %p56 = scmp.eq.s32.totalorder %s34, 1
      %p57 = por %p55, %p56
      %p59 = scmp.ne.s32.totalorder %s42, %s58
      %p60 = scmp.eq.s32.totalorder %s34, 0
      %p61 = por %p59, %p60
      %s63 = sadd.s32 %s62, 1
      %p66 = scmp.eq.s32.totalorder %s28, 1
      %p67 = scmp.ne.s32.totalorder %s62, %s64
      %p68 = scmp.eq.s32.totalorder %s28, 0
      %p69 = por %p67, %p68
      %p70 = scmp.ne.s32.totalorder %s62, %s64
      %p71 = scmp.eq.s32.totalorder %s33, 1
      %p72 = por %p70, %p71
      %p73 = scmp.ne.s32.totalorder %s64, %s65
      %p74 = scmp.eq.s32.totalorder %s33, 0
      %p75 = por %p73, %p74
      %p76 = scmp.ne.s32.totalorder %s64, %s65
      %p77 = scmp.eq.s32.totalorder %s34, 1
      %p78 = por %p76, %p77
      %p80 = scmp.ne.s32.totalorder %s65, %s79
      %p81 = scmp.eq.s32.totalorder %s34, 0
      %p82 = por %p80, %p81
      %s84 = sadd.s32 %s83, 1
      %p87 = scmp.eq.s32.totalorder %s28, 1
      %p88 = scmp.ne.s32.totalorder %s83, %s85
      %p89 = scmp.eq.s32.totalorder %s28, 0
      %p90 = por %p88, %p89
      %p91 = scmp.ne.s32.totalorder %s83, %s85
      %p92 = scmp.eq.s32.totalorder %s33, 1
      %p93 = por %p91, %p92
      %p94 = scmp.ne.s32.totalorder %s85, %s86
      %p95 = scmp.eq.s32.totalorder %s33, 0
      %p96 = por %p94, %p95
      %p97 = scmp.ne.s32.totalorder %s85, %s86
      %p98 = scmp.eq.s32.totalorder %s34, 1
      %p99 = por %p97, %p98
      %p101 = scmp.ne.s32.totalorder %s86, %s100
      %p102 = scmp.eq.s32.totalorder %s34, 0
      %p103 = por %p101, %p102
      %s105 = sadd.s32 %s104, 1
      %p108 = scmp.eq.s32.totalorder %s28, 1
      %p109 = scmp.ne.s32.totalorder %s104, %s106
      %p110 = scmp.eq.s32.totalorder %s28, 0
      %p111 = por %p109, %p110
      %p112 = scmp.ne.s32.totalorder %s104, %s106
      %p113 = scmp.eq.s32.totalorder %s33, 1
      %p114 = por %p112, %p113
      %p115 = scmp.ne.s32.totalorder %s106, %s107
      %p116 = scmp.eq.s32.totalorder %s33, 0
      %p117 = por %p115, %p116
      %p118 = scmp.ne.s32.totalorder %s106, %s107
      %p119 = scmp.eq.s32.totalorder %s34, 1
      %p120 = por %p118, %p119
      %p122 = scmp.ne.s32.totalorder %s107, %s121
      %p123 = scmp.eq.s32.totalorder %s34, 0
      %p124 = por %p122, %p123
      %s126 = sadd.s32 %s125, 1
      %p129 = scmp.eq.s32.totalorder %s28, 1
      %p130 = scmp.ne.s32.totalorder %s125, %s127
      %p131 = scmp.eq.s32.totalorder %s28, 0
      %p132 = por %p130, %p131
      %p133 = scmp.ne.s32.totalorder %s125, %s127
      %p134 = scmp.eq.s32.totalorder %s33, 1
      %p135 = por %p133, %p134
      %p136 = scmp.ne.s32.totalorder %s127, %s128
      %p137 = scmp.eq.s32.totalorder %s33, 0
      %p138 = por %p136, %p137
      %p139 = scmp.ne.s32.totalorder %s127, %s128
      %p140 = scmp.eq.s32.totalorder %s34, 1
      %p141 = por %p139, %p140
      %p143 = scmp.ne.s32.totalorder %s128, %s142
      %p144 = scmp.eq.s32.totalorder %s34, 0
      %p145 = por %p143, %p144
      %s147 = sadd.s32 %s146, 1
      %p150 = scmp.eq.s32.totalorder %s28, 1
      %p151 = scmp.ne.s32.totalorder %s146, %s148
      %p152 = scmp.eq.s32.totalorder %s28, 0
      %p153 = por %p151, %p152
      %p154 = scmp.ne.s32.totalorder %s146, %s148
      %p155 = scmp.eq.s32.totalorder %s33, 1
      %p156 = por %p154, %p155
      %p157 = scmp.ne.s32.totalorder %s148, %s149
      %p158 = scmp.eq.s32.totalorder %s33, 0
      %p159 = por %p157, %p158
      %p160 = scmp.ne.s32.totalorder %s148, %s149
      %p161 = scmp.eq.s32.totalorder %s34, 1
      %p162 = por %p160, %p161
      %p164 = scmp.ne.s32.totalorder %s149, %s163
      %p165 = scmp.eq.s32.totalorder %s34, 0
      %p166 = por %p164, %p165
      %s168 = sadd.s32 %s167, 1
      %p171 = scmp.eq.s32.totalorder %s28, 1
      %p172 = scmp.ne.s32.totalorder %s167, %s169
      %p173 = scmp.eq.s32.totalorder %s28, 0
      %p174 = por %p172, %p173
      %p175 = scmp.ne.s32.totalorder %s167, %s169
      %p176 = scmp.eq.s32.totalorder %s33, 1
      %p177 = por %p175, %p176
      %p178 = scmp.ne.s32.totalorder %s169, %s170
      %p179 = scmp.eq.s32.totalorder %s33, 0
      %p180 = por %p178, %p179
      %p181 = scmp.ne.s32.totalorder %s169, %s170
      %p182 = scmp.eq.s32.totalorder %s34, 1
      %p183 = por %p181, %p182
      %p185 = scmp.ne.s32.totalorder %s170, %s184
      %p186 = scmp.eq.s32.totalorder %s34, 0
      %p187 = por %p185, %p186
      %s189 = sadd.s32 %s188, 1
      %p192 = scmp.eq.s32.totalorder %s28, 1
      %p193 = scmp.ne.s32.totalorder %s188, %s190
      %p194 = scmp.eq.s32.totalorder %s28, 0
      %p195 = por %p193, %p194
      %p196 = scmp.ne.s32.totalorder %s188, %s190
      %p197 = scmp.eq.s32.totalorder %s33, 1
      %p198 = por %p196, %p197
      %p199 = scmp.ne.s32.totalorder %s190, %s191
      %p200 = scmp.eq.s32.totalorder %s33, 0
      %p201 = por %p199, %p200
      %p202 = scmp.ne.s32.totalorder %s190, %s191
      %p203 = scmp.eq.s32.totalorder %s34, 1
      %p204 = por %p202, %p203
      %p206 = scmp.ne.s32.totalorder %s191, %s205
      %p207 = scmp.eq.s32.totalorder %s34, 0
      %p208 = por %p206, %p207
      %s210 = sadd.s32 %s209, 1
      %p213 = scmp.eq.s32.totalorder %s28, 1
      %p214 = scmp.ne.s32.totalorder %s209, %s211
      %p215 = scmp.eq.s32.totalorder %s28, 0
      %p216 = por %p214, %p215
      %p217 = scmp.ne.s32.totalorder %s209, %s211
      %p218 = scmp.eq.s32.totalorder %s33, 1
      %p219 = por %p217, %p218
      %p220 = scmp.ne.s32.totalorder %s211, %s212
      %p221 = scmp.eq.s32.totalorder %s33, 0
      %p222 = por %p220, %p221
      %p223 = scmp.ne.s32.totalorder %s211, %s212
      %p224 = scmp.eq.s32.totalorder %s34, 1
      %p225 = por %p223, %p224
      %p227 = scmp.ne.s32.totalorder %s212, %s226
      %p228 = scmp.eq.s32.totalorder %s34, 0
      %p229 = por %p227, %p228
      %s231 = sadd.s32 %s230, 1
      %p234 = scmp.eq.s32.totalorder %s28, 1
      %p235 = scmp.ne.s32.totalorder %s230, %s232
      %p236 = scmp.eq.s32.totalorder %s28, 0
      %p237 = por %p235, %p236
      %p238 = scmp.ne.s32.totalorder %s230, %s232
      %p239 = scmp.eq.s32.totalorder %s33, 1
      %p240 = por %p238, %p239
      %p241 = scmp.ne.s32.totalorder %s232, %s233
      %p242 = scmp.eq.s32.totalorder %s33, 0
      %p243 = por %p241, %p242
      %p244 = scmp.ne.s32.totalorder %s232, %s233
      %p245 = scmp.eq.s32.totalorder %s34, 1
      %p246 = por %p244, %p245
      %p248 = scmp.ne.s32.totalorder %s233, %s247
      %p249 = scmp.eq.s32.totalorder %s34, 0
      %p250 = por %p248, %p249
      %s252 = sadd.s32 %s251, 1
      %p255 = scmp.eq.s32.totalorder %s28, 1
      %p256 = scmp.ne.s32.totalorder %s251, %s253
      %p257 = scmp.eq.s32.totalorder %s28, 0
      %p258 = por %p256, %p257
      %p259 = scmp.ne.s32.totalorder %s251, %s253
      %p260 = scmp.eq.s32.totalorder %s33, 1
      %p261 = por %p259, %p260
      %p262 = scmp.ne.s32.totalorder %s253, %s254
      %p263 = scmp.eq.s32.totalorder %s33, 0
      %p264 = por %p262, %p263
      %p265 = scmp.ne.s32.totalorder %s253, %s254
      %p266 = scmp.eq.s32.totalorder %s34, 1
      %p267 = por %p265, %p266
      %p269 = scmp.ne.s32.totalorder %s254, %s268
      %p270 = scmp.eq.s32.totalorder %s34, 0
      %p271 = por %p269, %p270
      %s272 = ssub.s32 %s28, %s35
      %p273 = scmp.eq.s32.totalorder %s272, 0
      %s275 = sadd.s32 %s274, 1
      %s276 = scalar_select %p273, %s274, %s275
      %p279 = pneg %p273
      %p280 = scmp.eq.s32.totalorder %s28, 1
      %p281 = por %p279, %p280
      %p282 = scmp.ne.s32.totalorder %s274, %s277
      %p283 = scmp.eq.s32.totalorder %s28, 0
      %p284 = por %p282, %p283
      %p285 = scmp.ne.s32.totalorder %s274, %s277
      %p286 = scmp.eq.s32.totalorder %s33, 1
      %p287 = por %p285, %p286
      %p288 = scmp.ne.s32.totalorder %s277, %s278
      %p289 = scmp.eq.s32.totalorder %s33, 0
      %p290 = por %p288, %p289
      %p291 = scmp.ne.s32.totalorder %s277, %s278
      %p292 = scmp.eq.s32.totalorder %s34, 1
      %p293 = por %p291, %p292
      %p295 = scmp.ne.s32.totalorder %s278, %s294
      %p296 = scmp.eq.s32.totalorder %s34, 0
      %p297 = por %p295, %p296
      %s298 = ssub.s32 %s28, %s35
      %p299 = scmp.eq.s32.totalorder %s298, 0
      %s301 = sadd.s32 %s300, 1
      %s302 = scalar_select %p299, %s300, %s301
      %p305 = pneg %p299
      %p306 = scmp.eq.s32.totalorder %s28, 1
      %p307 = por %p305, %p306
      %p308 = scmp.ne.s32.totalorder %s300, %s303
      %p309 = scmp.eq.s32.totalorder %s28, 0
      %p310 = por %p308, %p309
      %p311 = scmp.ne.s32.totalorder %s300, %s303
      %p312 = scmp.eq.s32.totalorder %s33, 1
      %p313 = por %p311, %p312
      %p314 = scmp.ne.s32.totalorder %s303, %s304
      %p315 = scmp.eq.s32.totalorder %s33, 0
      %p316 = por %p314, %p315
      %p317 = scmp.ne.s32.totalorder %s303, %s304
      %p318 = scmp.eq.s32.totalorder %s34, 1
      %p319 = por %p317, %p318
      %p321 = scmp.ne.s32.totalorder %s304, %s320
      %p322 = scmp.eq.s32.totalorder %s34, 0
      %p323 = por %p321, %p322
      %s324 = ssub.s32 %s28, %s35
      %p325 = scmp.eq.s32.totalorder %s324, 0
      %s327 = sadd.s32 %s326, 1
      %s328 = scalar_select %p325, %s326, %s327
      %p331 = pneg %p325
      %p332 = scmp.eq.s32.totalorder %s28, 1
      %p333 = por %p331, %p332
      %p334 = scmp.ne.s32.totalorder %s326, %s329
      %p335 = scmp.eq.s32.totalorder %s28, 0
      %p336 = por %p334, %p335
      %p337 = scmp.ne.s32.totalorder %s326, %s329
      %p338 = scmp.eq.s32.totalorder %s33, 1
      %p339 = por %p337, %p338
      %p340 = scmp.ne.s32.totalorder %s329, %s330
      %p341 = scmp.eq.s32.totalorder %s33, 0
      %p342 = por %p340, %p341
      %p343 = scmp.ne.s32.totalorder %s329, %s330
      %p344 = scmp.eq.s32.totalorder %s34, 1
      %p345 = por %p343, %p344
      %p347 = scmp.ne.s32.totalorder %s330, %s346
      %p348 = scmp.eq.s32.totalorder %s34, 0
      %p349 = por %p347, %p348
      %p350 = scmp.le.s32.totalorder 1, %s28
      %p351 = scmp.lt.s32.totalorder %s28, 3
      %p352 = pnand %p350, %p351
      %p353 = pneg %p352
      // Predicated region
      $region9: #{tpu_custom_call.1} parent=5 // pred_check
        _
      $region10: #{tpu_custom_call.1} parent=5 // pred_check_branch
        %355 = sbr.rel (%p352) target = $region12
      $region11: #{tpu_custom_call.1} parent=5 // pred_region
        %s356 = ssub.s32 %s28, 1
        // Predicated region
        $region13: #{tpu_custom_call.1} parent=11 // pred_check
          %p357 = pneg %p75
        $region14: #{tpu_custom_call.1} parent=11 // pred_check_branch
          %359 = sbr.rel (%p357) target = $region16
        $region15: #{tpu_custom_call.1} parent=11 // pred_region
          _
        $region16: #{tpu_custom_call.1} parent=11 // pred_fallthru
          _
        // Predicated region
        $region17: #{tpu_custom_call.1} parent=11 // pred_check
          %p360 = pneg %p96
        $region18: #{tpu_custom_call.1} parent=11 // pred_check_branch
          %362 = sbr.rel (%p360) target = $region20
        $region19: #{tpu_custom_call.1} parent=11 // pred_region
          _
        $region20: #{tpu_custom_call.1} parent=11 // pred_fallthru
          _
        // Predicated region
        $region21: #{tpu_custom_call.1} parent=11 // pred_check
          %p363 = pneg %p117
        $region22: #{tpu_custom_call.1} parent=11 // pred_check_branch
          %365 = sbr.rel (%p363) target = $region24
        $region23: #{tpu_custom_call.1} parent=11 // pred_region
          _
        $region24: #{tpu_custom_call.1} parent=11 // pred_fallthru
          _
        // Predicated region
        $region25: #{tpu_custom_call.1} parent=11 // pred_check
          %p366 = pneg %p138
        $region26: #{tpu_custom_call.1} parent=11 // pred_check_branch
          %368 = sbr.rel (%p366) target = $region28
        $region27: #{tpu_custom_call.1} parent=11 // pred_region
          _
        $region28: #{tpu_custom_call.1} parent=11 // pred_fallthru
          _
        // Predicated region
        $region29: #{tpu_custom_call.1} parent=11 // pred_check
          %p369 = pneg %p159
        $region30: #{tpu_custom_call.1} parent=11 // pred_check_branch
          %371 = sbr.rel (%p369) target = $region32
        $region31: #{tpu_custom_call.1} parent=11 // pred_region
          %s373 = ssub.s32 12288, 12288
          %374 = vsyncadd [#allocation5], %s373
          %s375 = sshll.u32 [#allocation4], 4
          %s376 = int_to_ptr.vmem [resolvable:$true] %s375
          %381 = dma.hbm_to_vmem [thread:$0]  %s5, 12288, %s376, [#allocation5], 384, 384, 24
        $region32: #{tpu_custom_call.1} parent=11 // pred_fallthru
          _
        // Predicated region
        $region33: #{tpu_custom_call.1} parent=11 // pred_check
          %p382 = pneg %p180
        $region34: #{tpu_custom_call.1} parent=11 // pred_check_branch
          %384 = sbr.rel (%p382) target = $region36
        $region35: #{tpu_custom_call.1} parent=11 // pred_region
          %s386 = ssub.s32 12288, 12288
          %387 = vsyncadd [#allocation8], %s386
          %s388 = sshll.u32 [#allocation7], 4
          %s389 = int_to_ptr.vmem [resolvable:$true] %s388
          %394 = dma.hbm_to_vmem [thread:$0]  %s6, 12288, %s389, [#allocation8], 256, 256, 16
        $region36: #{tpu_custom_call.1} parent=11 // pred_fallthru
          _
        // Predicated region
        $region37: #{tpu_custom_call.1} parent=11 // pred_check
          %p395 = pneg %p201
        $region38: #{tpu_custom_call.1} parent=11 // pred_check_branch
          %397 = sbr.rel (%p395) target = $region40
        $region39: #{tpu_custom_call.1} parent=11 // pred_region
          _
        $region40: #{tpu_custom_call.1} parent=11 // pred_fallthru
          _
        // Predicated region
        $region41: #{tpu_custom_call.1} parent=11 // pred_check
          %p398 = pneg %p222
        $region42: #{tpu_custom_call.1} parent=11 // pred_check_branch
          %400 = sbr.rel (%p398) target = $region44
        $region43: #{tpu_custom_call.1} parent=11 // pred_region
          _
        $region44: #{tpu_custom_call.1} parent=11 // pred_fallthru
          _
        // Predicated region
        $region45: #{tpu_custom_call.1} parent=11 // pred_check
          %p401 = pneg %p243
        $region46: #{tpu_custom_call.1} parent=11 // pred_check_branch
          %403 = sbr.rel (%p401) target = $region48
        $region47: #{tpu_custom_call.1} parent=11 // pred_region
          _
        $region48: #{tpu_custom_call.1} parent=11 // pred_fallthru
          _
        // Predicated region
        $region49: #{tpu_custom_call.1} parent=11 // pred_check
          %p404 = pneg %p264
        $region50: #{tpu_custom_call.1} parent=11 // pred_check_branch
          %406 = sbr.rel (%p404) target = $region52
        $region51: #{tpu_custom_call.1} parent=11 // pred_region
          _
        $region52: #{tpu_custom_call.1} parent=11 // pred_fallthru
          _
      $region12: #{tpu_custom_call.1} parent=5 // pred_fallthru
        _
      %p407 = scmp.lt.s32.totalorder %s28, 2
      // Predicated region
      $region53: #{tpu_custom_call.1} parent=5 // pred_check
        %p408 = pneg %p407
      $region54: #{tpu_custom_call.1} parent=5 // pred_check_branch
        %410 = sbr.rel (%p408) target = $region56
      $region55: #{tpu_custom_call.1} parent=5 // pred_region
        // Predicated region
        $region57: #{tpu_custom_call.1} parent=55 // pred_check
          %p411 = pneg %p48
        $region58: #{tpu_custom_call.1} parent=55 // pred_check_branch
          %413 = sbr.rel (%p411) target = $region60
        $region59: #{tpu_custom_call.1} parent=55 // pred_region
          %p414 = scmp.lt.s32.totalorder %s28, 1
          %s415 = scalar_select %p414, %s28, 1
          %s416 = smul.addr %s415, 2
          %s417 = smul.addr %s416, 8
          %s418 = scalar_lea.vmem %s0, %s417
        $region60: #{tpu_custom_call.1} parent=55 // pred_fallthru
          _
      $region56: #{tpu_custom_call.1} parent=5 // pred_fallthru
        _
      %p419 = scmp.le.s32.totalorder 1, %s28
      %p420 = scmp.lt.s32.totalorder %s28, 3
      %p421 = pnand %p419, %p420
      %p422 = pneg %p421
      // Predicated region
      $region61: #{tpu_custom_call.1} parent=5 // pred_check
        _
      $region62: #{tpu_custom_call.1} parent=5 // pred_check_branch
        %424 = sbr.rel (%p421) target = $region64
      $region63: #{tpu_custom_call.1} parent=5 // pred_region
        %s425 = ssub.s32 %s28, 1
        // Predicated region
        $region65: #{tpu_custom_call.1} parent=63 // pred_check
          %p426 = pneg %p159
        $region66: #{tpu_custom_call.1} parent=63 // pred_check_branch
          %428 = sbr.rel (%p426) target = $region68
        $region67: #{tpu_custom_call.1} parent=63 // pred_region
          %429 = dma.done [#allocation5], 12288
        $region68: #{tpu_custom_call.1} parent=63 // pred_fallthru
          _
        // Predicated region
        $region69: #{tpu_custom_call.1} parent=63 // pred_check
          %p430 = pneg %p180
        $region70: #{tpu_custom_call.1} parent=63 // pred_check_branch
          %432 = sbr.rel (%p430) target = $region72
        $region71: #{tpu_custom_call.1} parent=63 // pred_region
          %433 = dma.done [#allocation8], 12288
        $region72: #{tpu_custom_call.1} parent=63 // pred_fallthru
          _
        %p434 = scmp.lt.s32.totalorder %s33, 1
        %s435 = scalar_select %p434, %s33, 1
        %s436 = smul.addr %s435, 2
        %s437 = smul.addr %s436, 8
        %s438 = scalar_lea.vmem %s0, %s437
        %p439 = pneg %p54
        %p440 = pneg %p51
        %p441 = pneg %p75
        %p442 = pneg %p72
        %p443 = pneg %p96
        %p444 = pneg %p93
        %p445 = pneg %p117
        %p446 = pneg %p114
        %p447 = pneg %p138
        %p448 = pneg %p135
        %p449 = pneg %p159
        %p450 = pneg %p156
        %p451 = pneg %p180
        %p452 = pneg %p177
        %p453 = pneg %p201
        %p454 = pneg %p198
        %p455 = pneg %p222
        %p456 = pneg %p219
        %p457 = pneg %p243
        %p458 = pneg %p240
        %p459 = pneg %p264
        %p460 = pneg %p261
        %p461 = pneg %p290
        %p462 = pneg %p287
        %s463 = sand.u32 %s277, 1
        %s464 = scalar_lea.sflag [#allocation6], %s463
        %s465 = sand.u32 %s277, 1
        %s466 = smul.addr %s465, 16
        %s467 = scalar_lea.vmem [#allocation9], %s466
        %p468 = pneg %p316
        %p469 = pneg %p313
        %s470 = sand.u32 %s33, 1
        %s471 = scalar_lea.sflag [#allocation11], %s470
        %s472 = sand.u32 %s303, 1
        %s473 = smul.addr %s472, 16
        %s474 = scalar_lea.vmem [#allocation10], %s473
        %p475 = pneg %p342
        %p476 = pneg %p339
        %s477 = sand.u32 %s33, 1
        %s478 = scalar_lea.sflag [#allocation11], %s477
        %s479 = sand.u32 %s329, 1
        %s480 = scalar_lea.vmem [#allocation12], %s479
        %p481 = scmp.lt.s32.totalorder %s33, 1
        %s482 = scalar_select %p481, %s33, 1
        %s483 = smul.addr %s482, 2
        %s484 = smul.addr %s483, 8
        %s485 = scalar_lea.vmem %s0, %s484
        %487 = vst [vmem:[#allocation2] sm:$0xff] 0.0
        %488 = vst [vmem:[#allocation2 + $0x20] sm:$0xff] 0.0
        %v489 = vld [vmem:[%s7] sm:$0x7]
        %v490 = vld [vmem:[%s485] sm:$0xff]
        %v491 = vld [vmem:[%s485 + $0x8] sm:$0xff]
        %v492 = vld [vmem:[#allocation4] sm:$0xff]
        %v493 = vld [vmem:[#allocation4 + $0x8] sm:$0xff]
        %v494 = vld [vmem:[#allocation4 + $0x10] sm:$0xff]
        %v495 = vld [vmem:[#allocation4 + $0x18] sm:$0xff]
        %v496 = vld [vmem:[#allocation4 + $0x20] sm:$0xff]
        %v497 = vld [vmem:[#allocation4 + $0x28] sm:$0xff]
        %v498 = vld [vmem:[#allocation4 + $0x30] sm:$0xff]
        %v499 = vld [vmem:[#allocation4 + $0x38] sm:$0xff]
        %v500 = vld [vmem:[#allocation4 + $0x40] sm:$0xff]
        %v501 = vld [vmem:[#allocation4 + $0x48] sm:$0xff]
        %v502 = vld [vmem:[#allocation4 + $0x50] sm:$0xff]
        %v503 = vld [vmem:[#allocation4 + $0x58] sm:$0xff]
        %v504 = vld [vmem:[#allocation4 + $0x60] sm:$0xff]
        %v505 = vld [vmem:[#allocation4 + $0x68] sm:$0xff]
        %v506 = vld [vmem:[#allocation4 + $0x70] sm:$0xff]
        %v507 = vld [vmem:[#allocation4 + $0x78] sm:$0xff]
        %v508 = vld [vmem:[#allocation4 + $0x80] sm:$0xff]
        %v509 = vld [vmem:[#allocation4 + $0x88] sm:$0xff]
        %v510 = vld [vmem:[#allocation4 + $0x90] sm:$0xff]
        %v511 = vld [vmem:[#allocation4 + $0x98] sm:$0xff]
        %v512 = vld [vmem:[#allocation4 + $0xa0] sm:$0xff]
        %v513 = vld [vmem:[#allocation4 + $0xa8] sm:$0xff]
        %v514 = vld [vmem:[#allocation4 + $0xb0] sm:$0xff]
        %v515 = vld [vmem:[#allocation4 + $0xb8] sm:$0xff]
        %v516 = vld [vmem:[#allocation4 + $0xc0] sm:$0xff]
        %v517 = vld [vmem:[#allocation4 + $0xc8] sm:$0xff]
        %v518 = vld [vmem:[#allocation4 + $0xd0] sm:$0xff]
        %v519 = vld [vmem:[#allocation4 + $0xd8] sm:$0xff]
        %v520 = vld [vmem:[#allocation4 + $0xe0] sm:$0xff]
        %v521 = vld [vmem:[#allocation4 + $0xe8] sm:$0xff]
        %v522 = vld [vmem:[#allocation4 + $0xf0] sm:$0xff]
        %v523 = vld [vmem:[#allocation4 + $0xf8] sm:$0xff]
        %v524 = vld [vmem:[#allocation4 + $0x100] sm:$0xff]
        %v525 = vld [vmem:[#allocation4 + $0x108] sm:$0xff]
        %v526 = vld [vmem:[#allocation4 + $0x110] sm:$0xff]
        %v527 = vld [vmem:[#allocation4 + $0x118] sm:$0xff]
        %v528 = vld [vmem:[#allocation4 + $0x120] sm:$0xff]
        %v529 = vld [vmem:[#allocation4 + $0x128] sm:$0xff]
        %v530 = vld [vmem:[#allocation4 + $0x130] sm:$0xff]
        %v531 = vld [vmem:[#allocation4 + $0x138] sm:$0xff]
        %v532 = vld [vmem:[#allocation4 + $0x140] sm:$0xff]
        %v533 = vld [vmem:[#allocation4 + $0x148] sm:$0xff]
        %v534 = vld [vmem:[#allocation4 + $0x150] sm:$0xff]
        %v535 = vld [vmem:[#allocation4 + $0x158] sm:$0xff]
        %v536 = vld [vmem:[#allocation4 + $0x160] sm:$0xff]
        %v537 = vld [vmem:[#allocation4 + $0x168] sm:$0xff]
        %v538 = vld [vmem:[#allocation4 + $0x170] sm:$0xff]
        %v539 = vld [vmem:[#allocation4 + $0x178] sm:$0xff]
        %v540 = vld [vmem:[#allocation4 + $0x180] sm:$0xff]
        %v541 = vld [vmem:[#allocation4 + $0x188] sm:$0xff]
        %v542 = vld [vmem:[#allocation4 + $0x190] sm:$0xff]
        %v543 = vld [vmem:[#allocation4 + $0x198] sm:$0xff]
        %v544 = vld [vmem:[#allocation4 + $0x1a0] sm:$0xff]
        %v545 = vld [vmem:[#allocation4 + $0x1a8] sm:$0xff]
        %v546 = vld [vmem:[#allocation4 + $0x1b0] sm:$0xff]
        %v547 = vld [vmem:[#allocation4 + $0x1b8] sm:$0xff]
        %v548 = vld [vmem:[#allocation4 + $0x1c0] sm:$0xff]
        %v549 = vld [vmem:[#allocation4 + $0x1c8] sm:$0xff]
        %v550 = vld [vmem:[#allocation4 + $0x1d0] sm:$0xff]
        %v551 = vld [vmem:[#allocation4 + $0x1d8] sm:$0xff]
        %v552 = vld [vmem:[#allocation4 + $0x1e0] sm:$0xff]
        %v553 = vld [vmem:[#allocation4 + $0x1e8] sm:$0xff]
        %v554 = vld [vmem:[#allocation4 + $0x1f0] sm:$0xff]
        %v555 = vld [vmem:[#allocation4 + $0x1f8] sm:$0xff]
        %v556 = vld [vmem:[#allocation4 + $0x200] sm:$0xff]
        %v557 = vld [vmem:[#allocation4 + $0x208] sm:$0xff]
        %v558 = vld [vmem:[#allocation4 + $0x210] sm:$0xff]
        %v559 = vld [vmem:[#allocation4 + $0x218] sm:$0xff]
        %v560 = vld [vmem:[#allocation4 + $0x220] sm:$0xff]
        %v561 = vld [vmem:[#allocation4 + $0x228] sm:$0xff]
        %v562 = vld [vmem:[#allocation4 + $0x230] sm:$0xff]
        %v563 = vld [vmem:[#allocation4 + $0x238] sm:$0xff]
        %v564 = vld [vmem:[#allocation4 + $0x240] sm:$0xff]
        %v565 = vld [vmem:[#allocation4 + $0x248] sm:$0xff]
        %v566 = vld [vmem:[#allocation4 + $0x250] sm:$0xff]
        %v567 = vld [vmem:[#allocation4 + $0x258] sm:$0xff]
        %v568 = vld [vmem:[#allocation4 + $0x260] sm:$0xff]
        %v569 = vld [vmem:[#allocation4 + $0x268] sm:$0xff]
        %v570 = vld [vmem:[#allocation4 + $0x270] sm:$0xff]
        %v571 = vld [vmem:[#allocation4 + $0x278] sm:$0xff]
        %v572 = vld [vmem:[#allocation4 + $0x280] sm:$0xff]
        %v573 = vld [vmem:[#allocation4 + $0x288] sm:$0xff]
        %v574 = vld [vmem:[#allocation4 + $0x290] sm:$0xff]
        %v575 = vld [vmem:[#allocation4 + $0x298] sm:$0xff]
        %v576 = vld [vmem:[#allocation4 + $0x2a0] sm:$0xff]
        %v577 = vld [vmem:[#allocation4 + $0x2a8] sm:$0xff]
        %v578 = vld [vmem:[#allocation4 + $0x2b0] sm:$0xff]
        %v579 = vld [vmem:[#allocation4 + $0x2b8] sm:$0xff]
        %v580 = vld [vmem:[#allocation4 + $0x2c0] sm:$0xff]
        %v581 = vld [vmem:[#allocation4 + $0x2c8] sm:$0xff]
        %v582 = vld [vmem:[#allocation4 + $0x2d0] sm:$0xff]
        %v583 = vld [vmem:[#allocation4 + $0x2d8] sm:$0xff]
        %v584 = vld [vmem:[#allocation4 + $0x2e0] sm:$0xff]
        %v585 = vld [vmem:[#allocation4 + $0x2e8] sm:$0xff]
        %v586 = vld [vmem:[#allocation4 + $0x2f0] sm:$0xff]
        %v587 = vld [vmem:[#allocation4 + $0x2f8] sm:$0xff]
        %588 = vmatprep.subr.mxu0 %v493
        %589 = vmatpush1.msra.mxu0 %v492
        %590 = vmatprep.subr.mxu0 %v496
        %591 = vmatpush1.msra.mxu0 %v495
        %592 = vmatprep.subr.mxu0 %v499
        %593 = vmatpush1.msra.mxu0 %v498
        %594 = vmatprep.subr.mxu0 %v502
        %595 = vmatpush1.msra.mxu0 %v501
        %596 = vmatprep.subr.mxu0 %v505
        %597 = vmatpush1.msra.mxu0 %v504
        %598 = vmatprep.subr.mxu0 %v508
        %599 = vmatpush1.msra.mxu0 %v507
        %600 = vmatprep.subr.mxu0 %v511
        %601 = vmatpush1.msra.mxu0 %v510
        %602 = vmatprep.subr.mxu0 %v514
        %603 = vmatpush1.msra.mxu0 %v513
        %604 = vmatprep.subr.mxu0 %v517
        %605 = vmatpush1.msra.mxu0 %v516
        %606 = vmatprep.subr.mxu0 %v520
        %607 = vmatpush1.msra.mxu0 %v519
        %608 = vmatprep.subr.mxu0 %v523
        %609 = vmatpush1.msra.mxu0 %v522
        %610 = vmatprep.subr.mxu0 %v526
        %611 = vmatpush1.msra.mxu0 %v525
        %612 = vmatprep.subr.mxu0 %v529
        %613 = vmatpush1.msra.mxu0 %v528
        %614 = vmatprep.subr.mxu0 %v532
        %615 = vmatpush1.msra.mxu0 %v531
        %616 = vmatprep.subr.mxu0 %v535
        %617 = vmatpush1.msra.mxu0 %v534
        %618 = vmatprep.subr.mxu0 %v538
        %619 = vmatpush1.msra.mxu0 %v537
        %620 = vmatprep.subr.mxu0 %v541
        %621 = vmatpush1.msra.mxu0 %v540
        %622 = vmatprep.subr.mxu0 %v544
        %623 = vmatpush1.msra.mxu0 %v543
        %624 = vmatprep.subr.mxu0 %v547
        %625 = vmatpush1.msra.mxu0 %v546
        %626 = vmatprep.subr.mxu0 %v550
        %627 = vmatpush1.msra.mxu0 %v549
        %628 = vmatprep.subr.mxu0 %v553
        %629 = vmatpush1.msra.mxu0 %v552
        %630 = vmatprep.subr.mxu0 %v556
        %631 = vmatpush1.msra.mxu0 %v555
        %632 = vmatprep.subr.mxu0 %v559
        %633 = vmatpush1.msra.mxu0 %v558
        %634 = vmatprep.subr.mxu0 %v562
        %635 = vmatpush1.msra.mxu0 %v561
        %636 = vmatprep.subr.mxu0 %v565
        %637 = vmatpush1.msra.mxu0 %v564
        %638 = vmatprep.subr.mxu0 %v568
        %639 = vmatpush1.msra.mxu0 %v567
        %640 = vmatprep.subr.mxu0 %v571
        %641 = vmatpush1.msra.mxu0 %v570
        %642 = vmatprep.subr.mxu0 %v574
        %643 = vmatpush1.msra.mxu0 %v573
        %644 = vmatprep.subr.mxu0 %v577
        %645 = vmatpush1.msra.mxu0 %v576
        %646 = vmatprep.subr.mxu0 %v580
        %647 = vmatpush1.msra.mxu0 %v579
        %648 = vmatprep.subr.mxu0 %v583
        %649 = vmatpush1.msra.mxu0 %v582
        %650 = vmatprep.subr.mxu0 %v586
        %651 = vmatpush1.msra.mxu0 %v585
        %652 = vmatprep.mubr.f32.mxu0 %v491
        %653 = vmatmul.mubr.f32.gmra.mrb[0].mxu0 %v490
        %v654 = vpop.f32.mrb[0].mxu0
        %v655 = vadd.f32 0.0, %v654
        %v656 = vpop.f32.mrb[0].mxu0
        %v657 = vadd.f32 0.0, %v656
        %658 = vdwg.mxu0
        %659 = vmatprep.subr.mxu0 0.0
        %660 = vmatpush1.msra.mxu0 %v494
        %661 = vmatprep.subr.mxu0 0.0
        %662 = vmatpush1.msra.mxu0 %v497
        %663 = vmatprep.subr.mxu0 0.0
        %664 = vmatpush1.msra.mxu0 %v500
        %665 = vmatprep.subr.mxu0 0.0
        %666 = vmatpush1.msra.mxu0 %v503
        %667 = vmatprep.subr.mxu0 0.0
        %668 = vmatpush1.msra.mxu0 %v506
        %669 = vmatprep.subr.mxu0 0.0
        %670 = vmatpush1.msra.mxu0 %v509
        %671 = vmatprep.subr.mxu0 0.0
        %672 = vmatpush1.msra.mxu0 %v512
        %673 = vmatprep.subr.mxu0 0.0
        %674 = vmatpush1.msra.mxu0 %v515
        %675 = vmatprep.subr.mxu0 0.0
        %676 = vmatpush1.msra.mxu0 %v518
        %677 = vmatprep.subr.mxu0 0.0
        %678 = vmatpush1.msra.mxu0 %v521
        %679 = vmatprep.subr.mxu0 0.0
        %680 = vmatpush1.msra.mxu0 %v524
        %681 = vmatprep.subr.mxu0 0.0
        %682 = vmatpush1.msra.mxu0 %v527
        %683 = vmatprep.subr.mxu0 0.0
        %684 = vmatpush1.msra.mxu0 %v530
        %685 = vmatprep.subr.mxu0 0.0
        %686 = vmatpush1.msra.mxu0 %v533
        %687 = vmatprep.subr.mxu0 0.0
        %688 = vmatpush1.msra.mxu0 %v536
        %689 = vmatprep.subr.mxu0 0.0
        %690 = vmatpush1.msra.mxu0 %v539
        %691 = vmatprep.subr.mxu0 0.0
        %692 = vmatpush1.msra.mxu0 %v542
        %693 = vmatprep.subr.mxu0 0.0
        %694 = vmatpush1.msra.mxu0 %v545
        %695 = vmatprep.subr.mxu0 0.0
        %696 = vmatpush1.msra.mxu0 %v548
        %697 = vmatprep.subr.mxu0 0.0
        %698 = vmatpush1.msra.mxu0 %v551
        %699 = vmatprep.subr.mxu0 0.0
        %700 = vmatpush1.msra.mxu0 %v554
        %701 = vmatprep.subr.mxu0 0.0
        %702 = vmatpush1.msra.mxu0 %v557
        %703 = vmatprep.subr.mxu0 0.0
        %704 = vmatpush1.msra.mxu0 %v560
        %705 = vmatprep.subr.mxu0 0.0
        %706 = vmatpush1.msra.mxu0 %v563
        %707 = vmatprep.subr.mxu0 0.0
        %708 = vmatpush1.msra.mxu0 %v566
        %709 = vmatprep.subr.mxu0 0.0
        %710 = vmatpush1.msra.mxu0 %v569
        %711 = vmatprep.subr.mxu0 0.0
        %712 = vmatpush1.msra.mxu0 %v572
        %713 = vmatprep.subr.mxu0 0.0
        %714 = vmatpush1.msra.mxu0 %v575
        %715 = vmatprep.subr.mxu0 0.0
        %716 = vmatpush1.msra.mxu0 %v578
        %717 = vmatprep.subr.mxu0 0.0
        %718 = vmatpush1.msra.mxu0 %v581
        %719 = vmatprep.subr.mxu0 0.0
        %720 = vmatpush1.msra.mxu0 %v584
        %721 = vmatprep.subr.mxu0 0.0
        %722 = vmatpush1.msra.mxu0 %v587
        %723 = vmatprep.mubr.f32.mxu0 %v491
        %724 = vmatmul.mubr.f32.gmra.mrb[0].mxu0 %v490
        %v725 = vpop.f32.mrb[0].mxu0
        %v726 = vadd.f32 0.0, %v725
        %v727 = vpop.f32.mrb[0].mxu0
        %728 = vdwg.mxu0
        %729 = vst [vmem:[#allocation2 + $0x8] sm:$0xff] %v655
        %730 = vst [vmem:[#allocation2 + $0x10] sm:$0xff] %v657
        %731 = vst [vmem:[#allocation2 + $0x18] sm:$0xff] %v726
        %v732 = vld [vmem:[#allocation2] sm:$0xff]
        %v733 = vld [vmem:[#allocation2 + $0x8] sm:$0xff]
        %v734 = vld [vmem:[#allocation2 + $0x10] sm:$0xff]
        %v735 = vld [vmem:[#allocation2 + $0x18] sm:$0xff]
        %740 = vrot.lane.b32.xlu0 %v732, 19
        %v741 = vpop.permute.xlu0 %740
        %742 = vrot.lane.b32.xlu0 %v733, 19
        %v743 = vpop.permute.xlu0 %742
        %744 = vrot.lane.b32.xlu0 %v734, 19
        %v745 = vpop.permute.xlu0 %744
        %746 = vrot.lane.b32.xlu0 %v735, 19
        %v747 = vpop.permute.xlu0 %746
        %vm748 = vcmask 154624
        %v749 = vsel %vm748, %v741, %v743
        %v750 = vsel %vm748, %v743, %v745
        %v751 = vsel %vm748, %v745, %v747
        %755 = vst [vmem:[#allocation3] sm:$0xff] %v749
        %756 = vst [vmem:[#allocation3 + $0x8] sm:$0xff] %v750
        %757 = vst [vmem:[#allocation3 + $0x10] sm:$0xff] %v751
        %v758 = vld [vmem:[#allocation2] sm:$0xff]
        %v759 = vld [vmem:[#allocation2 + $0x8] sm:$0xff]
        %v760 = vld [vmem:[#allocation2 + $0x10] sm:$0xff]
        %v761 = vld [vmem:[#allocation2 + $0x18] sm:$0xff]
        %766 = vrot.lane.b32.xlu0 %v758, 18
        %v767 = vpop.permute.xlu0 %766
        %768 = vrot.lane.b32.xlu0 %v759, 18
        %v769 = vpop.permute.xlu0 %768
        %770 = vrot.lane.b32.xlu0 %v760, 18
        %v771 = vpop.permute.xlu0 %770
        %772 = vrot.lane.b32.xlu0 %v761, 18
        %v773 = vpop.permute.xlu0 %772
        %vm774 = vcmask 146432
        %v775 = vsel %vm774, %v767, %v769
        %v776 = vsel %vm774, %v769, %v771
        %v777 = vsel %vm774, %v771, %v773
        %781 = vst [vmem:[#allocation3 + $0x18] sm:$0xff] %v775
        %782 = vst [vmem:[#allocation3 + $0x20] sm:$0xff] %v776
        %783 = vst [vmem:[#allocation3 + $0x28] sm:$0xff] %v777
        %v784 = vld [vmem:[#allocation2] sm:$0xff]
        %v785 = vld [vmem:[#allocation2 + $0x8] sm:$0xff]
        %v786 = vld [vmem:[#allocation2 + $0x10] sm:$0xff]
        %v787 = vld [vmem:[#allocation2 + $0x18] sm:$0xff]
        %792 = vrot.lane.b32.xlu0 %v784, 17
        %v793 = vpop.permute.xlu0 %792
        %794 = vrot.lane.b32.xlu0 %v785, 17
        %v795 = vpop.permute.xlu0 %794
        %796 = vrot.lane.b32.xlu0 %v786, 17
        %v797 = vpop.permute.xlu0 %796
        %798 = vrot.lane.b32.xlu0 %v787, 17
        %v799 = vpop.permute.xlu0 %798
        %vm800 = vcmask 138240
        %v801 = vsel %vm800, %v793, %v795
        %v802 = vsel %vm800, %v795, %v797
        %v803 = vsel %vm800, %v797, %v799
        %807 = vst [vmem:[#allocation3 + $0x30] sm:$0xff] %v801
        %808 = vst [vmem:[#allocation3 + $0x38] sm:$0xff] %v802
        %809 = vst [vmem:[#allocation3 + $0x40] sm:$0xff] %v803
        %v810 = vld [vmem:[#allocation2] sm:$0xff]
        %v811 = vld [vmem:[#allocation2 + $0x8] sm:$0xff]
        %v812 = vld [vmem:[#allocation2 + $0x10] sm:$0xff]
        %v813 = vld [vmem:[#allocation2 + $0x18] sm:$0xff]
        %818 = vrot.lane.b32.xlu0 %v810, 1
        %v819 = vpop.permute.xlu0 %818
        %820 = vrot.lane.b32.xlu0 %v811, 1
        %v821 = vpop.permute.xlu0 %820
        %822 = vrot.lane.b32.xlu0 %v812, 1
        %v823 = vpop.permute.xlu0 %822
        %824 = vrot.lane.b32.xlu0 %v813, 1
        %v825 = vpop.permute.xlu0 %824
        %vm826 = vcmask 7168
        %v827 = vsel %vm826, %v819, %v821
        %v828 = vsel %vm826, %v821, %v823
        %v829 = vsel %vm826, %v823, %v825
        %833 = vst [vmem:[#allocation3 + $0x48] sm:$0xff] %v827
        %834 = vst [vmem:[#allocation3 + $0x50] sm:$0xff] %v828
        %835 = vst [vmem:[#allocation3 + $0x58] sm:$0xff] %v829
        %v836 = vld [vmem:[#allocation2 + $0x8] sm:$0xff]
        %v837 = vld [vmem:[#allocation2 + $0x10] sm:$0xff]
        %v838 = vld [vmem:[#allocation2 + $0x18] sm:$0xff]
        %839 = vst [vmem:[#allocation3 + $0x60] sm:$0xff] %v836
        %840 = vst [vmem:[#allocation3 + $0x68] sm:$0xff] %v837
        %841 = vst [vmem:[#allocation3 + $0x70] sm:$0xff] %v838
        %v842 = vld [vmem:[#allocation2 + $0x8] sm:$0xff]
        %v843 = vld [vmem:[#allocation2 + $0x10] sm:$0xff]
        %v844 = vld [vmem:[#allocation2 + $0x18] sm:$0xff]
        %v845 = vld [vmem:[#allocation2 + $0x20] sm:$0xff]
        %850 = vrot.lane.b32.xlu0 %v842, 127
        %v851 = vpop.permute.xlu0 %850
        %852 = vrot.lane.b32.xlu0 %v843, 127
        %v853 = vpop.permute.xlu0 %852
        %854 = vrot.lane.b32.xlu0 %v844, 127
        %v855 = vpop.permute.xlu0 %854
        %856 = vrot.lane.b32.xlu0 %v845, 127
        %v857 = vpop.permute.xlu0 %856
        %vm858 = vcmask 1039360
        %v859 = vsel %vm858, %v851, %v853
        %v860 = vsel %vm858, %v853, %v855
        %v861 = vsel %vm858, %v855, %v857
        %865 = vst [vmem:[#allocation3 + $0x78] sm:$0xff] %v859
        %866 = vst [vmem:[#allocation3 + $0x80] sm:$0xff] %v860
        %867 = vst [vmem:[#allocation3 + $0x88] sm:$0xff] %v861
        %v868 = vld [vmem:[#allocation2 + $0x8] sm:$0xff]
        %v869 = vld [vmem:[#allocation2 + $0x10] sm:$0xff]
        %v870 = vld [vmem:[#allocation2 + $0x18] sm:$0xff]
        %v871 = vld [vmem:[#allocation2 + $0x20] sm:$0xff]
        %876 = vrot.lane.b32.xlu0 %v868, 111
        %v877 = vpop.permute.xlu0 %876
        %878 = vrot.lane.b32.xlu0 %v869, 111
        %v879 = vpop.permute.xlu0 %878
        %880 = vrot.lane.b32.xlu0 %v870, 111
        %v881 = vpop.permute.xlu0 %880
        %882 = vrot.lane.b32.xlu0 %v871, 111
        %v883 = vpop.permute.xlu0 %882
        %vm884 = vcmask 908288
        %v885 = vsel %vm884, %v877, %v879
        %v886 = vsel %vm884, %v879, %v881
        %v887 = vsel %vm884, %v881, %v883
        %891 = vst [vmem:[#allocation3 + $0x90] sm:$0xff] %v885
        %892 = vst [vmem:[#allocation3 + $0x98] sm:$0xff] %v886
        %893 = vst [vmem:[#allocation3 + $0xa0] sm:$0xff] %v887
        %v894 = vld [vmem:[#allocation2 + $0x8] sm:$0xff]
        %v895 = vld [vmem:[#allocation2 + $0x10] sm:$0xff]
        %v896 = vld [vmem:[#allocation2 + $0x18] sm:$0xff]
        %v897 = vld [vmem:[#allocation2 + $0x20] sm:$0xff]
        %902 = vrot.lane.b32.xlu0 %v894, 110
        %v903 = vpop.permute.xlu0 %902
        %904 = vrot.lane.b32.xlu0 %v895, 110
        %v905 = vpop.permute.xlu0 %904
        %906 = vrot.lane.b32.xlu0 %v896, 110
        %v907 = vpop.permute.xlu0 %906
        %908 = vrot.lane.b32.xlu0 %v897, 110
        %v909 = vpop.permute.xlu0 %908
        %vm910 = vcmask 900096
        %v911 = vsel %vm910, %v903, %v905
        %v912 = vsel %vm910, %v905, %v907
        %v913 = vsel %vm910, %v907, %v909
        %917 = vst [vmem:[#allocation3 + $0xa8] sm:$0xff] %v911
        %918 = vst [vmem:[#allocation3 + $0xb0] sm:$0xff] %v912
        %919 = vst [vmem:[#allocation3 + $0xb8] sm:$0xff] %v913
        %v920 = vld [vmem:[#allocation2 + $0x8] sm:$0xff]
        %v921 = vld [vmem:[#allocation2 + $0x10] sm:$0xff]
        %v922 = vld [vmem:[#allocation2 + $0x18] sm:$0xff]
        %v923 = vld [vmem:[#allocation2 + $0x20] sm:$0xff]
        %928 = vrot.lane.b32.xlu0 %v920, 109
        %v929 = vpop.permute.xlu0 %928
        %930 = vrot.lane.b32.xlu0 %v921, 109
        %v931 = vpop.permute.xlu0 %930
        %932 = vrot.lane.b32.xlu0 %v922, 109
        %v933 = vpop.permute.xlu0 %932
        %934 = vrot.lane.b32.xlu0 %v923, 109
        %v935 = vpop.permute.xlu0 %934
        %vm936 = vcmask 891904
        %v937 = vsel %vm936, %v929, %v931
        %v938 = vsel %vm936, %v931, %v933
        %v939 = vsel %vm936, %v933, %v935
        %943 = vst [vmem:[#allocation3 + $0xc0] sm:$0xff] %v937
        %944 = vst [vmem:[#allocation3 + $0xc8] sm:$0xff] %v938
        %945 = vst [vmem:[#allocation3 + $0xd0] sm:$0xff] %v939
        %v946 = vld [vmem:[%s1] sm:$0xf]
        %v947 = vld [vmem:[#allocation3] sm:$0xff]
        %v948 = vld [vmem:[#allocation3 + $0x8] sm:$0xff]
        %v949 = vld [vmem:[#allocation3 + $0x10] sm:$0xff]
        %v950 = vld [vmem:[#allocation3 + $0x18] sm:$0xff]
        %v951 = vld [vmem:[#allocation3 + $0x20] sm:$0xff]
        %v952 = vld [vmem:[#allocation3 + $0x28] sm:$0xff]
        %v953 = vld [vmem:[#allocation3 + $0x30] sm:$0xff]
        %v954 = vld [vmem:[#allocation3 + $0x38] sm:$0xff]
        %v955 = vld [vmem:[#allocation3 + $0x40] sm:$0xff]
        %v956 = vld [vmem:[#allocation3 + $0x48] sm:$0xff]
        %v957 = vld [vmem:[#allocation3 + $0x50] sm:$0xff]
        %v958 = vld [vmem:[#allocation3 + $0x58] sm:$0xff]
        %v959 = vld [vmem:[#allocation3 + $0x60] sm:$0xff]
        %v960 = vld [vmem:[#allocation3 + $0x68] sm:$0xff]
        %v961 = vld [vmem:[#allocation3 + $0x70] sm:$0xff]
        %v962 = vld [vmem:[#allocation3 + $0x78] sm:$0xff]
        %v963 = vld [vmem:[#allocation3 + $0x80] sm:$0xff]
        %v964 = vld [vmem:[#allocation3 + $0x88] sm:$0xff]
        %v965 = vld [vmem:[#allocation3 + $0x90] sm:$0xff]
        %v966 = vld [vmem:[#allocation3 + $0x98] sm:$0xff]
        %v967 = vld [vmem:[#allocation3 + $0xa0] sm:$0xff]
        %v968 = vld [vmem:[#allocation3 + $0xa8] sm:$0xff]
        %v969 = vld [vmem:[#allocation3 + $0xb0] sm:$0xff]
        %v970 = vld [vmem:[#allocation3 + $0xb8] sm:$0xff]
        %v971 = vld [vmem:[#allocation3 + $0xc0] sm:$0xff]
        %v972 = vld [vmem:[#allocation3 + $0xc8] sm:$0xff]
        %v973 = vld [vmem:[#allocation3 + $0xd0] sm:$0xff]
        %v974 = vpack.c.bf16 %v950, %v947
        %v975 = vpack.c.bf16 %v951, %v948
        %v976 = vpack.c.bf16 %v952, %v949
        %v977 = vpack.c.bf16 %v956, %v953
        %v978 = vpack.c.bf16 %v957, %v954
        %v979 = vpack.c.bf16 %v958, %v955
        %v980 = vpack.c.bf16 %v962, %v959
        %v981 = vpack.c.bf16 %v963, %v960
        %v982 = vpack.c.bf16 %v964, %v961
        %v983 = vpack.c.bf16 %v968, %v965
        %v984 = vpack.c.bf16 %v969, %v966
        %v985 = vpack.c.bf16 %v970, %v967
        %v986 = vpack.c.bf16 %v971, %v971
        %v987 = vpack.c.bf16 %v972, %v972
        %v988 = vpack.c.bf16 %v973, %v973
        %v989 = vld [vmem:[%s2] sm:$0xff]
        %991 = vset.pattern.permute.xlu0 0
        %992 = vperm.xlu0 %991, %v989
        %v993 = vpop.permute.xlu0 %992
        %vm995 = vcmask 588800
        %v997 = vsel %vm995, %v946, 0
        %vm999 = vcmask 1043456
        %v1001 = vsel %vm999, %v986, 0
        %v1004 = vsel %vm999, %v987, 0
        %v1007 = vsel %vm999, %v988, 0
        %1009 = vmatprep.subr.bf16.mxu0 %v975
        %1010 = vmatpush1.bf16.msra.mxu0 %v974
        %1011 = vmatprep.subr.bf16.mxu0 %v978
        %1012 = vmatpush1.bf16.msra.mxu0 %v977
        %1013 = vmatprep.subr.bf16.mxu0 %v981
        %1014 = vmatpush1.bf16.msra.mxu0 %v980
        %1015 = vmatprep.subr.bf16.mxu0 %v984
        %1016 = vmatpush1.bf16.msra.mxu0 %v983
        %1017 = vmatprep.subr.bf16.mxu0 %v1004
        %1018 = vmatpush1.bf16.msra.mxu0 %v1001
        %1019 = vmatprep.subr.bf16.mxu0 0
        %1020 = vmatpush1.bf16.msra.mxu0 0
        %1021 = vmatprep.subr.bf16.mxu0 0
        %1022 = vmatpush1.bf16.msra.mxu0 0
        %1023 = vmatprep.subr.bf16.mxu0 0
        %1024 = vmatpush1.bf16.msra.mxu0 0
        %1025 = vmatprep.subr.bf16.mxu0 0
        %1026 = vmatpush1.bf16.msra.mxu0 0
        %1027 = vmatprep.subr.bf16.mxu0 0
        %1028 = vmatpush1.bf16.msra.mxu0 0
        %1029 = vmatprep.subr.bf16.mxu0 0
        %1030 = vmatpush1.bf16.msra.mxu0 0
        %1031 = vmatprep.subr.bf16.mxu0 0
        %1032 = vmatpush1.bf16.msra.mxu0 0
        %1033 = vmatprep.subr.bf16.mxu0 0
        %1034 = vmatpush1.bf16.msra.mxu0 0
        %1035 = vmatprep.subr.bf16.mxu0 0
        %1036 = vmatpush1.bf16.msra.mxu0 0
        %1037 = vmatprep.subr.bf16.mxu0 0
        %1038 = vmatpush1.bf16.msra.mxu0 0
        %1039 = vmatprep.subr.bf16.mxu0 0
        %1040 = vmatpush1.bf16.msra.mxu0 0
        %1041 = vmatprep.mubr.bf16.mxu0 0
        %1042 = vmatmul.mubr.bf16.gmra.mrb[0].mxu0 %v997
        %v1043 = vpop.f32.mrb[0].mxu0
        %v1044 = vadd.f32 %v993, %v1043
        %v1045 = vpop.f32.mrb[0].mxu0
        %v1046 = vadd.f32 %v993, %v1045
        %v1047 = vpop.f32.mrb[0].mxu0
        %v1048 = vpop.f32.mrb[0].mxu0
        %1049 = vdwg.mxu0
        %1050 = vmatprep.subr.bf16.mxu0 0
        %1051 = vmatpush1.bf16.msra.mxu0 %v976
        %1052 = vmatprep.subr.bf16.mxu0 0
        %1053 = vmatpush1.bf16.msra.mxu0 %v979
        %1054 = vmatprep.subr.bf16.mxu0 0
        %1055 = vmatpush1.bf16.msra.mxu0 %v982
        %1056 = vmatprep.subr.bf16.mxu0 0
        %1057 = vmatpush1.bf16.msra.mxu0 %v985
        %1058 = vmatprep.subr.bf16.mxu0 0
        %1059 = vmatpush1.bf16.msra.mxu0 %v1007
        %1060 = vmatprep.subr.bf16.mxu0 0
        %1061 = vmatpush1.bf16.msra.mxu0 0
        %1062 = vmatprep.subr.bf16.mxu0 0
        %1063 = vmatpush1.bf16.msra.mxu0 0
        %1064 = vmatprep.subr.bf16.mxu0 0
        %1065 = vmatpush1.bf16.msra.mxu0 0
        %1066 = vmatprep.subr.bf16.mxu0 0
        %1067 = vmatpush1.bf16.msra.mxu0 0
        %1068 = vmatprep.subr.bf16.mxu0 0
        %1069 = vmatpush1.bf16.msra.mxu0 0
        %1070 = vmatprep.subr.bf16.mxu0 0
        %1071 = vmatpush1.bf16.msra.mxu0 0
        %1072 = vmatprep.subr.bf16.mxu0 0
        %1073 = vmatpush1.bf16.msra.mxu0 0
        %1074 = vmatprep.subr.bf16.mxu0 0
        %1075 = vmatpush1.bf16.msra.mxu0 0
        %1076 = vmatprep.subr.bf16.mxu0 0
        %1077 = vmatpush1.bf16.msra.mxu0 0
        %1078 = vmatprep.subr.bf16.mxu0 0
        %1079 = vmatpush1.bf16.msra.mxu0 0
        %1080 = vmatprep.subr.bf16.mxu0 0
        %1081 = vmatpush1.bf16.msra.mxu0 0
        %1082 = vmatprep.mubr.bf16.mxu0 0
        %1083 = vmatmul.mubr.bf16.gmra.mrb[0].mxu0 %v997
        %v1084 = vpop.f32.mrb[0].mxu0
        %v1085 = vadd.f32 %v993, %v1084
        %v1086 = vpop.f32.mrb[0].mxu0
        %v1087 = vpop.f32.mrb[0].mxu0
        %v1088 = vpop.f32.mrb[0].mxu0
        %1089 = vdwg.mxu0
        %v1090 = vmax.f32 %v1044, 0.0
        %v1091 = vmax.f32 %v1046, 0.0
        %v1092 = vmax.f32 %v1085, 0.0
        %v1094 = vlaneseq
        %v1095 = vshrl.u32 %v1094, 7
        %v1096 = vsub.s32 0, %v1095
        %v1097 = vrot.slane %v489, %v1096
        %v1098 = vlaneseq
        %v1099 = vshrl.u32 %v1098, 7
        %v1100 = vsub.s32 1, %v1099
        %v1101 = vrot.slane %v489, %v1100
        %v1102 = vlaneseq
        %v1103 = vshrl.u32 %v1102, 7
        %v1104 = vsub.s32 2, %v1103
        %v1105 = vrot.slane %v489, %v1104
        %v1109 = vmul.f32 %v1090, %v1097
        %v1110 = vmul.f32 %v1091, %v1101
        %v1111 = vmul.f32 %v1092, %v1105
        %1112 = vst [vmem:[#allocation2 + $0x8] sm:$0xff] %v1109
        %1113 = vst [vmem:[#allocation2 + $0x10] sm:$0xff] %v1110
        %1114 = vst [vmem:[#allocation2 + $0x18] sm:$0xff] %v1111
        %v1115 = vld [vmem:[#allocation7] sm:$0xff]
        %v1116 = vld [vmem:[#allocation7 + $0x8] sm:$0xff]
        %v1117 = vld [vmem:[#allocation7 + $0x10] sm:$0xff]
        %v1118 = vld [vmem:[#allocation7 + $0x18] sm:$0xff]
        %v1119 = vld [vmem:[#allocation7 + $0x20] sm:$0xff]
        %v1120 = vld [vmem:[#allocation7 + $0x28] sm:$0xff]
        %v1121 = vld [vmem:[#allocation7 + $0x30] sm:$0xff]
        %v1122 = vld [vmem:[#allocation7 + $0x38] sm:$0xff]
        %v1123 = vld [vmem:[#allocation7 + $0x40] sm:$0xff]
        %v1124 = vld [vmem:[#allocation7 + $0x48] sm:$0xff]
        %v1125 = vld [vmem:[#allocation7 + $0x50] sm:$0xff]
        %v1126 = vld [vmem:[#allocation7 + $0x58] sm:$0xff]
        %v1127 = vld [vmem:[#allocation7 + $0x60] sm:$0xff]
        %v1128 = vld [vmem:[#allocation7 + $0x68] sm:$0xff]
        %v1129 = vld [vmem:[#allocation7 + $0x70] sm:$0xff]
        %v1130 = vld [vmem:[#allocation7 + $0x78] sm:$0xff]
        %v1131 = vld [vmem:[#allocation7 + $0x80] sm:$0xff]
        %v1132 = vld [vmem:[#allocation7 + $0x88] sm:$0xff]
        %v1133 = vld [vmem:[#allocation7 + $0x90] sm:$0xff]
        %v1134 = vld [vmem:[#allocation7 + $0x98] sm:$0xff]
        %v1135 = vld [vmem:[#allocation7 + $0xa0] sm:$0xff]
        %v1136 = vld [vmem:[#allocation7 + $0xa8] sm:$0xff]
        %v1137 = vld [vmem:[#allocation7 + $0xb0] sm:$0xff]
        %v1138 = vld [vmem:[#allocation7 + $0xb8] sm:$0xff]
        %v1139 = vld [vmem:[#allocation7 + $0xc0] sm:$0xff]
        %v1140 = vld [vmem:[#allocation7 + $0xc8] sm:$0xff]
        %v1141 = vld [vmem:[#allocation7 + $0xd0] sm:$0xff]
        %v1142 = vld [vmem:[#allocation7 + $0xd8] sm:$0xff]
        %v1143 = vld [vmem:[#allocation7 + $0xe0] sm:$0xff]
        %v1144 = vld [vmem:[#allocation7 + $0xe8] sm:$0xff]
        %v1145 = vld [vmem:[#allocation7 + $0xf0] sm:$0xff]
        %v1146 = vld [vmem:[#allocation7 + $0xf8] sm:$0xff]
        %v1147 = vld [vmem:[#allocation7 + $0x100] sm:$0xff]
        %v1148 = vld [vmem:[#allocation7 + $0x108] sm:$0xff]
        %v1149 = vld [vmem:[#allocation7 + $0x110] sm:$0xff]
        %v1150 = vld [vmem:[#allocation7 + $0x118] sm:$0xff]
        %v1151 = vld [vmem:[#allocation7 + $0x120] sm:$0xff]
        %v1152 = vld [vmem:[#allocation7 + $0x128] sm:$0xff]
        %v1153 = vld [vmem:[#allocation7 + $0x130] sm:$0xff]
        %v1154 = vld [vmem:[#allocation7 + $0x138] sm:$0xff]
        %v1155 = vld [vmem:[#allocation7 + $0x140] sm:$0xff]
        %v1156 = vld [vmem:[#allocation7 + $0x148] sm:$0xff]
        %v1157 = vld [vmem:[#allocation7 + $0x150] sm:$0xff]
        %v1158 = vld [vmem:[#allocation7 + $0x158] sm:$0xff]
        %v1159 = vld [vmem:[#allocation7 + $0x160] sm:$0xff]
        %v1160 = vld [vmem:[#allocation7 + $0x168] sm:$0xff]
        %v1161 = vld [vmem:[#allocation7 + $0x170] sm:$0xff]
        %v1162 = vld [vmem:[#allocation7 + $0x178] sm:$0xff]
        %v1163 = vld [vmem:[#allocation7 + $0x180] sm:$0xff]
        %v1164 = vld [vmem:[#allocation7 + $0x188] sm:$0xff]
        %v1165 = vld [vmem:[#allocation7 + $0x190] sm:$0xff]
        %v1166 = vld [vmem:[#allocation7 + $0x198] sm:$0xff]
        %v1167 = vld [vmem:[#allocation7 + $0x1a0] sm:$0xff]
        %v1168 = vld [vmem:[#allocation7 + $0x1a8] sm:$0xff]
        %v1169 = vld [vmem:[#allocation7 + $0x1b0] sm:$0xff]
        %v1170 = vld [vmem:[#allocation7 + $0x1b8] sm:$0xff]
        %v1171 = vld [vmem:[#allocation7 + $0x1c0] sm:$0xff]
        %v1172 = vld [vmem:[#allocation7 + $0x1c8] sm:$0xff]
        %v1173 = vld [vmem:[#allocation7 + $0x1d0] sm:$0xff]
        %v1174 = vld [vmem:[#allocation7 + $0x1d8] sm:$0xff]
        %v1175 = vld [vmem:[#allocation7 + $0x1e0] sm:$0xff]
        %v1176 = vld [vmem:[#allocation7 + $0x1e8] sm:$0xff]
        %v1177 = vld [vmem:[#allocation7 + $0x1f0] sm:$0xff]
        %v1178 = vld [vmem:[#allocation7 + $0x1f8] sm:$0xff]
        %v1179 = vld [vmem:[#allocation7 + $0x200] sm:$0xff]
        %v1180 = vld [vmem:[#allocation7 + $0x208] sm:$0xff]
        %v1181 = vld [vmem:[#allocation7 + $0x210] sm:$0xff]
        %v1182 = vld [vmem:[#allocation7 + $0x218] sm:$0xff]
        %v1183 = vld [vmem:[#allocation7 + $0x220] sm:$0xff]
        %v1184 = vld [vmem:[#allocation7 + $0x228] sm:$0xff]
        %v1185 = vld [vmem:[#allocation7 + $0x230] sm:$0xff]
        %v1186 = vld [vmem:[#allocation7 + $0x238] sm:$0xff]
        %v1187 = vld [vmem:[#allocation7 + $0x240] sm:$0xff]
        %v1188 = vld [vmem:[#allocation7 + $0x248] sm:$0xff]
        %v1189 = vld [vmem:[#allocation7 + $0x250] sm:$0xff]
        %v1190 = vld [vmem:[#allocation7 + $0x258] sm:$0xff]
        %v1191 = vld [vmem:[#allocation7 + $0x260] sm:$0xff]
        %v1192 = vld [vmem:[#allocation7 + $0x268] sm:$0xff]
        %v1193 = vld [vmem:[#allocation7 + $0x270] sm:$0xff]
        %v1194 = vld [vmem:[#allocation7 + $0x278] sm:$0xff]
        %v1195 = vld [vmem:[#allocation7 + $0x280] sm:$0xff]
        %v1196 = vld [vmem:[#allocation7 + $0x288] sm:$0xff]
        %v1197 = vld [vmem:[#allocation7 + $0x290] sm:$0xff]
        %v1198 = vld [vmem:[#allocation7 + $0x298] sm:$0xff]
        %v1199 = vld [vmem:[#allocation7 + $0x2a0] sm:$0xff]
        %v1200 = vld [vmem:[#allocation7 + $0x2a8] sm:$0xff]
        %v1201 = vld [vmem:[#allocation7 + $0x2b0] sm:$0xff]
        %v1202 = vld [vmem:[#allocation7 + $0x2b8] sm:$0xff]
        %v1203 = vld [vmem:[#allocation7 + $0x2c0] sm:$0xff]
        %v1204 = vld [vmem:[#allocation7 + $0x2c8] sm:$0xff]
        %v1205 = vld [vmem:[#allocation7 + $0x2d0] sm:$0xff]
        %v1206 = vld [vmem:[#allocation7 + $0x2d8] sm:$0xff]
        %v1207 = vld [vmem:[#allocation7 + $0x2e0] sm:$0xff]
        %v1208 = vld [vmem:[#allocation7 + $0x2e8] sm:$0xff]
        %v1209 = vld [vmem:[#allocation7 + $0x2f0] sm:$0xff]
        %v1210 = vld [vmem:[#allocation7 + $0x2f8] sm:$0xff]
        %1211 = vmatprep.subr.mxu0 %v1116
        %1212 = vmatpush1.msra.mxu0 %v1115
        %1213 = vmatprep.subr.mxu0 %v1118
        %1214 = vmatpush1.msra.mxu0 %v1117
        %1215 = vmatprep.subr.mxu0 %v1120
        %1216 = vmatpush1.msra.mxu0 %v1119
        %1217 = vmatprep.subr.mxu0 %v1122
        %1218 = vmatpush1.msra.mxu0 %v1121
        %1219 = vmatprep.subr.mxu0 %v1124
        %1220 = vmatpush1.msra.mxu0 %v1123
        %1221 = vmatprep.subr.mxu0 %v1126
        %1222 = vmatpush1.msra.mxu0 %v1125
        %1223 = vmatprep.subr.mxu0 %v1128
        %1224 = vmatpush1.msra.mxu0 %v1127
        %1225 = vmatprep.subr.mxu0 %v1130
        %1226 = vmatpush1.msra.mxu0 %v1129
        %1227 = vmatprep.subr.mxu0 %v1132
        %1228 = vmatpush1.msra.mxu0 %v1131
        %1229 = vmatprep.subr.mxu0 %v1134
        %1230 = vmatpush1.msra.mxu0 %v1133
        %1231 = vmatprep.subr.mxu0 %v1136
        %1232 = vmatpush1.msra.mxu0 %v1135
        %1233 = vmatprep.subr.mxu0 %v1138
        %1234 = vmatpush1.msra.mxu0 %v1137
        %1235 = vmatprep.subr.mxu0 %v1140
        %1236 = vmatpush1.msra.mxu0 %v1139
        %1237 = vmatprep.subr.mxu0 %v1142
        %1238 = vmatpush1.msra.mxu0 %v1141
        %1239 = vmatprep.subr.mxu0 %v1144
        %1240 = vmatpush1.msra.mxu0 %v1143
        %1241 = vmatprep.subr.mxu0 %v1146
        %1242 = vmatpush1.msra.mxu0 %v1145
        %1243 = vmatprep.subr.mxu0 %v1148
        %1244 = vmatpush1.msra.mxu0 %v1147
        %1245 = vmatprep.subr.mxu0 %v1150
        %1246 = vmatpush1.msra.mxu0 %v1149
        %1247 = vmatprep.subr.mxu0 %v1152
        %1248 = vmatpush1.msra.mxu0 %v1151
        %1249 = vmatprep.subr.mxu0 %v1154
        %1250 = vmatpush1.msra.mxu0 %v1153
        %1251 = vmatprep.subr.mxu0 %v1156
        %1252 = vmatpush1.msra.mxu0 %v1155
        %1253 = vmatprep.subr.mxu0 %v1158
        %1254 = vmatpush1.msra.mxu0 %v1157
        %1255 = vmatprep.subr.mxu0 %v1160
        %1256 = vmatpush1.msra.mxu0 %v1159
        %1257 = vmatprep.subr.mxu0 %v1162
        %1258 = vmatpush1.msra.mxu0 %v1161
        %1259 = vmatprep.subr.mxu0 %v1164
        %1260 = vmatpush1.msra.mxu0 %v1163
        %1261 = vmatprep.subr.mxu0 %v1166
        %1262 = vmatpush1.msra.mxu0 %v1165
        %1263 = vmatprep.subr.mxu0 %v1168
        %1264 = vmatpush1.msra.mxu0 %v1167
        %1265 = vmatprep.subr.mxu0 %v1170
        %1266 = vmatpush1.msra.mxu0 %v1169
        %1267 = vmatprep.subr.mxu0 %v1172
        %1268 = vmatpush1.msra.mxu0 %v1171
        %1269 = vmatprep.subr.mxu0 %v1174
        %1270 = vmatpush1.msra.mxu0 %v1173
        %1271 = vmatprep.subr.mxu0 %v1176
        %1272 = vmatpush1.msra.mxu0 %v1175
        %1273 = vmatprep.subr.mxu0 %v1178
        %1274 = vmatpush1.msra.mxu0 %v1177
        %1275 = vmatprep.mubr.f32.mxu0 %v1046
        %1276 = vmatmul.mubr.f32.gmra.mrb[0].mxu0 %v1044
        %v1277 = vpop.f32.mrb[0].mxu0
        %v1278 = vadd.f32 0.0, %v1277
        %v1279 = vpop.f32.mrb[0].mxu0
        %v1280 = vadd.f32 0.0, %v1279
        %1281 = vdwg.mxu0
        %1282 = vmatprep.subr.mxu0 %v1180
        %1283 = vmatpush1.msra.mxu0 %v1179
        %1284 = vmatprep.subr.mxu0 %v1182
        %1285 = vmatpush1.msra.mxu0 %v1181
        %1286 = vmatprep.subr.mxu0 %v1184
        %1287 = vmatpush1.msra.mxu0 %v1183
        %1288 = vmatprep.subr.mxu0 %v1186
        %1289 = vmatpush1.msra.mxu0 %v1185
        %1290 = vmatprep.subr.mxu0 %v1188
        %1291 = vmatpush1.msra.mxu0 %v1187
        %1292 = vmatprep.subr.mxu0 %v1190
        %1293 = vmatpush1.msra.mxu0 %v1189
        %1294 = vmatprep.subr.mxu0 %v1192
        %1295 = vmatpush1.msra.mxu0 %v1191
        %1296 = vmatprep.subr.mxu0 %v1194
        %1297 = vmatpush1.msra.mxu0 %v1193
        %1298 = vmatprep.subr.mxu0 %v1196
        %1299 = vmatpush1.msra.mxu0 %v1195
        %1300 = vmatprep.subr.mxu0 %v1198
        %1301 = vmatpush1.msra.mxu0 %v1197
        %1302 = vmatprep.subr.mxu0 %v1200
        %1303 = vmatpush1.msra.mxu0 %v1199
        %1304 = vmatprep.subr.mxu0 %v1202
        %1305 = vmatpush1.msra.mxu0 %v1201
        %1306 = vmatprep.subr.mxu0 %v1204
        %1307 = vmatpush1.msra.mxu0 %v1203
        %1308 = vmatprep.subr.mxu0 %v1206
        %1309 = vmatpush1.msra.mxu0 %v1205
        %1310 = vmatprep.subr.mxu0 %v1208
        %1311 = vmatpush1.msra.mxu0 %v1207
        %1312 = vmatprep.subr.mxu0 %v1210
        %1313 = vmatpush1.msra.mxu0 %v1209
        %1314 = vmatprep.subr.mxu0 0.0
        %1315 = vmatpush1.msra.mxu0 0.0
        %1316 = vmatprep.subr.mxu0 0.0
        %1317 = vmatpush1.msra.mxu0 0.0
        %1318 = vmatprep.subr.mxu0 0.0
        %1319 = vmatpush1.msra.mxu0 0.0
        %1320 = vmatprep.subr.mxu0 0.0
        %1321 = vmatpush1.msra.mxu0 0.0
        %1322 = vmatprep.subr.mxu0 0.0
        %1323 = vmatpush1.msra.mxu0 0.0
        %1324 = vmatprep.subr.mxu0 0.0
        %1325 = vmatpush1.msra.mxu0 0.0
        %1326 = vmatprep.subr.mxu0 0.0
        %1327 = vmatpush1.msra.mxu0 0.0
        %1328 = vmatprep.subr.mxu0 0.0
        %1329 = vmatpush1.msra.mxu0 0.0
        %1330 = vmatprep.subr.mxu0 0.0
        %1331 = vmatpush1.msra.mxu0 0.0
        %1332 = vmatprep.subr.mxu0 0.0
        %1333 = vmatpush1.msra.mxu0 0.0
        %1334 = vmatprep.subr.mxu0 0.0
        %1335 = vmatpush1.msra.mxu0 0.0
        %1336 = vmatprep.subr.mxu0 0.0
        %1337 = vmatpush1.msra.mxu0 0.0
        %1338 = vmatprep.subr.mxu0 0.0
        %1339 = vmatpush1.msra.mxu0 0.0
        %1340 = vmatprep.subr.mxu0 0.0
        %1341 = vmatpush1.msra.mxu0 0.0
        %1342 = vmatprep.subr.mxu0 0.0
        %1343 = vmatpush1.msra.mxu0 0.0
        %1344 = vmatprep.subr.mxu0 0.0
        %1345 = vmatpush1.msra.mxu0 0.0
        %1346 = vmatprep.mubr.f32.mxu0 0.0
        %1347 = vmatmul.mubr.f32.gmra.mrb[0].mxu0 %v1085
        %v1348 = vpop.f32.mrb[0].mxu0
        %v1349 = vadd.f32 %v1278, %v1348
        %v1350 = vpop.f32.mrb[0].mxu0
        %v1351 = vadd.f32 %v1280, %v1350
        %1352 = vdwg.mxu0
        %1353 = vst [vmem:[%s467] sm:$0xff] %v1349
        %1354 = vst [vmem:[%s467 + $0x8] sm:$0xff] %v1351
        %v1355 = vld [vmem:[#allocation2] sm:$0xff]
        %v1356 = vld [vmem:[#allocation2 + $0x8] sm:$0xff]
        %v1357 = vld [vmem:[#allocation2 + $0x10] sm:$0xff]
        %v1358 = vld [vmem:[#allocation2 + $0x18] sm:$0xff]
        %1363 = vrot.lane.b32.xlu0 %v1355, 19
        %v1364 = vpop.permute.xlu0 %1363
        %1365 = vrot.lane.b32.xlu0 %v1356, 19
        %v1366 = vpop.permute.xlu0 %1365
        %1367 = vrot.lane.b32.xlu0 %v1357, 19
        %v1368 = vpop.permute.xlu0 %1367
        %1369 = vrot.lane.b32.xlu0 %v1358, 19
        %v1370 = vpop.permute.xlu0 %1369
        %v1371 = vsel %vm748, %v1364, %v1366
        %v1372 = vsel %vm748, %v1366, %v1368
        %v1373 = vsel %vm748, %v1368, %v1370
        %1377 = vst [vmem:[#allocation3] sm:$0xff] %v1371
        %1378 = vst [vmem:[#allocation3 + $0x8] sm:$0xff] %v1372
        %1379 = vst [vmem:[#allocation3 + $0x10] sm:$0xff] %v1373
        %v1380 = vld [vmem:[#allocation2] sm:$0xff]
        %v1381 = vld [vmem:[#allocation2 + $0x8] sm:$0xff]
        %v1382 = vld [vmem:[#allocation2 + $0x10] sm:$0xff]
        %v1383 = vld [vmem:[#allocation2 + $0x18] sm:$0xff]
        %1388 = vrot.lane.b32.xlu0 %v1380, 18
        %v1389 = vpop.permute.xlu0 %1388
        %1390 = vrot.lane.b32.xlu0 %v1381, 18
        %v1391 = vpop.permute.xlu0 %1390
        %1392 = vrot.lane.b32.xlu0 %v1382, 18
        %v1393 = vpop.permute.xlu0 %1392
        %1394 = vrot.lane.b32.xlu0 %v1383, 18
        %v1395 = vpop.permute.xlu0 %1394
        %v1396 = vsel %vm774, %v1389, %v1391
        %v1397 = vsel %vm774, %v1391, %v1393
        %v1398 = vsel %vm774, %v1393, %v1395
        %1402 = vst [vmem:[#allocation3 + $0x18] sm:$0xff] %v1396
        %1403 = vst [vmem:[#allocation3 + $0x20] sm:$0xff] %v1397
        %1404 = vst [vmem:[#allocation3 + $0x28] sm:$0xff] %v1398
        %v1405 = vld [vmem:[#allocation2] sm:$0xff]
        %v1406 = vld [vmem:[#allocation2 + $0x8] sm:$0xff]
        %v1407 = vld [vmem:[#allocation2 + $0x10] sm:$0xff]
        %v1408 = vld [vmem:[#allocation2 + $0x18] sm:$0xff]
        %1413 = vrot.lane.b32.xlu0 %v1405, 17
        %v1414 = vpop.permute.xlu0 %1413
        %1415 = vrot.lane.b32.xlu0 %v1406, 17
        %v1416 = vpop.permute.xlu0 %1415
        %1417 = vrot.lane.b32.xlu0 %v1407, 17
        %v1418 = vpop.permute.xlu0 %1417
        %1419 = vrot.lane.b32.xlu0 %v1408, 17
        %v1420 = vpop.permute.xlu0 %1419
        %v1421 = vsel %vm800, %v1414, %v1416
        %v1422 = vsel %vm800, %v1416, %v1418
        %v1423 = vsel %vm800, %v1418, %v1420
        %1427 = vst [vmem:[#allocation3 + $0x30] sm:$0xff] %v1421
        %1428 = vst [vmem:[#allocation3 + $0x38] sm:$0xff] %v1422
        %1429 = vst [vmem:[#allocation3 + $0x40] sm:$0xff] %v1423
        %v1430 = vld [vmem:[#allocation2] sm:$0xff]
        %v1431 = vld [vmem:[#allocation2 + $0x8] sm:$0xff]
        %v1432 = vld [vmem:[#allocation2 + $0x10] sm:$0xff]
        %v1433 = vld [vmem:[#allocation2 + $0x18] sm:$0xff]
        %1438 = vrot.lane.b32.xlu0 %v1430, 1
        %v1439 = vpop.permute.xlu0 %1438
        %1440 = vrot.lane.b32.xlu0 %v1431, 1
        %v1441 = vpop.permute.xlu0 %1440
        %1442 = vrot.lane.b32.xlu0 %v1432, 1
        %v1443 = vpop.permute.xlu0 %1442
        %1444 = vrot.lane.b32.xlu0 %v1433, 1
        %v1445 = vpop.permute.xlu0 %1444
        %v1446 = vsel %vm826, %v1439, %v1441
        %v1447 = vsel %vm826, %v1441, %v1443
        %v1448 = vsel %vm826, %v1443, %v1445
        %1452 = vst [vmem:[#allocation3 + $0x48] sm:$0xff] %v1446
        %1453 = vst [vmem:[#allocation3 + $0x50] sm:$0xff] %v1447
        %1454 = vst [vmem:[#allocation3 + $0x58] sm:$0xff] %v1448
        %v1455 = vld [vmem:[#allocation2 + $0x8] sm:$0xff]
        %v1456 = vld [vmem:[#allocation2 + $0x10] sm:$0xff]
        %v1457 = vld [vmem:[#allocation2 + $0x18] sm:$0xff]
        %1458 = vst [vmem:[#allocation3 + $0x60] sm:$0xff] %v1455
        %1459 = vst [vmem:[#allocation3 + $0x68] sm:$0xff] %v1456
        %1460 = vst [vmem:[#allocation3 + $0x70] sm:$0xff] %v1457
        %v1461 = vld [vmem:[#allocation2 + $0x8] sm:$0xff]
        %v1462 = vld [vmem:[#allocation2 + $0x10] sm:$0xff]
        %v1463 = vld [vmem:[#allocation2 + $0x18] sm:$0xff]
        %v1464 = vld [vmem:[#allocation2 + $0x20] sm:$0xff]
        %1469 = vrot.lane.b32.xlu0 %v1461, 127
        %v1470 = vpop.permute.xlu0 %1469
        %1471 = vrot.lane.b32.xlu0 %v1462, 127
        %v1472 = vpop.permute.xlu0 %1471
        %1473 = vrot.lane.b32.xlu0 %v1463, 127
        %v1474 = vpop.permute.xlu0 %1473
        %1475 = vrot.lane.b32.xlu0 %v1464, 127
        %v1476 = vpop.permute.xlu0 %1475
        %v1477 = vsel %vm858, %v1470, %v1472
        %v1478 = vsel %vm858, %v1472, %v1474
        %v1479 = vsel %vm858, %v1474, %v1476
        %1483 = vst [vmem:[#allocation3 + $0x78] sm:$0xff] %v1477
        %1484 = vst [vmem:[#allocation3 + $0x80] sm:$0xff] %v1478
        %1485 = vst [vmem:[#allocation3 + $0x88] sm:$0xff] %v1479
        %v1486 = vld [vmem:[#allocation2 + $0x8] sm:$0xff]
        %v1487 = vld [vmem:[#allocation2 + $0x10] sm:$0xff]
        %v1488 = vld [vmem:[#allocation2 + $0x18] sm:$0xff]
        %v1489 = vld [vmem:[#allocation2 + $0x20] sm:$0xff]
        %1494 = vrot.lane.b32.xlu0 %v1486, 111
        %v1495 = vpop.permute.xlu0 %1494
        %1496 = vrot.lane.b32.xlu0 %v1487, 111
        %v1497 = vpop.permute.xlu0 %1496
        %1498 = vrot.lane.b32.xlu0 %v1488, 111
        %v1499 = vpop.permute.xlu0 %1498
        %1500 = vrot.lane.b32.xlu0 %v1489, 111
        %v1501 = vpop.permute.xlu0 %1500
        %v1502 = vsel %vm884, %v1495, %v1497
        %v1503 = vsel %vm884, %v1497, %v1499
        %v1504 = vsel %vm884, %v1499, %v1501
        %1508 = vst [vmem:[#allocation3 + $0x90] sm:$0xff] %v1502
        %1509 = vst [vmem:[#allocation3 + $0x98] sm:$0xff] %v1503
        %1510 = vst [vmem:[#allocation3 + $0xa0] sm:$0xff] %v1504
        %v1511 = vld [vmem:[#allocation2 + $0x8] sm:$0xff]
        %v1512 = vld [vmem:[#allocation2 + $0x10] sm:$0xff]
        %v1513 = vld [vmem:[#allocation2 + $0x18] sm:$0xff]
        %v1514 = vld [vmem:[#allocation2 + $0x20] sm:$0xff]
        %1519 = vrot.lane.b32.xlu0 %v1511, 110
        %v1520 = vpop.permute.xlu0 %1519
        %1521 = vrot.lane.b32.xlu0 %v1512, 110
        %v1522 = vpop.permute.xlu0 %1521
        %1523 = vrot.lane.b32.xlu0 %v1513, 110
        %v1524 = vpop.permute.xlu0 %1523
        %1525 = vrot.lane.b32.xlu0 %v1514, 110
        %v1526 = vpop.permute.xlu0 %1525
        %v1527 = vsel %vm910, %v1520, %v1522
        %v1528 = vsel %vm910, %v1522, %v1524
        %v1529 = vsel %vm910, %v1524, %v1526
        %1533 = vst [vmem:[#allocation3 + $0xa8] sm:$0xff] %v1527
        %1534 = vst [vmem:[#allocation3 + $0xb0] sm:$0xff] %v1528
        %1535 = vst [vmem:[#allocation3 + $0xb8] sm:$0xff] %v1529
        %v1536 = vld [vmem:[#allocation2 + $0x8] sm:$0xff]
        %v1537 = vld [vmem:[#allocation2 + $0x10] sm:$0xff]
        %v1538 = vld [vmem:[#allocation2 + $0x18] sm:$0xff]
        %v1539 = vld [vmem:[#allocation2 + $0x20] sm:$0xff]
        %1544 = vrot.lane.b32.xlu0 %v1536, 109
        %v1545 = vpop.permute.xlu0 %1544
        %1546 = vrot.lane.b32.xlu0 %v1537, 109
        %v1547 = vpop.permute.xlu0 %1546
        %1548 = vrot.lane.b32.xlu0 %v1538, 109
        %v1549 = vpop.permute.xlu0 %1548
        %1550 = vrot.lane.b32.xlu0 %v1539, 109
        %v1551 = vpop.permute.xlu0 %1550
        %v1552 = vsel %vm936, %v1545, %v1547
        %v1553 = vsel %vm936, %v1547, %v1549
        %v1554 = vsel %vm936, %v1549, %v1551
        %1558 = vst [vmem:[#allocation3 + $0xc0] sm:$0xff] %v1552
        %1559 = vst [vmem:[#allocation3 + $0xc8] sm:$0xff] %v1553
        %1560 = vst [vmem:[#allocation3 + $0xd0] sm:$0xff] %v1554
        %v1561 = vld [vmem:[%s3] sm:$0xf]
        %v1562 = vld [vmem:[#allocation3] sm:$0xff]
        %v1563 = vld [vmem:[#allocation3 + $0x8] sm:$0xff]
        %v1564 = vld [vmem:[#allocation3 + $0x10] sm:$0xff]
        %v1565 = vld [vmem:[#allocation3 + $0x18] sm:$0xff]
        %v1566 = vld [vmem:[#allocation3 + $0x20] sm:$0xff]
        %v1567 = vld [vmem:[#allocation3 + $0x28] sm:$0xff]
        %v1568 = vld [vmem:[#allocation3 + $0x30] sm:$0xff]
        %v1569 = vld [vmem:[#allocation3 + $0x38] sm:$0xff]
        %v1570 = vld [vmem:[#allocation3 + $0x40] sm:$0xff]
        %v1571 = vld [vmem:[#allocation3 + $0x48] sm:$0xff]
        %v1572 = vld [vmem:[#allocation3 + $0x50] sm:$0xff]
        %v1573 = vld [vmem:[#allocation3 + $0x58] sm:$0xff]
        %v1574 = vld [vmem:[#allocation3 + $0x60] sm:$0xff]
        %v1575 = vld [vmem:[#allocation3 + $0x68] sm:$0xff]
        %v1576 = vld [vmem:[#allocation3 + $0x70] sm:$0xff]
        %v1577 = vld [vmem:[#allocation3 + $0x78] sm:$0xff]
        %v1578 = vld [vmem:[#allocation3 + $0x80] sm:$0xff]
        %v1579 = vld [vmem:[#allocation3 + $0x88] sm:$0xff]
        %v1580 = vld [vmem:[#allocation3 + $0x90] sm:$0xff]
        %v1581 = vld [vmem:[#allocation3 + $0x98] sm:$0xff]
        %v1582 = vld [vmem:[#allocation3 + $0xa0] sm:$0xff]
        %v1583 = vld [vmem:[#allocation3 + $0xa8] sm:$0xff]
        %v1584 = vld [vmem:[#allocation3 + $0xb0] sm:$0xff]
        %v1585 = vld [vmem:[#allocation3 + $0xb8] sm:$0xff]
        %v1586 = vld [vmem:[#allocation3 + $0xc0] sm:$0xff]
        %v1587 = vld [vmem:[#allocation3 + $0xc8] sm:$0xff]
        %v1588 = vld [vmem:[#allocation3 + $0xd0] sm:$0xff]
        %v1589 = vpack.c.bf16 %v1565, %v1562
        %v1590 = vpack.c.bf16 %v1566, %v1563
        %v1591 = vpack.c.bf16 %v1567, %v1564
        %v1592 = vpack.c.bf16 %v1571, %v1568
        %v1593 = vpack.c.bf16 %v1572, %v1569
        %v1594 = vpack.c.bf16 %v1573, %v1570
        %v1595 = vpack.c.bf16 %v1577, %v1574
        %v1596 = vpack.c.bf16 %v1578, %v1575
        %v1597 = vpack.c.bf16 %v1579, %v1576
        %v1598 = vpack.c.bf16 %v1583, %v1580
        %v1599 = vpack.c.bf16 %v1584, %v1581
        %v1600 = vpack.c.bf16 %v1585, %v1582
        %v1601 = vpack.c.bf16 %v1586, %v1586
        %v1602 = vpack.c.bf16 %v1587, %v1587
        %v1603 = vpack.c.bf16 %v1588, %v1588
        %v1604 = vld [vmem:[%s4] sm:$0xff]
        %1606 = vset.pattern.permute.xlu0 0
        %1607 = vperm.xlu0 %1606, %v1604
        %v1608 = vpop.permute.xlu0 %1607
        %v1611 = vsel %vm995, %v1561, 0
        %v1614 = vsel %vm999, %v1601, 0
        %v1617 = vsel %vm999, %v1602, 0
        %v1620 = vsel %vm999, %v1603, 0
        %1622 = vmatprep.subr.bf16.mxu0 %v1590
        %1623 = vmatpush1.bf16.msra.mxu0 %v1589
        %1624 = vmatprep.subr.bf16.mxu0 %v1593
        %1625 = vmatpush1.bf16.msra.mxu0 %v1592
        %1626 = vmatprep.subr.bf16.mxu0 %v1596
        %1627 = vmatpush1.bf16.msra.mxu0 %v1595
        %1628 = vmatprep.subr.bf16.mxu0 %v1599
        %1629 = vmatpush1.bf16.msra.mxu0 %v1598
        %1630 = vmatprep.subr.bf16.mxu0 %v1617
        %1631 = vmatpush1.bf16.msra.mxu0 %v1614
        %1632 = vmatprep.subr.bf16.mxu0 0
        %1633 = vmatpush1.bf16.msra.mxu0 0
        %1634 = vmatprep.subr.bf16.mxu0 0
        %1635 = vmatpush1.bf16.msra.mxu0 0
        %1636 = vmatprep.subr.bf16.mxu0 0
        %1637 = vmatpush1.bf16.msra.mxu0 0
        %1638 = vmatprep.subr.bf16.mxu0 0
        %1639 = vmatpush1.bf16.msra.mxu0 0
        %1640 = vmatprep.subr.bf16.mxu0 0
        %1641 = vmatpush1.bf16.msra.mxu0 0
        %1642 = vmatprep.subr.bf16.mxu0 0
        %1643 = vmatpush1.bf16.msra.mxu0 0
        %1644 = vmatprep.subr.bf16.mxu0 0
        %1645 = vmatpush1.bf16.msra.mxu0 0
        %1646 = vmatprep.subr.bf16.mxu0 0
        %1647 = vmatpush1.bf16.msra.mxu0 0
        %1648 = vmatprep.subr.bf16.mxu0 0
        %1649 = vmatpush1.bf16.msra.mxu0 0
        %1650 = vmatprep.subr.bf16.mxu0 0
        %1651 = vmatpush1.bf16.msra.mxu0 0
        %1652 = vmatprep.subr.bf16.mxu0 0
        %1653 = vmatpush1.bf16.msra.mxu0 0
        %1654 = vmatprep.mubr.bf16.mxu0 0
        %1655 = vmatmul.mubr.bf16.gmra.mrb[0].mxu0 %v1611
        %v1656 = vpop.f32.mrb[0].mxu0
        %v1657 = vadd.f32 %v1608, %v1656
        %v1658 = vpop.f32.mrb[0].mxu0
        %v1659 = vadd.f32 %v1608, %v1658
        %v1660 = vpop.f32.mrb[0].mxu0
        %v1661 = vpop.f32.mrb[0].mxu0
        %1662 = vdwg.mxu0
        %1663 = vmatprep.subr.bf16.mxu0 0
        %1664 = vmatpush1.bf16.msra.mxu0 %v1591
        %1665 = vmatprep.subr.bf16.mxu0 0
        %1666 = vmatpush1.bf16.msra.mxu0 %v1594
        %1667 = vmatprep.subr.bf16.mxu0 0
        %1668 = vmatpush1.bf16.msra.mxu0 %v1597
        %1669 = vmatprep.subr.bf16.mxu0 0
        %1670 = vmatpush1.bf16.msra.mxu0 %v1600
        %1671 = vmatprep.subr.bf16.mxu0 0
        %1672 = vmatpush1.bf16.msra.mxu0 %v1620
        %1673 = vmatprep.subr.bf16.mxu0 0
        %1674 = vmatpush1.bf16.msra.mxu0 0
        %1675 = vmatprep.subr.bf16.mxu0 0
        %1676 = vmatpush1.bf16.msra.mxu0 0
        %1677 = vmatprep.subr.bf16.mxu0 0
        %1678 = vmatpush1.bf16.msra.mxu0 0
        %1679 = vmatprep.subr.bf16.mxu0 0
        %1680 = vmatpush1.bf16.msra.mxu0 0
        %1681 = vmatprep.subr.bf16.mxu0 0
        %1682 = vmatpush1.bf16.msra.mxu0 0
        %1683 = vmatprep.subr.bf16.mxu0 0
        %1684 = vmatpush1.bf16.msra.mxu0 0
        %1685 = vmatprep.subr.bf16.mxu0 0
        %1686 = vmatpush1.bf16.msra.mxu0 0
        %1687 = vmatprep.subr.bf16.mxu0 0
        %1688 = vmatpush1.bf16.msra.mxu0 0
        %1689 = vmatprep.subr.bf16.mxu0 0
        %1690 = vmatpush1.bf16.msra.mxu0 0
        %1691 = vmatprep.subr.bf16.mxu0 0
        %1692 = vmatpush1.bf16.msra.mxu0 0
        %1693 = vmatprep.subr.bf16.mxu0 0
        %1694 = vmatpush1.bf16.msra.mxu0 0
        %1695 = vmatprep.mubr.bf16.mxu0 0
        %1696 = vmatmul.mubr.bf16.gmra.mrb[0].mxu0 %v1611
        %v1697 = vpop.f32.mrb[0].mxu0
        %v1698 = vadd.f32 %v1608, %v1697
        %v1699 = vpop.f32.mrb[0].mxu0
        %v1700 = vpop.f32.mrb[0].mxu0
        %v1701 = vpop.f32.mrb[0].mxu0
        %1702 = vdwg.mxu0
        %v1703 = vmax.f32 %v1657, 0.0
        %v1704 = vmax.f32 %v1659, 0.0
        %v1705 = vmax.f32 %v1698, 0.0
        %v1706 = vmul.f32 %v1703, %v1097
        %v1707 = vmul.f32 %v1704, %v1101
        %v1708 = vmul.f32 %v1705, %v1105
        %1709 = vst [vmem:[#allocation2 + $0x8] sm:$0xff] %v1706
        %1710 = vst [vmem:[#allocation2 + $0x10] sm:$0xff] %v1707
        %1711 = vst [vmem:[#allocation2 + $0x18] sm:$0xff] %v1708
        %v1712 = vld [vmem:[#allocation7] sm:$0xff]
        %v1713 = vld [vmem:[#allocation7 + $0x8] sm:$0xff]
        %v1714 = vld [vmem:[#allocation7 + $0x10] sm:$0xff]
        %v1715 = vld [vmem:[#allocation7 + $0x18] sm:$0xff]
        %v1716 = vld [vmem:[#allocation7 + $0x20] sm:$0xff]
        %v1717 = vld [vmem:[#allocation7 + $0x28] sm:$0xff]
        %v1718 = vld [vmem:[#allocation7 + $0x30] sm:$0xff]
        %v1719 = vld [vmem:[#allocation7 + $0x38] sm:$0xff]
        %v1720 = vld [vmem:[#allocation7 + $0x40] sm:$0xff]
        %v1721 = vld [vmem:[#allocation7 + $0x48] sm:$0xff]
        %v1722 = vld [vmem:[#allocation7 + $0x50] sm:$0xff]
        %v1723 = vld [vmem:[#allocation7 + $0x58] sm:$0xff]
        %v1724 = vld [vmem:[#allocation7 + $0x60] sm:$0xff]
        %v1725 = vld [vmem:[#allocation7 + $0x68] sm:$0xff]
        %v1726 = vld [vmem:[#allocation7 + $0x70] sm:$0xff]
        %v1727 = vld [vmem:[#allocation7 + $0x78] sm:$0xff]
        %v1728 = vld [vmem:[#allocation7 + $0x80] sm:$0xff]
        %v1729 = vld [vmem:[#allocation7 + $0x88] sm:$0xff]
        %v1730 = vld [vmem:[#allocation7 + $0x90] sm:$0xff]
        %v1731 = vld [vmem:[#allocation7 + $0x98] sm:$0xff]
        %v1732 = vld [vmem:[#allocation7 + $0xa0] sm:$0xff]
        %v1733 = vld [vmem:[#allocation7 + $0xa8] sm:$0xff]
        %v1734 = vld [vmem:[#allocation7 + $0xb0] sm:$0xff]
        %v1735 = vld [vmem:[#allocation7 + $0xb8] sm:$0xff]
        %v1736 = vld [vmem:[#allocation7 + $0xc0] sm:$0xff]
        %v1737 = vld [vmem:[#allocation7 + $0xc8] sm:$0xff]
        %v1738 = vld [vmem:[#allocation7 + $0xd0] sm:$0xff]
        %v1739 = vld [vmem:[#allocation7 + $0xd8] sm:$0xff]
        %v1740 = vld [vmem:[#allocation7 + $0xe0] sm:$0xff]
        %v1741 = vld [vmem:[#allocation7 + $0xe8] sm:$0xff]
        %v1742 = vld [vmem:[#allocation7 + $0xf0] sm:$0xff]
        %v1743 = vld [vmem:[#allocation7 + $0xf8] sm:$0xff]
        %v1744 = vld [vmem:[#allocation7 + $0x100] sm:$0xff]
        %v1745 = vld [vmem:[#allocation7 + $0x108] sm:$0xff]
        %v1746 = vld [vmem:[#allocation7 + $0x110] sm:$0xff]
        %v1747 = vld [vmem:[#allocation7 + $0x118] sm:$0xff]
        %v1748 = vld [vmem:[#allocation7 + $0x120] sm:$0xff]
        %v1749 = vld [vmem:[#allocation7 + $0x128] sm:$0xff]
        %v1750 = vld [vmem:[#allocation7 + $0x130] sm:$0xff]
        %v1751 = vld [vmem:[#allocation7 + $0x138] sm:$0xff]
        %v1752 = vld [vmem:[#allocation7 + $0x140] sm:$0xff]
        %v1753 = vld [vmem:[#allocation7 + $0x148] sm:$0xff]
        %v1754 = vld [vmem:[#allocation7 + $0x150] sm:$0xff]
        %v1755 = vld [vmem:[#allocation7 + $0x158] sm:$0xff]
        %v1756 = vld [vmem:[#allocation7 + $0x160] sm:$0xff]
        %v1757 = vld [vmem:[#allocation7 + $0x168] sm:$0xff]
        %v1758 = vld [vmem:[#allocation7 + $0x170] sm:$0xff]
        %v1759 = vld [vmem:[#allocation7 + $0x178] sm:$0xff]
        %v1760 = vld [vmem:[#allocation7 + $0x180] sm:$0xff]
        %v1761 = vld [vmem:[#allocation7 + $0x188] sm:$0xff]
        %v1762 = vld [vmem:[#allocation7 + $0x190] sm:$0xff]
        %v1763 = vld [vmem:[#allocation7 + $0x198] sm:$0xff]
        %v1764 = vld [vmem:[#allocation7 + $0x1a0] sm:$0xff]
        %v1765 = vld [vmem:[#allocation7 + $0x1a8] sm:$0xff]
        %v1766 = vld [vmem:[#allocation7 + $0x1b0] sm:$0xff]
        %v1767 = vld [vmem:[#allocation7 + $0x1b8] sm:$0xff]
        %v1768 = vld [vmem:[#allocation7 + $0x1c0] sm:$0xff]
        %v1769 = vld [vmem:[#allocation7 + $0x1c8] sm:$0xff]
        %v1770 = vld [vmem:[#allocation7 + $0x1d0] sm:$0xff]
        %v1771 = vld [vmem:[#allocation7 + $0x1d8] sm:$0xff]
        %v1772 = vld [vmem:[#allocation7 + $0x1e0] sm:$0xff]
        %v1773 = vld [vmem:[#allocation7 + $0x1e8] sm:$0xff]
        %v1774 = vld [vmem:[#allocation7 + $0x1f0] sm:$0xff]
        %v1775 = vld [vmem:[#allocation7 + $0x1f8] sm:$0xff]
        %v1776 = vld [vmem:[#allocation7 + $0x200] sm:$0xff]
        %v1777 = vld [vmem:[#allocation7 + $0x208] sm:$0xff]
        %v1778 = vld [vmem:[#allocation7 + $0x210] sm:$0xff]
        %v1779 = vld [vmem:[#allocation7 + $0x218] sm:$0xff]
        %v1780 = vld [vmem:[#allocation7 + $0x220] sm:$0xff]
        %v1781 = vld [vmem:[#allocation7 + $0x228] sm:$0xff]
        %v1782 = vld [vmem:[#allocation7 + $0x230] sm:$0xff]
        %v1783 = vld [vmem:[#allocation7 + $0x238] sm:$0xff]
        %v1784 = vld [vmem:[#allocation7 + $0x240] sm:$0xff]
        %v1785 = vld [vmem:[#allocation7 + $0x248] sm:$0xff]
        %v1786 = vld [vmem:[#allocation7 + $0x250] sm:$0xff]
        %v1787 = vld [vmem:[#allocation7 + $0x258] sm:$0xff]
        %v1788 = vld [vmem:[#allocation7 + $0x260] sm:$0xff]
        %v1789 = vld [vmem:[#allocation7 + $0x268] sm:$0xff]
        %v1790 = vld [vmem:[#allocation7 + $0x270] sm:$0xff]
        %v1791 = vld [vmem:[#allocation7 + $0x278] sm:$0xff]
        %v1792 = vld [vmem:[#allocation7 + $0x280] sm:$0xff]
        %v1793 = vld [vmem:[#allocation7 + $0x288] sm:$0xff]
        %v1794 = vld [vmem:[#allocation7 + $0x290] sm:$0xff]
        %v1795 = vld [vmem:[#allocation7 + $0x298] sm:$0xff]
        %v1796 = vld [vmem:[#allocation7 + $0x2a0] sm:$0xff]
        %v1797 = vld [vmem:[#allocation7 + $0x2a8] sm:$0xff]
        %v1798 = vld [vmem:[#allocation7 + $0x2b0] sm:$0xff]
        %v1799 = vld [vmem:[#allocation7 + $0x2b8] sm:$0xff]
        %v1800 = vld [vmem:[#allocation7 + $0x2c0] sm:$0xff]
        %v1801 = vld [vmem:[#allocation7 + $0x2c8] sm:$0xff]
        %v1802 = vld [vmem:[#allocation7 + $0x2d0] sm:$0xff]
        %v1803 = vld [vmem:[#allocation7 + $0x2d8] sm:$0xff]
        %v1804 = vld [vmem:[#allocation7 + $0x2e0] sm:$0xff]
        %v1805 = vld [vmem:[#allocation7 + $0x2e8] sm:$0xff]
        %v1806 = vld [vmem:[#allocation7 + $0x2f0] sm:$0xff]
        %v1807 = vld [vmem:[#allocation7 + $0x2f8] sm:$0xff]
        %1808 = vmatprep.subr.mxu0 %v1713
        %1809 = vmatpush1.msra.mxu0 %v1712
        %1810 = vmatprep.subr.mxu0 %v1715
        %1811 = vmatpush1.msra.mxu0 %v1714
        %1812 = vmatprep.subr.mxu0 %v1717
        %1813 = vmatpush1.msra.mxu0 %v1716
        %1814 = vmatprep.subr.mxu0 %v1719
        %1815 = vmatpush1.msra.mxu0 %v1718
        %1816 = vmatprep.subr.mxu0 %v1721
        %1817 = vmatpush1.msra.mxu0 %v1720
        %1818 = vmatprep.subr.mxu0 %v1723
        %1819 = vmatpush1.msra.mxu0 %v1722
        %1820 = vmatprep.subr.mxu0 %v1725
        %1821 = vmatpush1.msra.mxu0 %v1724
        %1822 = vmatprep.subr.mxu0 %v1727
        %1823 = vmatpush1.msra.mxu0 %v1726
        %1824 = vmatprep.subr.mxu0 %v1729
        %1825 = vmatpush1.msra.mxu0 %v1728
        %1826 = vmatprep.subr.mxu0 %v1731
        %1827 = vmatpush1.msra.mxu0 %v1730
        %1828 = vmatprep.subr.mxu0 %v1733
        %1829 = vmatpush1.msra.mxu0 %v1732
        %1830 = vmatprep.subr.mxu0 %v1735
        %1831 = vmatpush1.msra.mxu0 %v1734
        %1832 = vmatprep.subr.mxu0 %v1737
        %1833 = vmatpush1.msra.mxu0 %v1736
        %1834 = vmatprep.subr.mxu0 %v1739
        %1835 = vmatpush1.msra.mxu0 %v1738
        %1836 = vmatprep.subr.mxu0 %v1741
        %1837 = vmatpush1.msra.mxu0 %v1740
        %1838 = vmatprep.subr.mxu0 %v1743
        %1839 = vmatpush1.msra.mxu0 %v1742
        %1840 = vmatprep.subr.mxu0 %v1745
        %1841 = vmatpush1.msra.mxu0 %v1744
        %1842 = vmatprep.subr.mxu0 %v1747
        %1843 = vmatpush1.msra.mxu0 %v1746
        %1844 = vmatprep.subr.mxu0 %v1749
        %1845 = vmatpush1.msra.mxu0 %v1748
        %1846 = vmatprep.subr.mxu0 %v1751
        %1847 = vmatpush1.msra.mxu0 %v1750
        %1848 = vmatprep.subr.mxu0 %v1753
        %1849 = vmatpush1.msra.mxu0 %v1752
        %1850 = vmatprep.subr.mxu0 %v1755
        %1851 = vmatpush1.msra.mxu0 %v1754
        %1852 = vmatprep.subr.mxu0 %v1757
        %1853 = vmatpush1.msra.mxu0 %v1756
        %1854 = vmatprep.subr.mxu0 %v1759
        %1855 = vmatpush1.msra.mxu0 %v1758
        %1856 = vmatprep.subr.mxu0 %v1761
        %1857 = vmatpush1.msra.mxu0 %v1760
        %1858 = vmatprep.subr.mxu0 %v1763
        %1859 = vmatpush1.msra.mxu0 %v1762
        %1860 = vmatprep.subr.mxu0 %v1765
        %1861 = vmatpush1.msra.mxu0 %v1764
        %1862 = vmatprep.subr.mxu0 %v1767
        %1863 = vmatpush1.msra.mxu0 %v1766
        %1864 = vmatprep.subr.mxu0 %v1769
        %1865 = vmatpush1.msra.mxu0 %v1768
        %1866 = vmatprep.subr.mxu0 %v1771
        %1867 = vmatpush1.msra.mxu0 %v1770
        %1868 = vmatprep.subr.mxu0 %v1773
        %1869 = vmatpush1.msra.mxu0 %v1772
        %1870 = vmatprep.subr.mxu0 %v1775
        %1871 = vmatpush1.msra.mxu0 %v1774
        %1872 = vmatprep.mubr.f32.mxu0 %v1659
        %1873 = vmatmul.mubr.f32.gmra.mrb[0].mxu0 %v1657
        %v1874 = vpop.f32.mrb[0].mxu0
        %v1875 = vadd.f32 0.0, %v1874
        %v1876 = vpop.f32.mrb[0].mxu0
        %v1877 = vadd.f32 0.0, %v1876
        %1878 = vdwg.mxu0
        %1879 = vmatprep.subr.mxu0 %v1777
        %1880 = vmatpush1.msra.mxu0 %v1776
        %1881 = vmatprep.subr.mxu0 %v1779
        %1882 = vmatpush1.msra.mxu0 %v1778
        %1883 = vmatprep.subr.mxu0 %v1781
        %1884 = vmatpush1.msra.mxu0 %v1780
        %1885 = vmatprep.subr.mxu0 %v1783
        %1886 = vmatpush1.msra.mxu0 %v1782
        %1887 = vmatprep.subr.mxu0 %v1785
        %1888 = vmatpush1.msra.mxu0 %v1784
        %1889 = vmatprep.subr.mxu0 %v1787
        %1890 = vmatpush1.msra.mxu0 %v1786
        %1891 = vmatprep.subr.mxu0 %v1789
        %1892 = vmatpush1.msra.mxu0 %v1788
        %1893 = vmatprep.subr.mxu0 %v1791
        %1894 = vmatpush1.msra.mxu0 %v1790
        %1895 = vmatprep.subr.mxu0 %v1793
        %1896 = vmatpush1.msra.mxu0 %v1792
        %1897 = vmatprep.subr.mxu0 %v1795
        %1898 = vmatpush1.msra.mxu0 %v1794
        %1899 = vmatprep.subr.mxu0 %v1797
        %1900 = vmatpush1.msra.mxu0 %v1796
        %1901 = vmatprep.subr.mxu0 %v1799
        %1902 = vmatpush1.msra.mxu0 %v1798
        %1903 = vmatprep.subr.mxu0 %v1801
        %1904 = vmatpush1.msra.mxu0 %v1800
        %1905 = vmatprep.subr.mxu0 %v1803
        %1906 = vmatpush1.msra.mxu0 %v1802
        %1907 = vmatprep.subr.mxu0 %v1805
        %1908 = vmatpush1.msra.mxu0 %v1804
        %1909 = vmatprep.subr.mxu0 %v1807
        %1910 = vmatpush1.msra.mxu0 %v1806
        %1911 = vmatprep.subr.mxu0 0.0
        %1912 = vmatpush1.msra.mxu0 0.0
        %1913 = vmatprep.subr.mxu0 0.0
        %1914 = vmatpush1.msra.mxu0 0.0
        %1915 = vmatprep.subr.mxu0 0.0
        %1916 = vmatpush1.msra.mxu0 0.0
        %1917 = vmatprep.subr.mxu0 0.0
        %1918 = vmatpush1.msra.mxu0 0.0
        %1919 = vmatprep.subr.mxu0 0.0
        %1920 = vmatpush1.msra.mxu0 0.0
        %1921 = vmatprep.subr.mxu0 0.0
        %1922 = vmatpush1.msra.mxu0 0.0
        %1923 = vmatprep.subr.mxu0 0.0
        %1924 = vmatpush1.msra.mxu0 0.0
        %1925 = vmatprep.subr.mxu0 0.0
        %1926 = vmatpush1.msra.mxu0 0.0
        %1927 = vmatprep.subr.mxu0 0.0
        %1928 = vmatpush1.msra.mxu0 0.0
        %1929 = vmatprep.subr.mxu0 0.0
        %1930 = vmatpush1.msra.mxu0 0.0
        %1931 = vmatprep.subr.mxu0 0.0
        %1932 = vmatpush1.msra.mxu0 0.0
        %1933 = vmatprep.subr.mxu0 0.0
        %1934 = vmatpush1.msra.mxu0 0.0
        %1935 = vmatprep.subr.mxu0 0.0
        %1936 = vmatpush1.msra.mxu0 0.0
        %1937 = vmatprep.subr.mxu0 0.0
        %1938 = vmatpush1.msra.mxu0 0.0
        %1939 = vmatprep.subr.mxu0 0.0
        %1940 = vmatpush1.msra.mxu0 0.0
        %1941 = vmatprep.subr.mxu0 0.0
        %1942 = vmatpush1.msra.mxu0 0.0
        %1943 = vmatprep.mubr.f32.mxu0 0.0
        %1944 = vmatmul.mubr.f32.gmra.mrb[0].mxu0 %v1698
        %v1945 = vpop.f32.mrb[0].mxu0
        %v1946 = vadd.f32 %v1875, %v1945
        %v1947 = vpop.f32.mrb[0].mxu0
        %v1948 = vadd.f32 %v1877, %v1947
        %1949 = vdwg.mxu0
        %1950 = vst [vmem:[%s474] sm:$0xff] %v1946
        %1951 = vst [vmem:[%s474 + $0x8] sm:$0xff] %v1948
        %v1952 = vld [vmem:[#allocation2 + $0x8] sm:$0xff]
        %v1953 = vld [vmem:[#allocation2 + $0x10] sm:$0xff]
        %v1954 = vld [vmem:[#allocation2 + $0x18] sm:$0xff]
        %v1955 = vld [vmem:[#allocation2 + $0x20] sm:$0xff]
        %1960 = vrot.lane.b32.xlu0 %v1952, 127
        %v1961 = vpop.permute.xlu0 %1960
        %1962 = vrot.lane.b32.xlu0 %v1953, 127
        %v1963 = vpop.permute.xlu0 %1962
        %1964 = vrot.lane.b32.xlu0 %v1954, 127
        %v1965 = vpop.permute.xlu0 %1964
        %1966 = vrot.lane.b32.xlu0 %v1955, 127
        %v1967 = vpop.permute.xlu0 %1966
        %v1968 = vsel %vm858, %v1961, %v1963
        %v1969 = vsel %vm858, %v1963, %v1965
        %v1970 = vsel %vm858, %v1965, %v1967
        %v1974 = vmax.f32 %v1706, %v1968
        %v1975 = vmax.f32 %v1707, %v1969
        %v1976 = vmax.f32 %v1708, %v1970
        %1977 = vrot.lane.b32.xlu0 %v1952, 110
        %v1978 = vpop.permute.xlu0 %1977
        %1979 = vrot.lane.b32.xlu0 %v1953, 110
        %v1980 = vpop.permute.xlu0 %1979
        %1981 = vrot.lane.b32.xlu0 %v1954, 110
        %v1982 = vpop.permute.xlu0 %1981
        %1983 = vrot.lane.b32.xlu0 %v1955, 110
        %v1984 = vpop.permute.xlu0 %1983
        %v1985 = vsel %vm910, %v1978, %v1980
        %v1986 = vsel %vm910, %v1980, %v1982
        %v1987 = vsel %vm910, %v1982, %v1984
        %v1991 = vmax.f32 %v1974, %v1985
        %v1992 = vmax.f32 %v1975, %v1986
        %v1993 = vmax.f32 %v1976, %v1987
        %1994 = vrot.lane.b32.xlu0 %v1952, 109
        %v1995 = vpop.permute.xlu0 %1994
        %1996 = vrot.lane.b32.xlu0 %v1953, 109
        %v1997 = vpop.permute.xlu0 %1996
        %1998 = vrot.lane.b32.xlu0 %v1954, 109
        %v1999 = vpop.permute.xlu0 %1998
        %2000 = vrot.lane.b32.xlu0 %v1955, 109
        %v2001 = vpop.permute.xlu0 %2000
        %v2002 = vsel %vm936, %v1995, %v1997
        %v2003 = vsel %vm936, %v1997, %v1999
        %v2004 = vsel %vm936, %v1999, %v2001
        %v2008 = vmax.f32 %v1991, %v2002
        %v2009 = vmax.f32 %v1992, %v2003
        %v2010 = vmax.f32 %v1993, %v2004
        %v2011 = vld [vmem:[%s8] sm:$0xff]
        %v2012 = vld [vmem:[%s8 + $0x8] sm:$0xff]
        %v2013 = vld [vmem:[%s8 + $0x10] sm:$0xff]
        %v2014 = vld [vmem:[%s8 + $0x18] sm:$0xff]
        %v2015 = vld [vmem:[%s8 + $0x20] sm:$0xff]
        %v2016 = vld [vmem:[%s8 + $0x28] sm:$0xff]
        %v2017 = vld [vmem:[%s8 + $0x30] sm:$0xff]
        %v2018 = vld [vmem:[%s8 + $0x38] sm:$0xff]
        %v2019 = vld [vmem:[%s8 + $0x40] sm:$0xff]
        %v2020 = vld [vmem:[%s8 + $0x48] sm:$0xff]
        %v2021 = vld [vmem:[%s8 + $0x50] sm:$0xff]
        %v2022 = vld [vmem:[%s8 + $0x58] sm:$0xff]
        %v2023 = vld [vmem:[%s8 + $0x60] sm:$0xff]
        %v2024 = vld [vmem:[%s8 + $0x68] sm:$0xff]
        %v2025 = vld [vmem:[%s8 + $0x70] sm:$0xff]
        %v2026 = vld [vmem:[%s8 + $0x78] sm:$0xff]
        %v2027 = vld [vmem:[%s8 + $0x80] sm:$0xff]
        %v2028 = vld [vmem:[%s8 + $0x88] sm:$0xff]
        %v2029 = vld [vmem:[%s8 + $0x90] sm:$0xff]
        %v2030 = vld [vmem:[%s8 + $0x98] sm:$0xff]
        %v2031 = vld [vmem:[%s8 + $0xa0] sm:$0xff]
        %v2032 = vld [vmem:[%s8 + $0xa8] sm:$0xff]
        %v2033 = vld [vmem:[%s8 + $0xb0] sm:$0xff]
        %v2034 = vld [vmem:[%s8 + $0xb8] sm:$0xff]
        %v2035 = vld [vmem:[%s8 + $0xc0] sm:$0xff]
        %v2036 = vld [vmem:[%s8 + $0xc8] sm:$0xff]
        %v2037 = vld [vmem:[%s8 + $0xd0] sm:$0xff]
        %v2038 = vld [vmem:[%s8 + $0xd8] sm:$0xff]
        %v2039 = vld [vmem:[%s8 + $0xe0] sm:$0xff]
        %v2040 = vld [vmem:[%s8 + $0xe8] sm:$0xff]
        %v2041 = vld [vmem:[%s8 + $0xf0] sm:$0xff]
        %v2042 = vld [vmem:[%s8 + $0xf8] sm:$0xff]
        %v2043 = vld [vmem:[%s8 + $0x100] sm:$0xff]
        %v2044 = vld [vmem:[%s8 + $0x108] sm:$0xff]
        %v2045 = vld [vmem:[%s8 + $0x110] sm:$0xff]
        %v2046 = vld [vmem:[%s8 + $0x118] sm:$0xff]
        %v2047 = vld [vmem:[%s8 + $0x120] sm:$0xff]
        %v2048 = vld [vmem:[%s8 + $0x128] sm:$0xff]
        %v2049 = vld [vmem:[%s8 + $0x130] sm:$0xff]
        %v2050 = vld [vmem:[%s8 + $0x138] sm:$0xff]
        %v2051 = vld [vmem:[%s8 + $0x140] sm:$0xff]
        %v2052 = vld [vmem:[%s8 + $0x148] sm:$0xff]
        %v2053 = vld [vmem:[%s8 + $0x150] sm:$0xff]
        %v2054 = vld [vmem:[%s8 + $0x158] sm:$0xff]
        %v2055 = vld [vmem:[%s8 + $0x160] sm:$0xff]
        %v2056 = vld [vmem:[%s8 + $0x168] sm:$0xff]
        %v2057 = vld [vmem:[%s8 + $0x170] sm:$0xff]
        %v2058 = vld [vmem:[%s8 + $0x178] sm:$0xff]
        %2059 = vmatprep.subr.mxu0 0.0
        %2060 = vmatpush1.msra.mxu0 %v2011
        %2061 = vmatprep.subr.mxu0 0.0
        %2062 = vmatpush1.msra.mxu0 %v2012
        %2063 = vmatprep.subr.mxu0 0.0
        %2064 = vmatpush1.msra.mxu0 %v2013
        %2065 = vmatprep.subr.mxu0 0.0
        %2066 = vmatpush1.msra.mxu0 %v2014
        %2067 = vmatprep.subr.mxu0 0.0
        %2068 = vmatpush1.msra.mxu0 %v2015
        %2069 = vmatprep.subr.mxu0 0.0
        %2070 = vmatpush1.msra.mxu0 %v2016
        %2071 = vmatprep.subr.mxu0 0.0
        %2072 = vmatpush1.msra.mxu0 %v2017
        %2073 = vmatprep.subr.mxu0 0.0
        %2074 = vmatpush1.msra.mxu0 %v2018
        %2075 = vmatprep.subr.mxu0 0.0
        %2076 = vmatpush1.msra.mxu0 %v2019
        %2077 = vmatprep.subr.mxu0 0.0
        %2078 = vmatpush1.msra.mxu0 %v2020
        %2079 = vmatprep.subr.mxu0 0.0
        %2080 = vmatpush1.msra.mxu0 %v2021
        %2081 = vmatprep.subr.mxu0 0.0
        %2082 = vmatpush1.msra.mxu0 %v2022
        %2083 = vmatprep.subr.mxu0 0.0
        %2084 = vmatpush1.msra.mxu0 %v2023
        %2085 = vmatprep.subr.mxu0 0.0
        %2086 = vmatpush1.msra.mxu0 %v2024
        %2087 = vmatprep.subr.mxu0 0.0
        %2088 = vmatpush1.msra.mxu0 %v2025
        %2089 = vmatprep.subr.mxu0 0.0
        %2090 = vmatpush1.msra.mxu0 %v2026
        %2091 = vmatprep.subr.mxu0 0.0
        %2092 = vmatpush1.msra.mxu0 %v2027
        %2093 = vmatprep.subr.mxu0 0.0
        %2094 = vmatpush1.msra.mxu0 %v2028
        %2095 = vmatprep.subr.mxu0 0.0
        %2096 = vmatpush1.msra.mxu0 %v2029
        %2097 = vmatprep.subr.mxu0 0.0
        %2098 = vmatpush1.msra.mxu0 %v2030
        %2099 = vmatprep.subr.mxu0 0.0
        %2100 = vmatpush1.msra.mxu0 %v2031
        %2101 = vmatprep.subr.mxu0 0.0
        %2102 = vmatpush1.msra.mxu0 %v2032
        %2103 = vmatprep.subr.mxu0 0.0
        %2104 = vmatpush1.msra.mxu0 %v2033
        %2105 = vmatprep.subr.mxu0 0.0
        %2106 = vmatpush1.msra.mxu0 %v2034
        %2107 = vmatprep.subr.mxu0 0.0
        %2108 = vmatpush1.msra.mxu0 %v2035
        %2109 = vmatprep.subr.mxu0 0.0
        %2110 = vmatpush1.msra.mxu0 %v2036
        %2111 = vmatprep.subr.mxu0 0.0
        %2112 = vmatpush1.msra.mxu0 %v2037
        %2113 = vmatprep.subr.mxu0 0.0
        %2114 = vmatpush1.msra.mxu0 %v2038
        %2115 = vmatprep.subr.mxu0 0.0
        %2116 = vmatpush1.msra.mxu0 %v2039
        %2117 = vmatprep.subr.mxu0 0.0
        %2118 = vmatpush1.msra.mxu0 %v2040
        %2119 = vmatprep.subr.mxu0 0.0
        %2120 = vmatpush1.msra.mxu0 %v2041
        %2121 = vmatprep.subr.mxu0 0.0
        %2122 = vmatpush1.msra.mxu0 %v2042
        %2123 = vmatprep.mubr.f32.mxu0 %v2009
        %2124 = vmatmul.mubr.f32.gmra.mrb[0].mxu0 %v2008
        %v2125 = vpop.f32.mrb[0].mxu0
        %v2126 = vadd.f32 0.0, %v2125
        %v2127 = vpop.f32.mrb[0].mxu0
        %2128 = vdwg.mxu0
        %2129 = vmatprep.subr.mxu0 0.0
        %2130 = vmatpush1.msra.mxu0 %v2043
        %2131 = vmatprep.subr.mxu0 0.0
        %2132 = vmatpush1.msra.mxu0 %v2044
        %2133 = vmatprep.subr.mxu0 0.0
        %2134 = vmatpush1.msra.mxu0 %v2045
        %2135 = vmatprep.subr.mxu0 0.0
        %2136 = vmatpush1.msra.mxu0 %v2046
        %2137 = vmatprep.subr.mxu0 0.0
        %2138 = vmatpush1.msra.mxu0 %v2047
        %2139 = vmatprep.subr.mxu0 0.0
        %2140 = vmatpush1.msra.mxu0 %v2048
        %2141 = vmatprep.subr.mxu0 0.0
        %2142 = vmatpush1.msra.mxu0 %v2049
        %2143 = vmatprep.subr.mxu0 0.0
        %2144 = vmatpush1.msra.mxu0 %v2050
        %2145 = vmatprep.subr.mxu0 0.0
        %2146 = vmatpush1.msra.mxu0 %v2051
        %2147 = vmatprep.subr.mxu0 0.0
        %2148 = vmatpush1.msra.mxu0 %v2052
        %2149 = vmatprep.subr.mxu0 0.0
        %2150 = vmatpush1.msra.mxu0 %v2053
        %2151 = vmatprep.subr.mxu0 0.0
        %2152 = vmatpush1.msra.mxu0 %v2054
        %2153 = vmatprep.subr.mxu0 0.0
        %2154 = vmatpush1.msra.mxu0 %v2055
        %2155 = vmatprep.subr.mxu0 0.0
        %2156 = vmatpush1.msra.mxu0 %v2056
        %2157 = vmatprep.subr.mxu0 0.0
        %2158 = vmatpush1.msra.mxu0 %v2057
        %2159 = vmatprep.subr.mxu0 0.0
        %2160 = vmatpush1.msra.mxu0 %v2058
        %2161 = vmatprep.subr.mxu0 0.0
        %2162 = vmatpush1.msra.mxu0 0.0
        %2163 = vmatprep.subr.mxu0 0.0
        %2164 = vmatpush1.msra.mxu0 0.0
        %2165 = vmatprep.subr.mxu0 0.0
        %2166 = vmatpush1.msra.mxu0 0.0
        %2167 = vmatprep.subr.mxu0 0.0
        %2168 = vmatpush1.msra.mxu0 0.0
        %2169 = vmatprep.subr.mxu0 0.0
        %2170 = vmatpush1.msra.mxu0 0.0
        %2171 = vmatprep.subr.mxu0 0.0
        %2172 = vmatpush1.msra.mxu0 0.0
        %2173 = vmatprep.subr.mxu0 0.0
        %2174 = vmatpush1.msra.mxu0 0.0
        %2175 = vmatprep.subr.mxu0 0.0
        %2176 = vmatpush1.msra.mxu0 0.0
        %2177 = vmatprep.subr.mxu0 0.0
        %2178 = vmatpush1.msra.mxu0 0.0
        %2179 = vmatprep.subr.mxu0 0.0
        %2180 = vmatpush1.msra.mxu0 0.0
        %2181 = vmatprep.subr.mxu0 0.0
        %2182 = vmatpush1.msra.mxu0 0.0
        %2183 = vmatprep.subr.mxu0 0.0
        %2184 = vmatpush1.msra.mxu0 0.0
        %2185 = vmatprep.subr.mxu0 0.0
        %2186 = vmatpush1.msra.mxu0 0.0
        %2187 = vmatprep.subr.mxu0 0.0
        %2188 = vmatpush1.msra.mxu0 0.0
        %2189 = vmatprep.subr.mxu0 0.0
        %2190 = vmatpush1.msra.mxu0 0.0
        %2191 = vmatprep.subr.mxu0 0.0
        %2192 = vmatpush1.msra.mxu0 0.0
        %2193 = vmatprep.mubr.f32.mxu0 0.0
        %2194 = vmatmul.mubr.f32.gmra.mrb[0].mxu0 %v2010
        %v2195 = vpop.f32.mrb[0].mxu0
        %v2196 = vadd.f32 %v2126, %v2195
        %v2197 = vpop.f32.mrb[0].mxu0
        %2198 = vdwg.mxu0
        %v2199 = vld [vmem:[%s10] sm:$0x1]
        %v2200 = vpack.c.bf16 %v2196, %v2196
        %v2201 = vld [vmem:[%s9] sm:$0xf]
        %v2202 = vld [vmem:[%s9 + $0x4] sm:$0xf]
        %v2203 = vld [vmem:[%s9 + $0x8] sm:$0xf]
        %v2204 = vld [vmem:[%s9 + $0xc] sm:$0xf]
        %v2205 = vld [vmem:[%s9 + $0x10] sm:$0xf]
        %v2206 = vld [vmem:[%s9 + $0x14] sm:$0xf]
        %v2207 = vld [vmem:[%s9 + $0x18] sm:$0xf]
        %v2208 = vld [vmem:[%s9 + $0x1c] sm:$0xf]
        %v2217 = vunpack.c.l.b16 %v2201
        %v2218 = vunpack.c.l.b16 %v2202
        %v2219 = vunpack.c.l.b16 %v2203
        %v2220 = vunpack.c.l.b16 %v2204
        %v2221 = vunpack.c.l.b16 %v2205
        %v2222 = vunpack.c.l.b16 %v2206
        %v2223 = vunpack.c.l.b16 %v2207
        %v2224 = vunpack.c.l.b16 %v2208
        %v2225 = vpack.c.b16 %v2218, %v2217
        %v2226 = vpack.c.b16 %v2220, %v2219
        %v2227 = vpack.c.b16 %v2222, %v2221
        %v2228 = vpack.c.b16 %v2224, %v2223
        %vm2233 = vcmask 523264
        %v2235 = vsel %vm2233, %v2200, 0
        %2237 = vmatprep.subr.bf16.mxu0 0
        %2238 = vmatpush1.bf16.msra.mxu0 %v2225
        %2239 = vmatprep.subr.bf16.mxu0 0
        %2240 = vmatpush1.bf16.msra.mxu0 %v2226
        %2241 = vmatprep.subr.bf16.mxu0 0
        %2242 = vmatpush1.bf16.msra.mxu0 %v2227
        %2243 = vmatprep.subr.bf16.mxu0 0
        %2244 = vmatpush1.bf16.msra.mxu0 %v2228
        %2245 = vmatprep.subr.bf16.mxu0 0
        %2246 = vmatpush1.bf16.msra.mxu0 0
        %2247 = vmatprep.subr.bf16.mxu0 0
        %2248 = vmatpush1.bf16.msra.mxu0 0
        %2249 = vmatprep.subr.bf16.mxu0 0
        %2250 = vmatpush1.bf16.msra.mxu0 0
        %2251 = vmatprep.subr.bf16.mxu0 0
        %2252 = vmatpush1.bf16.msra.mxu0 0
        %2253 = vmatprep.subr.bf16.mxu0 0
        %2254 = vmatpush1.bf16.msra.mxu0 0
        %2255 = vmatprep.subr.bf16.mxu0 0
        %2256 = vmatpush1.bf16.msra.mxu0 0
        %2257 = vmatprep.subr.bf16.mxu0 0
        %2258 = vmatpush1.bf16.msra.mxu0 0
        %2259 = vmatprep.subr.bf16.mxu0 0
        %2260 = vmatpush1.bf16.msra.mxu0 0
        %2261 = vmatprep.subr.bf16.mxu0 0
        %2262 = vmatpush1.bf16.msra.mxu0 0
        %2263 = vmatprep.subr.bf16.mxu0 0
        %2264 = vmatpush1.bf16.msra.mxu0 0
        %2265 = vmatprep.subr.bf16.mxu0 0
        %2266 = vmatpush1.bf16.msra.mxu0 0
        %2267 = vmatprep.subr.bf16.mxu0 0
        %2268 = vmatpush1.bf16.msra.mxu0 0
        %2269 = vmatprep.mubr.bf16.mxu0 0
        %2270 = vmatmul.mubr.bf16.gmra.mrb[0].mxu0 %v2235
        %v2271 = vpop.f32.mrb[0].mxu0
        %v2272 = vadd.f32 0.0, %v2271
        %v2273 = vpop.f32.mrb[0].mxu0
        %v2274 = vpop.f32.mrb[0].mxu0
        %v2275 = vpop.f32.mrb[0].mxu0
        %2276 = vdwg.mxu0
        %v2277 = vadd.f32 %v2199, %v2272
        %s2278 = scalar_lea.vmem %s9, 32
        %v2279 = vld [vmem:[%s2278] sm:$0xf]
        %v2280 = vld [vmem:[%s2278 + $0x4] sm:$0xf]
        %v2281 = vld [vmem:[%s2278 + $0x8] sm:$0xf]
        %v2282 = vld [vmem:[%s2278 + $0xc] sm:$0xf]
        %v2283 = vld [vmem:[%s2278 + $0x10] sm:$0xf]
        %v2284 = vld [vmem:[%s2278 + $0x14] sm:$0xf]
        %v2285 = vld [vmem:[%s2278 + $0x18] sm:$0xf]
        %v2286 = vld [vmem:[%s2278 + $0x1c] sm:$0xf]
        %v2287 = vshrl.u32 %v2200, 16
        %v2297 = vunpack.c.l.b16 %v2279
        %v2298 = vunpack.c.l.b16 %v2280
        %v2299 = vunpack.c.l.b16 %v2281
        %v2300 = vunpack.c.l.b16 %v2282
        %v2301 = vunpack.c.l.b16 %v2283
        %v2302 = vunpack.c.l.b16 %v2284
        %v2303 = vunpack.c.l.b16 %v2285
        %v2304 = vunpack.c.l.b16 %v2286
        %v2305 = vpack.c.b16 %v2298, %v2297
        %v2306 = vpack.c.b16 %v2300, %v2299
        %v2307 = vpack.c.b16 %v2302, %v2301
        %v2308 = vpack.c.b16 %v2304, %v2303
        %v2314 = vsel %vm2233, %v2287, 0
        %2316 = vmatprep.subr.bf16.mxu0 0
        %2317 = vmatpush1.bf16.msra.mxu0 %v2305
        %2318 = vmatprep.subr.bf16.mxu0 0
        %2319 = vmatpush1.bf16.msra.mxu0 %v2306
        %2320 = vmatprep.subr.bf16.mxu0 0
        %2321 = vmatpush1.bf16.msra.mxu0 %v2307
        %2322 = vmatprep.subr.bf16.mxu0 0
        %2323 = vmatpush1.bf16.msra.mxu0 %v2308
        %2324 = vmatprep.subr.bf16.mxu0 0
        %2325 = vmatpush1.bf16.msra.mxu0 0
        %2326 = vmatprep.subr.bf16.mxu0 0
        %2327 = vmatpush1.bf16.msra.mxu0 0
        %2328 = vmatprep.subr.bf16.mxu0 0
        %2329 = vmatpush1.bf16.msra.mxu0 0
        %2330 = vmatprep.subr.bf16.mxu0 0
        %2331 = vmatpush1.bf16.msra.mxu0 0
        %2332 = vmatprep.subr.bf16.mxu0 0
        %2333 = vmatpush1.bf16.msra.mxu0 0
        %2334 = vmatprep.subr.bf16.mxu0 0
        %2335 = vmatpush1.bf16.msra.mxu0 0
        %2336 = vmatprep.subr.bf16.mxu0 0
        %2337 = vmatpush1.bf16.msra.mxu0 0
        %2338 = vmatprep.subr.bf16.mxu0 0
        %2339 = vmatpush1.bf16.msra.mxu0 0
        %2340 = vmatprep.subr.bf16.mxu0 0
        %2341 = vmatpush1.bf16.msra.mxu0 0
        %2342 = vmatprep.subr.bf16.mxu0 0
        %2343 = vmatpush1.bf16.msra.mxu0 0
        %2344 = vmatprep.subr.bf16.mxu0 0
        %2345 = vmatpush1.bf16.msra.mxu0 0
        %2346 = vmatprep.subr.bf16.mxu0 0
        %2347 = vmatpush1.bf16.msra.mxu0 0
        %2348 = vmatprep.mubr.bf16.mxu0 0
        %2349 = vmatmul.mubr.bf16.gmra.mrb[0].mxu0 %v2314
        %v2350 = vpop.f32.mrb[0].mxu0
        %v2351 = vadd.f32 0.0, %v2350
        %v2352 = vpop.f32.mrb[0].mxu0
        %v2353 = vpop.f32.mrb[0].mxu0
        %v2354 = vpop.f32.mrb[0].mxu0
        %2355 = vdwg.mxu0
        %v2356 = vadd.f32 %v2277, %v2351
        %s2357 = scalar_lea.vmem %s9, 64
        %v2358 = vld [vmem:[%s2357] sm:$0xf]
        %v2359 = vld [vmem:[%s2357 + $0x4] sm:$0xf]
        %v2360 = vld [vmem:[%s2357 + $0x8] sm:$0xf]
        %v2361 = vld [vmem:[%s2357 + $0xc] sm:$0xf]
        %v2362 = vld [vmem:[%s2357 + $0x10] sm:$0xf]
        %v2363 = vld [vmem:[%s2357 + $0x14] sm:$0xf]
        %v2364 = vld [vmem:[%s2357 + $0x18] sm:$0xf]
        %v2365 = vld [vmem:[%s2357 + $0x1c] sm:$0xf]
        %v2367 = vrot.slane %v2200, 1
        %v2376 = vunpack.c.l.b16 %v2358
        %v2377 = vunpack.c.l.b16 %v2359
        %v2378 = vunpack.c.l.b16 %v2360
        %v2379 = vunpack.c.l.b16 %v2361
        %v2380 = vunpack.c.l.b16 %v2362
        %v2381 = vunpack.c.l.b16 %v2363
        %v2382 = vunpack.c.l.b16 %v2364
        %v2383 = vunpack.c.l.b16 %v2365
        %v2384 = vpack.c.b16 %v2377, %v2376
        %v2385 = vpack.c.b16 %v2379, %v2378
        %v2386 = vpack.c.b16 %v2381, %v2380
        %v2387 = vpack.c.b16 %v2383, %v2382
        %v2393 = vsel %vm2233, %v2367, 0
        %2395 = vmatprep.subr.bf16.mxu0 0
        %2396 = vmatpush1.bf16.msra.mxu0 %v2384
        %2397 = vmatprep.subr.bf16.mxu0 0
        %2398 = vmatpush1.bf16.msra.mxu0 %v2385
        %2399 = vmatprep.subr.bf16.mxu0 0
        %2400 = vmatpush1.bf16.msra.mxu0 %v2386
        %2401 = vmatprep.subr.bf16.mxu0 0
        %2402 = vmatpush1.bf16.msra.mxu0 %v2387
        %2403 = vmatprep.subr.bf16.mxu0 0
        %2404 = vmatpush1.bf16.msra.mxu0 0
        %2405 = vmatprep.subr.bf16.mxu0 0
        %2406 = vmatpush1.bf16.msra.mxu0 0
        %2407 = vmatprep.subr.bf16.mxu0 0
        %2408 = vmatpush1.bf16.msra.mxu0 0
        %2409 = vmatprep.subr.bf16.mxu0 0
        %2410 = vmatpush1.bf16.msra.mxu0 0
        %2411 = vmatprep.subr.bf16.mxu0 0
        %2412 = vmatpush1.bf16.msra.mxu0 0
        %2413 = vmatprep.subr.bf16.mxu0 0
        %2414 = vmatpush1.bf16.msra.mxu0 0
        %2415 = vmatprep.subr.bf16.mxu0 0
        %2416 = vmatpush1.bf16.msra.mxu0 0
        %2417 = vmatprep.subr.bf16.mxu0 0
        %2418 = vmatpush1.bf16.msra.mxu0 0
        %2419 = vmatprep.subr.bf16.mxu0 0
        %2420 = vmatpush1.bf16.msra.mxu0 0
        %2421 = vmatprep.subr.bf16.mxu0 0
        %2422 = vmatpush1.bf16.msra.mxu0 0
        %2423 = vmatprep.subr.bf16.mxu0 0
        %2424 = vmatpush1.bf16.msra.mxu0 0
        %2425 = vmatprep.subr.bf16.mxu0 0
        %2426 = vmatpush1.bf16.msra.mxu0 0
        %2427 = vmatprep.mubr.bf16.mxu0 0
        %2428 = vmatmul.mubr.bf16.gmra.mrb[0].mxu0 %v2393
        %v2429 = vpop.f32.mrb[0].mxu0
        %v2430 = vadd.f32 0.0, %v2429
        %v2431 = vpop.f32.mrb[0].mxu0
        %v2432 = vpop.f32.mrb[0].mxu0
        %v2433 = vpop.f32.mrb[0].mxu0
        %2434 = vdwg.mxu0
        %v2435 = vadd.f32 %v2356, %v2430
        %s2436 = scalar_lea.vmem %s9, 96
        %v2437 = vld [vmem:[%s2436] sm:$0xf]
        %v2438 = vld [vmem:[%s2436 + $0x4] sm:$0xf]
        %v2439 = vld [vmem:[%s2436 + $0x8] sm:$0xf]
        %v2440 = vld [vmem:[%s2436 + $0xc] sm:$0xf]
        %v2441 = vld [vmem:[%s2436 + $0x10] sm:$0xf]
        %v2442 = vld [vmem:[%s2436 + $0x14] sm:$0xf]
        %v2443 = vld [vmem:[%s2436 + $0x18] sm:$0xf]
        %v2444 = vld [vmem:[%s2436 + $0x1c] sm:$0xf]
        %v2445 = vrot.slane %v2287, 1
        %v2454 = vunpack.c.l.b16 %v2437
        %v2455 = vunpack.c.l.b16 %v2438
        %v2456 = vunpack.c.l.b16 %v2439
        %v2457 = vunpack.c.l.b16 %v2440
        %v2458 = vunpack.c.l.b16 %v2441
        %v2459 = vunpack.c.l.b16 %v2442
        %v2460 = vunpack.c.l.b16 %v2443
        %v2461 = vunpack.c.l.b16 %v2444
        %v2462 = vpack.c.b16 %v2455, %v2454
        %v2463 = vpack.c.b16 %v2457, %v2456
        %v2464 = vpack.c.b16 %v2459, %v2458
        %v2465 = vpack.c.b16 %v2461, %v2460
        %v2471 = vsel %vm2233, %v2445, 0
        %2473 = vmatprep.subr.bf16.mxu0 0
        %2474 = vmatpush1.bf16.msra.mxu0 %v2462
        %2475 = vmatprep.subr.bf16.mxu0 0
        %2476 = vmatpush1.bf16.msra.mxu0 %v2463
        %2477 = vmatprep.subr.bf16.mxu0 0
        %2478 = vmatpush1.bf16.msra.mxu0 %v2464
        %2479 = vmatprep.subr.bf16.mxu0 0
        %2480 = vmatpush1.bf16.msra.mxu0 %v2465
        %2481 = vmatprep.subr.bf16.mxu0 0
        %2482 = vmatpush1.bf16.msra.mxu0 0
        %2483 = vmatprep.subr.bf16.mxu0 0
        %2484 = vmatpush1.bf16.msra.mxu0 0
        %2485 = vmatprep.subr.bf16.mxu0 0
        %2486 = vmatpush1.bf16.msra.mxu0 0
        %2487 = vmatprep.subr.bf16.mxu0 0
        %2488 = vmatpush1.bf16.msra.mxu0 0
        %2489 = vmatprep.subr.bf16.mxu0 0
        %2490 = vmatpush1.bf16.msra.mxu0 0
        %2491 = vmatprep.subr.bf16.mxu0 0
        %2492 = vmatpush1.bf16.msra.mxu0 0
        %2493 = vmatprep.subr.bf16.mxu0 0
        %2494 = vmatpush1.bf16.msra.mxu0 0
        %2495 = vmatprep.subr.bf16.mxu0 0
        %2496 = vmatpush1.bf16.msra.mxu0 0
        %2497 = vmatprep.subr.bf16.mxu0 0
        %2498 = vmatpush1.bf16.msra.mxu0 0
        %2499 = vmatprep.subr.bf16.mxu0 0
        %2500 = vmatpush1.bf16.msra.mxu0 0
        %2501 = vmatprep.subr.bf16.mxu0 0
        %2502 = vmatpush1.bf16.msra.mxu0 0
        %2503 = vmatprep.subr.bf16.mxu0 0
        %2504 = vmatpush1.bf16.msra.mxu0 0
        %2505 = vmatprep.mubr.bf16.mxu0 0
        %2506 = vmatmul.mubr.bf16.gmra.mrb[0].mxu0 %v2471
        %v2507 = vpop.f32.mrb[0].mxu0
        %v2508 = vadd.f32 0.0, %v2507
        %v2509 = vpop.f32.mrb[0].mxu0
        %v2510 = vpop.f32.mrb[0].mxu0
        %v2511 = vpop.f32.mrb[0].mxu0
        %2512 = vdwg.mxu0
        %v2513 = vadd.f32 %v2435, %v2508
        %s2514 = scalar_lea.vmem %s9, 128
        %v2515 = vld [vmem:[%s2514] sm:$0xf]
        %v2516 = vld [vmem:[%s2514 + $0x4] sm:$0xf]
        %v2517 = vld [vmem:[%s2514 + $0x8] sm:$0xf]
        %v2518 = vld [vmem:[%s2514 + $0xc] sm:$0xf]
        %v2519 = vld [vmem:[%s2514 + $0x10] sm:$0xf]
        %v2520 = vld [vmem:[%s2514 + $0x14] sm:$0xf]
        %v2521 = vld [vmem:[%s2514 + $0x18] sm:$0xf]
        %v2522 = vld [vmem:[%s2514 + $0x1c] sm:$0xf]
        %v2523 = vrot.slane %v2200, 2
        %v2532 = vunpack.c.l.b16 %v2515
        %v2533 = vunpack.c.l.b16 %v2516
        %v2534 = vunpack.c.l.b16 %v2517
        %v2535 = vunpack.c.l.b16 %v2518
        %v2536 = vunpack.c.l.b16 %v2519
        %v2537 = vunpack.c.l.b16 %v2520
        %v2538 = vunpack.c.l.b16 %v2521
        %v2539 = vunpack.c.l.b16 %v2522
        %v2540 = vpack.c.b16 %v2533, %v2532
        %v2541 = vpack.c.b16 %v2535, %v2534
        %v2542 = vpack.c.b16 %v2537, %v2536
        %v2543 = vpack.c.b16 %v2539, %v2538
        %v2549 = vsel %vm2233, %v2523, 0
        %2551 = vmatprep.subr.bf16.mxu0 0
        %2552 = vmatpush1.bf16.msra.mxu0 %v2540
        %2553 = vmatprep.subr.bf16.mxu0 0
        %2554 = vmatpush1.bf16.msra.mxu0 %v2541
        %2555 = vmatprep.subr.bf16.mxu0 0
        %2556 = vmatpush1.bf16.msra.mxu0 %v2542
        %2557 = vmatprep.subr.bf16.mxu0 0
        %2558 = vmatpush1.bf16.msra.mxu0 %v2543
        %2559 = vmatprep.subr.bf16.mxu0 0
        %2560 = vmatpush1.bf16.msra.mxu0 0
        %2561 = vmatprep.subr.bf16.mxu0 0
        %2562 = vmatpush1.bf16.msra.mxu0 0
        %2563 = vmatprep.subr.bf16.mxu0 0
        %2564 = vmatpush1.bf16.msra.mxu0 0
        %2565 = vmatprep.subr.bf16.mxu0 0
        %2566 = vmatpush1.bf16.msra.mxu0 0
        %2567 = vmatprep.subr.bf16.mxu0 0
        %2568 = vmatpush1.bf16.msra.mxu0 0
        %2569 = vmatprep.subr.bf16.mxu0 0
        %2570 = vmatpush1.bf16.msra.mxu0 0
        %2571 = vmatprep.subr.bf16.mxu0 0
        %2572 = vmatpush1.bf16.msra.mxu0 0
        %2573 = vmatprep.subr.bf16.mxu0 0
        %2574 = vmatpush1.bf16.msra.mxu0 0
        %2575 = vmatprep.subr.bf16.mxu0 0
        %2576 = vmatpush1.bf16.msra.mxu0 0
        %2577 = vmatprep.subr.bf16.mxu0 0
        %2578 = vmatpush1.bf16.msra.mxu0 0
        %2579 = vmatprep.subr.bf16.mxu0 0
        %2580 = vmatpush1.bf16.msra.mxu0 0
        %2581 = vmatprep.subr.bf16.mxu0 0
        %2582 = vmatpush1.bf16.msra.mxu0 0
        %2583 = vmatprep.mubr.bf16.mxu0 0
        %2584 = vmatmul.mubr.bf16.gmra.mrb[0].mxu0 %v2549
        %v2585 = vpop.f32.mrb[0].mxu0
        %v2586 = vadd.f32 0.0, %v2585
        %v2587 = vpop.f32.mrb[0].mxu0
        %v2588 = vpop.f32.mrb[0].mxu0
        %v2589 = vpop.f32.mrb[0].mxu0
        %2590 = vdwg.mxu0
        %v2591 = vadd.f32 %v2513, %v2586
        %s2592 = scalar_lea.vmem %s9, 160
        %v2593 = vld [vmem:[%s2592] sm:$0xf]
        %v2594 = vld [vmem:[%s2592 + $0x4] sm:$0xf]
        %v2595 = vld [vmem:[%s2592 + $0x8] sm:$0xf]
        %v2596 = vld [vmem:[%s2592 + $0xc] sm:$0xf]
        %v2597 = vld [vmem:[%s2592 + $0x10] sm:$0xf]
        %v2598 = vld [vmem:[%s2592 + $0x14] sm:$0xf]
        %v2599 = vld [vmem:[%s2592 + $0x18] sm:$0xf]
        %v2600 = vld [vmem:[%s2592 + $0x1c] sm:$0xf]
        %v2601 = vrot.slane %v2287, 2
        %v2610 = vunpack.c.l.b16 %v2593
        %v2611 = vunpack.c.l.b16 %v2594
        %v2612 = vunpack.c.l.b16 %v2595
        %v2613 = vunpack.c.l.b16 %v2596
        %v2614 = vunpack.c.l.b16 %v2597
        %v2615 = vunpack.c.l.b16 %v2598
        %v2616 = vunpack.c.l.b16 %v2599
        %v2617 = vunpack.c.l.b16 %v2600
        %v2618 = vpack.c.b16 %v2611, %v2610
        %v2619 = vpack.c.b16 %v2613, %v2612
        %v2620 = vpack.c.b16 %v2615, %v2614
        %v2621 = vpack.c.b16 %v2617, %v2616
        %v2627 = vsel %vm2233, %v2601, 0
        %2629 = vmatprep.subr.bf16.mxu0 0
        %2630 = vmatpush1.bf16.msra.mxu0 %v2618
        %2631 = vmatprep.subr.bf16.mxu0 0
        %2632 = vmatpush1.bf16.msra.mxu0 %v2619
        %2633 = vmatprep.subr.bf16.mxu0 0
        %2634 = vmatpush1.bf16.msra.mxu0 %v2620
        %2635 = vmatprep.subr.bf16.mxu0 0
        %2636 = vmatpush1.bf16.msra.mxu0 %v2621
        %2637 = vmatprep.subr.bf16.mxu0 0
        %2638 = vmatpush1.bf16.msra.mxu0 0
        %2639 = vmatprep.subr.bf16.mxu0 0
        %2640 = vmatpush1.bf16.msra.mxu0 0
        %2641 = vmatprep.subr.bf16.mxu0 0
        %2642 = vmatpush1.bf16.msra.mxu0 0
        %2643 = vmatprep.subr.bf16.mxu0 0
        %2644 = vmatpush1.bf16.msra.mxu0 0
        %2645 = vmatprep.subr.bf16.mxu0 0
        %2646 = vmatpush1.bf16.msra.mxu0 0
        %2647 = vmatprep.subr.bf16.mxu0 0
        %2648 = vmatpush1.bf16.msra.mxu0 0
        %2649 = vmatprep.subr.bf16.mxu0 0
        %2650 = vmatpush1.bf16.msra.mxu0 0
        %2651 = vmatprep.subr.bf16.mxu0 0
        %2652 = vmatpush1.bf16.msra.mxu0 0
        %2653 = vmatprep.subr.bf16.mxu0 0
        %2654 = vmatpush1.bf16.msra.mxu0 0
        %2655 = vmatprep.subr.bf16.mxu0 0
        %2656 = vmatpush1.bf16.msra.mxu0 0
        %2657 = vmatprep.subr.bf16.mxu0 0
        %2658 = vmatpush1.bf16.msra.mxu0 0
        %2659 = vmatprep.subr.bf16.mxu0 0
        %2660 = vmatpush1.bf16.msra.mxu0 0
        %2661 = vmatprep.mubr.bf16.mxu0 0
        %2662 = vmatmul.mubr.bf16.gmra.mrb[0].mxu0 %v2627
        %v2663 = vpop.f32.mrb[0].mxu0
        %v2664 = vadd.f32 0.0, %v2663
        %v2665 = vpop.f32.mrb[0].mxu0
        %v2666 = vpop.f32.mrb[0].mxu0
        %v2667 = vpop.f32.mrb[0].mxu0
        %2668 = vdwg.mxu0
        %v2669 = vadd.f32 %v2591, %v2664
        %s2670 = scalar_lea.vmem %s9, 192
        %v2671 = vld [vmem:[%s2670] sm:$0xf]
        %v2672 = vld [vmem:[%s2670 + $0x4] sm:$0xf]
        %v2673 = vld [vmem:[%s2670 + $0x8] sm:$0xf]
        %v2674 = vld [vmem:[%s2670 + $0xc] sm:$0xf]
        %v2675 = vld [vmem:[%s2670 + $0x10] sm:$0xf]
        %v2676 = vld [vmem:[%s2670 + $0x14] sm:$0xf]
        %v2677 = vld [vmem:[%s2670 + $0x18] sm:$0xf]
        %v2678 = vld [vmem:[%s2670 + $0x1c] sm:$0xf]
        %v2679 = vrot.slane %v2200, 3
        %v2688 = vunpack.c.l.b16 %v2671
        %v2689 = vunpack.c.l.b16 %v2672
        %v2690 = vunpack.c.l.b16 %v2673
        %v2691 = vunpack.c.l.b16 %v2674
        %v2692 = vunpack.c.l.b16 %v2675
        %v2693 = vunpack.c.l.b16 %v2676
        %v2694 = vunpack.c.l.b16 %v2677
        %v2695 = vunpack.c.l.b16 %v2678
        %v2696 = vpack.c.b16 %v2689, %v2688
        %v2697 = vpack.c.b16 %v2691, %v2690
        %v2698 = vpack.c.b16 %v2693, %v2692
        %v2699 = vpack.c.b16 %v2695, %v2694
        %v2705 = vsel %vm2233, %v2679, 0
        %2707 = vmatprep.subr.bf16.mxu0 0
        %2708 = vmatpush1.bf16.msra.mxu0 %v2696
        %2709 = vmatprep.subr.bf16.mxu0 0
        %2710 = vmatpush1.bf16.msra.mxu0 %v2697
        %2711 = vmatprep.subr.bf16.mxu0 0
        %2712 = vmatpush1.bf16.msra.mxu0 %v2698
        %2713 = vmatprep.subr.bf16.mxu0 0
        %2714 = vmatpush1.bf16.msra.mxu0 %v2699
        %2715 = vmatprep.subr.bf16.mxu0 0
        %2716 = vmatpush1.bf16.msra.mxu0 0
        %2717 = vmatprep.subr.bf16.mxu0 0
        %2718 = vmatpush1.bf16.msra.mxu0 0
        %2719 = vmatprep.subr.bf16.mxu0 0
        %2720 = vmatpush1.bf16.msra.mxu0 0
        %2721 = vmatprep.subr.bf16.mxu0 0
        %2722 = vmatpush1.bf16.msra.mxu0 0
        %2723 = vmatprep.subr.bf16.mxu0 0
        %2724 = vmatpush1.bf16.msra.mxu0 0
        %2725 = vmatprep.subr.bf16.mxu0 0
        %2726 = vmatpush1.bf16.msra.mxu0 0
        %2727 = vmatprep.subr.bf16.mxu0 0
        %2728 = vmatpush1.bf16.msra.mxu0 0
        %2729 = vmatprep.subr.bf16.mxu0 0
        %2730 = vmatpush1.bf16.msra.mxu0 0
        %2731 = vmatprep.subr.bf16.mxu0 0
        %2732 = vmatpush1.bf16.msra.mxu0 0
        %2733 = vmatprep.subr.bf16.mxu0 0
        %2734 = vmatpush1.bf16.msra.mxu0 0
        %2735 = vmatprep.subr.bf16.mxu0 0
        %2736 = vmatpush1.bf16.msra.mxu0 0
        %2737 = vmatprep.subr.bf16.mxu0 0
        %2738 = vmatpush1.bf16.msra.mxu0 0
        %2739 = vmatprep.mubr.bf16.mxu0 0
        %2740 = vmatmul.mubr.bf16.gmra.mrb[0].mxu0 %v2705
        %v2741 = vpop.f32.mrb[0].mxu0
        %v2742 = vadd.f32 0.0, %v2741
        %v2743 = vpop.f32.mrb[0].mxu0
        %v2744 = vpop.f32.mrb[0].mxu0
        %v2745 = vpop.f32.mrb[0].mxu0
        %2746 = vdwg.mxu0
        %v2747 = vadd.f32 %v2669, %v2742
        %s2748 = scalar_lea.vmem %s9, 224
        %v2749 = vld [vmem:[%s2748] sm:$0xf]
        %v2750 = vld [vmem:[%s2748 + $0x4] sm:$0xf]
        %v2751 = vld [vmem:[%s2748 + $0x8] sm:$0xf]
        %v2752 = vld [vmem:[%s2748 + $0xc] sm:$0xf]
        %v2753 = vld [vmem:[%s2748 + $0x10] sm:$0xf]
        %v2754 = vld [vmem:[%s2748 + $0x14] sm:$0xf]
        %v2755 = vld [vmem:[%s2748 + $0x18] sm:$0xf]
        %v2756 = vld [vmem:[%s2748 + $0x1c] sm:$0xf]
        %v2757 = vrot.slane %v2287, 3
        %v2766 = vunpack.c.l.b16 %v2749
        %v2767 = vunpack.c.l.b16 %v2750
        %v2768 = vunpack.c.l.b16 %v2751
        %v2769 = vunpack.c.l.b16 %v2752
        %v2770 = vunpack.c.l.b16 %v2753
        %v2771 = vunpack.c.l.b16 %v2754
        %v2772 = vunpack.c.l.b16 %v2755
        %v2773 = vunpack.c.l.b16 %v2756
        %v2774 = vpack.c.b16 %v2767, %v2766
        %v2775 = vpack.c.b16 %v2769, %v2768
        %v2776 = vpack.c.b16 %v2771, %v2770
        %v2777 = vpack.c.b16 %v2773, %v2772
        %v2783 = vsel %vm2233, %v2757, 0
        %2785 = vmatprep.subr.bf16.mxu0 0
        %2786 = vmatpush1.bf16.msra.mxu0 %v2774
        %2787 = vmatprep.subr.bf16.mxu0 0
        %2788 = vmatpush1.bf16.msra.mxu0 %v2775
        %2789 = vmatprep.subr.bf16.mxu0 0
        %2790 = vmatpush1.bf16.msra.mxu0 %v2776
        %2791 = vmatprep.subr.bf16.mxu0 0
        %2792 = vmatpush1.bf16.msra.mxu0 %v2777
        %2793 = vmatprep.subr.bf16.mxu0 0
        %2794 = vmatpush1.bf16.msra.mxu0 0
        %2795 = vmatprep.subr.bf16.mxu0 0
        %2796 = vmatpush1.bf16.msra.mxu0 0
        %2797 = vmatprep.subr.bf16.mxu0 0
        %2798 = vmatpush1.bf16.msra.mxu0 0
        %2799 = vmatprep.subr.bf16.mxu0 0
        %2800 = vmatpush1.bf16.msra.mxu0 0
        %2801 = vmatprep.subr.bf16.mxu0 0
        %2802 = vmatpush1.bf16.msra.mxu0 0
        %2803 = vmatprep.subr.bf16.mxu0 0
        %2804 = vmatpush1.bf16.msra.mxu0 0
        %2805 = vmatprep.subr.bf16.mxu0 0
        %2806 = vmatpush1.bf16.msra.mxu0 0
        %2807 = vmatprep.subr.bf16.mxu0 0
        %2808 = vmatpush1.bf16.msra.mxu0 0
        %2809 = vmatprep.subr.bf16.mxu0 0
        %2810 = vmatpush1.bf16.msra.mxu0 0
        %2811 = vmatprep.subr.bf16.mxu0 0
        %2812 = vmatpush1.bf16.msra.mxu0 0
        %2813 = vmatprep.subr.bf16.mxu0 0
        %2814 = vmatpush1.bf16.msra.mxu0 0
        %2815 = vmatprep.subr.bf16.mxu0 0
        %2816 = vmatpush1.bf16.msra.mxu0 0
        %2817 = vmatprep.mubr.bf16.mxu0 0
        %2818 = vmatmul.mubr.bf16.gmra.mrb[0].mxu0 %v2783
        %v2819 = vpop.f32.mrb[0].mxu0
        %v2820 = vadd.f32 0.0, %v2819
        %v2821 = vpop.f32.mrb[0].mxu0
        %v2822 = vpop.f32.mrb[0].mxu0
        %v2823 = vpop.f32.mrb[0].mxu0
        %2824 = vdwg.mxu0
        %v2825 = vadd.f32 %v2747, %v2820
        %2826 = vst [vmem:[%s480] sm:$0x1] %v2825
        %s2827 = sand.u32 %s277, 1
        %s2828 = scalar_lea.sflag [#allocation6], %s2827
        %s2829 = sand.u32 %s277, 1
        %s2830 = smul.addr %s2829, 16
        %s2831 = scalar_lea.vmem [#allocation9], %s2830
        %s2832 = sand.u32 %s33, 1
        %s2833 = scalar_lea.sflag [#allocation11], %s2832
        %s2834 = sand.u32 %s303, 1
        %s2835 = smul.addr %s2834, 16
        %s2836 = scalar_lea.vmem [#allocation10], %s2835
        %s2837 = sand.u32 %s33, 1
        %s2838 = scalar_lea.sflag [#allocation11], %s2837
        %s2839 = sand.u32 %s329, 1
        %s2840 = scalar_lea.vmem [#allocation12], %s2839
        // Predicated region
        $region73: #{tpu_custom_call.1} parent=63 // pred_check
          %p2841 = pneg %p287
        $region74: #{tpu_custom_call.1} parent=63 // pred_check_branch
          %2843 = sbr.rel (%p2841) target = $region76
        $region75: #{tpu_custom_call.1} parent=63 // pred_region
          %s2845 = ssub.s32 256, 256
          %2846 = vsyncadd %s2828, %s2845
          %s2847 = smul.addr %s33, 2
          %s2848 = smul.addr %s2847, 128
          %s2849 = scalar_lea.hbm %s11, %s2848
          %s2851 = sshll.u32 %s2831, 4
          %s2852 = int_to_ptr.vmem [resolvable:$true] %s2851
          %2854 = dma.vmem_to_hbm [thread:$0]  %s2852, 256, %s2849, %s2828
        $region76: #{tpu_custom_call.1} parent=63 // pred_fallthru
          _
        // Predicated region
        $region77: #{tpu_custom_call.1} parent=63 // pred_check
          %p2855 = pneg %p313
        $region78: #{tpu_custom_call.1} parent=63 // pred_check_branch
          %2857 = sbr.rel (%p2855) target = $region80
        $region79: #{tpu_custom_call.1} parent=63 // pred_region
          %s2859 = ssub.s32 256, 256
          %2860 = vsyncadd %s2833, %s2859
          %s2861 = smul.addr %s33, 2
          %s2862 = smul.addr %s2861, 128
          %s2863 = scalar_lea.hbm %s12, %s2862
          %s2865 = sshll.u32 %s2836, 4
          %s2866 = int_to_ptr.vmem [resolvable:$true] %s2865
          %2868 = dma.vmem_to_hbm [thread:$0]  %s2866, 256, %s2863, %s2833
        $region80: #{tpu_custom_call.1} parent=63 // pred_fallthru
          _
        // Predicated region
        $region81: #{tpu_custom_call.1} parent=63 // pred_check
          %p2869 = pneg %p339
        $region82: #{tpu_custom_call.1} parent=63 // pred_check_branch
          %2871 = sbr.rel (%p2869) target = $region84
        $region83: #{tpu_custom_call.1} parent=63 // pred_region
          %s2873 = ssub.s32 16, 16
          %2874 = vsyncadd %s2838, %s2873
          %s2875 = smul.addr %s33, 16
          %s2876 = scalar_lea.hbm %s13, %s2875
          %s2878 = sshll.u32 %s2840, 4
          %s2879 = int_to_ptr.vmem [resolvable:$true] %s2878
          %2881 = dma.vmem_to_hbm [thread:$0]  %s2879, 16, %s2876, %s2838
        $region84: #{tpu_custom_call.1} parent=63 // pred_fallthru
          _
      $region64: #{tpu_custom_call.1} parent=5 // pred_fallthru
        _
      %p2882 = scmp.le.s32.totalorder 2, %s28
      // Predicated region
      $region85: #{tpu_custom_call.1} parent=5 // pred_check
        %p2883 = pneg %p2882
      $region86: #{tpu_custom_call.1} parent=5 // pred_check_branch
        %2885 = sbr.rel (%p2883) target = $region88
      $region87: #{tpu_custom_call.1} parent=5 // pred_region
        %s2886 = ssub.s32 %s28, 2
        // Predicated region
        $region89: #{tpu_custom_call.1} parent=87 // pred_check
          %p2887 = pneg %p293
        $region90: #{tpu_custom_call.1} parent=87 // pred_check_branch
          %2889 = sbr.rel (%p2887) target = $region92
        $region91: #{tpu_custom_call.1} parent=87 // pred_region
          %s2890 = sand.u32 %s278, 1
          %s2891 = scalar_lea.sflag [#allocation6], %s2890
          %s2892 = sand.u32 %s278, 1
          %s2893 = smul.addr %s2892, 16
          %s2894 = scalar_lea.vmem [#allocation9], %s2893
          %2895 = dma.done %s2891, 256
        $region92: #{tpu_custom_call.1} parent=87 // pred_fallthru
          _
        // Predicated region
        $region93: #{tpu_custom_call.1} parent=87 // pred_check
          %p2896 = pneg %p319
        $region94: #{tpu_custom_call.1} parent=87 // pred_check_branch
          %2898 = sbr.rel (%p2896) target = $region96
        $region95: #{tpu_custom_call.1} parent=87 // pred_region
          %s2899 = sand.u32 %s34, 1
          %s2900 = scalar_lea.sflag [#allocation11], %s2899
          %s2901 = sand.u32 %s304, 1
          %s2902 = smul.addr %s2901, 16
          %s2903 = scalar_lea.vmem [#allocation10], %s2902
          %2904 = dma.done %s2900, 256
        $region96: #{tpu_custom_call.1} parent=87 // pred_fallthru
          _
        // Predicated region
        $region97: #{tpu_custom_call.1} parent=87 // pred_check
          %p2905 = pneg %p345
        $region98: #{tpu_custom_call.1} parent=87 // pred_check_branch
          %2907 = sbr.rel (%p2905) target = $region100
        $region99: #{tpu_custom_call.1} parent=87 // pred_region
          %s2908 = sand.u32 %s34, 1
          %s2909 = scalar_lea.sflag [#allocation11], %s2908
          %s2910 = sand.u32 %s330, 1
          %s2911 = scalar_lea.vmem [#allocation12], %s2910
          %2912 = dma.done %s2909, 16
        $region100: #{tpu_custom_call.1} parent=87 // pred_fallthru
          _
      $region88: #{tpu_custom_call.1} parent=5 // pred_fallthru
        _
    $region6: #{tpu_custom_call.1} parent=1 // loop_footer
      %s32 = sadd.s32 1, %s28
    $region7: #{tpu_custom_call.1} parent=1 // loop_footer_branch
      %27 = sbr.rel target = $region3
    $region8: #{tpu_custom_call.1} parent=1 // loop_exit
      _
    %2913 = vsyncpa [#allocation5], 1
    %s2914 = scalar_lea.sflag [#allocation5], 1
    %2915 = vsyncpa %s2914, 1
    %2916 = vsyncpa [#allocation8], 1
    %2917 = vsyncpa [#allocation6], 1
    %s2918 = scalar_lea.sflag [#allocation6], 1
    %2919 = vsyncpa %s2918, 1
    %2920 = vsyncpa [#allocation11], 1
    %s2921 = scalar_lea.sflag [#allocation11], 1
    %2922 = vsyncpa %s2921, 1

</llo_original>
